<compile_context>
chip_gen: v5e
topology: v5e:2x2
jax: 0.10.0
libtpu: 0.0.40
codegen_flags: <defaults>
</compile_context>

<pallas_src>
import jax
import jax.numpy as jnp
from jax.experimental import pallas as pl
from jax.experimental.pallas import tpu as pltpu


# ---------------------------------------------------------------------------
# Fused kernel (one grid step = one batch element)
# ---------------------------------------------------------------------------
def fused_kernel(x_ref, y_ref,
                 w0_ref, b0_ref, w1_ref, b1_ref,
                 wl0y_ref, wl0h_ref, bl0_ref,
                 wl1_ref, bl1_ref, wl2_ref, bl2_ref,
                 o_ref):
    """
    x_ref   : (1, C, HW)   f32   one batch of M, natural NCHW layout (HW = H*W)
    y_ref   : (1, Yd, 1)   f32   one batch of y as a column
    w0_ref  : (64, C)      bf16  c0 weight;  b0_ref: (64, 1)  f32
    w1_ref  : (32, 64)     bf16  c1 weight;  b1_ref: (32, 1)  f32
    wl0y_ref: (512, Yd)    bf16  l0 weight, y columns
    wl0h_ref: (HW, 512, 32)bf16  l0 weight, conv columns re-indexed per pixel
    bl0_ref : (512, 1)     f32
    wl1_ref : (512, 512)   bf16; bl1_ref: (512, 1) f32
    wl2_ref : (512, 1)     f32 (column);  bl2_ref: (1, 1) f32
    o_ref   : (1, 1, 1)    f32
    """
    hw = x_ref.shape[2]

    # ---- conv path: h = c1(relu(c0(M))), contracting over channels ---------
    x = x_ref[0].astype(jnp.bfloat16)                              # (C, HW)
    h = jnp.dot(w0_ref[...], x,
                preferred_element_type=jnp.float32) + b0_ref[...]  # (64, HW)
    h = jnp.maximum(h, 0.0).astype(jnp.bfloat16)                   # F.relu
    h = jnp.dot(w1_ref[...], h,
                preferred_element_type=jnp.float32) + b1_ref[...]  # (32, HW)
    h = h.astype(jnp.bfloat16)

    # ---- l0: torch.cat((y, h.view(B,-1))) folded into split weights --------
    yv = y_ref[0].astype(jnp.bfloat16)                             # (Yd, 1)
    z = jnp.dot(wl0y_ref[...], yv,
                preferred_element_type=jnp.float32)                # (512, 1)
    for p in range(hw):                                            # static unroll
        z = z + jnp.dot(wl0h_ref[p], h[:, p:p + 1],
                        preferred_element_type=jnp.float32)
    z = jnp.maximum(z + bl0_ref[...], 0.0).astype(jnp.bfloat16)    # (512, 1)

    # ---- l1 -----------------------------------------------------------------
    z = jnp.dot(wl1_ref[...], z,
                preferred_element_type=jnp.float32) + bl1_ref[...]
    z = jnp.maximum(z, 0.0)                                        # (512, 1) f32

    # ---- l2: VPU multiply + sublane reduction (no 1-wide MXU matmul) --------
    out = jnp.sum(wl2_ref[...] * z, axis=0, keepdims=True) + bl2_ref[...]
    o_ref[0] = out


# ---------------------------------------------------------------------------
# One-time parameter prep (reorg + bf16 cast of matmul weights)
# ---------------------------------------------------------------------------
def prepare_params(params, hw):
    bf16, f32 = jnp.bfloat16, jnp.float32
    c_in = params["c0_w"].shape[1]
    l0_w = params["l0_w"].astype(f32)                     # (512, y_dim + 32*hw)
    y_dim = l0_w.shape[1] - 32 * hw
    assert y_dim > 0, "l0 input dim inconsistent with 32*H*W"
    wl0h = l0_w[:, y_dim:]                                # column index = c*hw + p
    return {
        "w0":   params["c0_w"].reshape(64, c_in).astype(bf16),
        "b0":   params["c0_b"].reshape(64, 1).astype(f32),
        "w1":   params["c1_w"].reshape(32, 64).astype(bf16),
        "b1":   params["c1_b"].reshape(32, 1).astype(f32),
        "wl0y": l0_w[:, :y_dim].astype(bf16),                              # (512, y_dim)
        "wl0h": wl0h.reshape(512, 32, hw).transpose(2, 0, 1).astype(bf16),  # (hw,512,32)
        "bl0":  params["l0_b"].reshape(512, 1).astype(f32),
        "wl1":  params["l1_w"].astype(bf16),
        "bl1":  params["l1_b"].reshape(512, 1).astype(f32),
        "wl2":  params["l2_w"].reshape(512, 1).astype(f32),
        "bl2":  params["l2_b"].reshape(1, 1).astype(f32),
    }


# ---------------------------------------------------------------------------
# Forward wrapper
# ---------------------------------------------------------------------------
def global_discriminator_forward(y, M, prep):
    B, C, H, W = M.shape
    HW = H * W
    y_dim = y.shape[1]

    x3 = M.reshape(B, C, HW)        # free reshape, NO transpose of M
    y3 = y.reshape(B, y_dim, 1)     # per-batch column, free reshape

    def full2(shape):
        return pl.BlockSpec(shape, lambda b: (0, 0))

    def full3(shape):
        return pl.BlockSpec(shape, lambda b: (0, 0, 0))

    out = pl.pallas_call(
        fused_kernel,
        out_shape=jax.ShapeDtypeStruct((B, 1, 1), jnp.float32),
        grid=(B,),
        in_specs=[
            pl.BlockSpec((1, C, HW), lambda b: (b, 0, 0)),       # M slab
            pl.BlockSpec((1, y_dim, 1), lambda b: (b, 0, 0)),    # y column
            full2((64, C)),   full2((64, 1)),
            full2((32, 64)),  full2((32, 1)),
            full2((512, y_dim)),
            full3((HW, 512, 32)),
            full2((512, 1)),
            full2((512, 512)), full2((512, 1)),
            full2((512, 1)),   full2((1, 1)),
        ],
        out_specs=pl.BlockSpec((1, 1, 1), lambda b: (b, 0, 0)),
        compiler_params=pltpu.CompilerParams(
            dimension_semantics=("parallel",)),
    )(x3, y3,
      prep["w0"], prep["b0"], prep["w1"], prep["b1"],
      prep["wl0y"], prep["wl0h"], prep["bl0"],
      prep["wl1"], prep["bl1"], prep["wl2"], prep["bl2"])
    return out.reshape(B, 1)


# ---------------------------------------------------------------------------
# References
# ---------------------------------------------------------------------------
def reference_forward_f32(y, M, params):
    """Plain-JAX f32 replica of the PyTorch module (semantics documentation)."""
    B, C, H, W = M.shape
    w0 = params["c0_w"].reshape(64, C)
    w1 = params["c1_w"].reshape(32, 64)
    h = jnp.einsum("oc,bchw->bohw", w0, M) + params["c0_b"][None, :, None, None]
    h = jax.nn.relu(h)
    h = jnp.einsum("oc,bchw->bohw", w1, h) + params["c1_b"][None, :, None, None]
    h = h.reshape(B, -1)
    h = jnp.concatenate((y, h), axis=1)
    h = jax.nn.relu(h @ params["l0_w"].T + params["l0_b"])
    h = jax.nn.relu(h @ params["l1_w"].T + params["l1_b"])
    return h @ params["l2_w"].T + params["l2_b"]


def reference_forward_matched(y, M, params):
    """Same math with the kernel's precision (bf16 matmul inputs, f32 accum)."""
    bf16 = jnp.bfloat16
    B, C, H, W = M.shape
    x = M.reshape(B, C, H * W).astype(bf16)
    w0 = params["c0_w"].reshape(64, C).astype(bf16)
    h = jnp.einsum("oc,bcp->bop", w0, x,
                   preferred_element_type=jnp.float32) + params["c0_b"][None, :, None]
    h = jax.nn.relu(h).astype(bf16)
    w1 = params["c1_w"].reshape(32, 64).astype(bf16)
    h = jnp.einsum("oc,bcp->bop", w1, h,
                   preferred_element_type=jnp.float32) + params["c1_b"][None, :, None]
    h = h.reshape(B, -1)                                    # channel-major flatten
    h = jnp.concatenate((y, h), axis=1).astype(bf16)
    z = jnp.dot(h, params["l0_w"].T.astype(bf16),
                preferred_element_type=jnp.float32) + params["l0_b"]
    z = jax.nn.relu(z).astype(bf16)
    z = jnp.dot(z, params["l1_w"].T.astype(bf16),
                preferred_element_type=jnp.float32) + params["l1_b"]
    z = jax.nn.relu(z)
    return jnp.dot(z, params["l2_w"].T,
                   preferred_element_type=jnp.float32) + params["l2_b"]


# ---------------------------------------------------------------------------
# Deterministic PyTorch-default-like init
# ---------------------------------------------------------------------------
def init_params(key):
    ks = jax.random.split(key, 10)

    def u(k, shape, fan_in):
        bound = 1.0 / float(fan_in) ** 0.5
        return jax.random.uniform(k, shape, jnp.float32, -bound, bound)

    return {
        "c0_w": u(ks[0], (64, 2048, 1, 1), 2048),
        "c0_b": u(ks[1], (64,), 2048),
        "c1_w": u(ks[2], (32, 64, 1, 1), 64),
        "c1_b": u(ks[3], (32,), 64),
        "l0_w": u(ks[4], (512, 160), 160),
        "l0_b": u(ks[5], (512,), 160),
        "l1_w": u(ks[6], (512, 512), 512),
        "l1_b": u(ks[7], (512,), 512),
        "l2_w": u(ks[8], (1, 512), 512),
        "l2_b": u(ks[9], (1,), 512),
    }


if __name__ == "__main__":
    key = jax.random.PRNGKey(0)
    kp, ky, km = jax.random.split(key, 3)

    params = init_params(kp)

    B, H, W = 2, 2, 2                       # 32 + 32*H*W = 160  (l0 input dim)
    y = jax.random.normal(ky, (B, 32), jnp.float32)
    M = jax.random.normal(km, (B, 2048, H, W), jnp.float32)

    # One-time weight prep (split/permute l0, cast matmul weights to bf16).
    params["c1_w"] = params["c1_w"].reshape(32, 64, 1, 1)  # keep conv shape
    prep = prepare_params(params, H * W)

    fwd = jax.jit(global_discriminator_forward)
    out = jax.block_until_ready(fwd(y, M, prep))

    ref_matched = reference_forward_matched(y, M, params)  # kernel-precision ref
    ref_f32 = reference_forward_f32(y, M, params)          # exact f32 module ref

    assert out.shape == (B, 1)
    assert jnp.allclose(out, ref_matched, atol=1e-2, rtol=1e-2), (out, ref_matched)
    # bf16 weights vs. full-f32 module: loose sanity bound only.
    assert jnp.allclose(out, ref_f32, atol=0.25, rtol=0.2), (out, ref_f32)

    print("KERNEL_OK")
</pallas_src>

<mosaic_0001>
module attributes {stable_mosaic.version = 11 : i64} {
  func.func @fused_kernel(%arg0: i32, %arg1: memref<1x2048x4xf32, #tpu.memory_space<vmem>>, %arg2: memref<1x32x1xf32, #tpu.memory_space<vmem>>, %arg3: memref<64x2048xbf16, #tpu.memory_space<vmem>>, %arg4: memref<64x1xf32, #tpu.memory_space<vmem>>, %arg5: memref<32x64xbf16, #tpu.memory_space<vmem>>, %arg6: memref<32x1xf32, #tpu.memory_space<vmem>>, %arg7: memref<512x32xbf16, #tpu.memory_space<vmem>>, %arg8: memref<4x512x32xbf16, #tpu.memory_space<vmem>>, %arg9: memref<512x1xf32, #tpu.memory_space<vmem>>, %arg10: memref<512x512xbf16, #tpu.memory_space<vmem>>, %arg11: memref<512x1xf32, #tpu.memory_space<vmem>>, %arg12: memref<512x1xf32, #tpu.memory_space<vmem>>, %arg13: memref<1x1xf32, #tpu.memory_space<vmem>>, %arg14: memref<1x1x1xf32, #tpu.memory_space<vmem>>) attributes {dimension_semantics = [#tpu.dimension_semantics<parallel>], iteration_bounds = array<i64: 2>, scalar_prefetch = 0 : i64, scratch_operands = 0 : i64, tpu.core_type = #tpu.core_type<tc>, window_params = [{transform_indices = @transform_0, window_bounds = array<i64: 1, 2048, 4>}, {transform_indices = @transform_1, window_bounds = array<i64: 1, 32, 1>}, {pipeline_mode = #tpu.pipeline_mode<synchronous>, transform_indices = @transform_2, window_bounds = array<i64: 64, 2048>}, {pipeline_mode = #tpu.pipeline_mode<synchronous>, transform_indices = @transform_3, window_bounds = array<i64: 64, 1>}, {pipeline_mode = #tpu.pipeline_mode<synchronous>, transform_indices = @transform_4, window_bounds = array<i64: 32, 64>}, {pipeline_mode = #tpu.pipeline_mode<synchronous>, transform_indices = @transform_5, window_bounds = array<i64: 32, 1>}, {pipeline_mode = #tpu.pipeline_mode<synchronous>, transform_indices = @transform_6, window_bounds = array<i64: 512, 32>}, {pipeline_mode = #tpu.pipeline_mode<synchronous>, transform_indices = @transform_7, window_bounds = array<i64: 4, 512, 32>}, {pipeline_mode = #tpu.pipeline_mode<synchronous>, transform_indices = @transform_8, window_bounds = array<i64: 512, 1>}, {pipeline_mode = #tpu.pipeline_mode<synchronous>, transform_indices = @transform_9, window_bounds = array<i64: 512, 512>}, {pipeline_mode = #tpu.pipeline_mode<synchronous>, transform_indices = @transform_10, window_bounds = array<i64: 512, 1>}, {pipeline_mode = #tpu.pipeline_mode<synchronous>, transform_indices = @transform_11, window_bounds = array<i64: 512, 1>}, {pipeline_mode = #tpu.pipeline_mode<synchronous>, transform_indices = @transform_12, window_bounds = array<i64: 1, 1>}, {transform_indices = @transform_13, window_bounds = array<i64: 1, 1, 1>}]} {
    %c0 = arith.constant 0 : index
    %c0_0 = arith.constant 0 : index
    %c0_1 = arith.constant 0 : index
    %0 = vector.load %arg1[%c0, %c0_0, %c0_1] : memref<1x2048x4xf32, #tpu.memory_space<vmem>>, vector<1x2048x4xf32>
    %1 = vector.shape_cast %0 : vector<1x2048x4xf32> to vector<2048x4xf32>
    %2 = arith.truncf %1 : vector<2048x4xf32> to vector<2048x4xbf16>
    %c0_2 = arith.constant 0 : index
    %c0_3 = arith.constant 0 : index
    %3 = vector.load %arg3[%c0_2, %c0_3] : memref<64x2048xbf16, #tpu.memory_space<vmem>>, vector<64x2048xbf16>
    %cst = arith.constant dense<0.000000e+00> : vector<64x4xf32>
    %4 = tpu.matmul %3, %2, %cst {dimension_numbers = #tpu.dot_dimension_numbers<[1], [0], [0], [1], [0, 0, 1, 1], [], []>} : vector<64x2048xbf16>, vector<2048x4xbf16>, vector<64x4xf32> -> vector<64x4xf32>
    %c0_4 = arith.constant 0 : index
    %c0_5 = arith.constant 0 : index
    %5 = vector.load %arg4[%c0_4, %c0_5] : memref<64x1xf32, #tpu.memory_space<vmem>>, vector<64x1xf32>
    %6 = vector.broadcast %5 : vector<64x1xf32> to vector<64x4xf32>
    %7 = arith.addf %4, %6 : vector<64x4xf32>
    %cst_6 = arith.constant 0.000000e+00 : f32
    %8 = vector.broadcast %cst_6 : f32 to vector<64x4xf32>
    %9 = arith.maximumf %7, %8 : vector<64x4xf32>
    %10 = arith.truncf %9 : vector<64x4xf32> to vector<64x4xbf16>
    %c0_7 = arith.constant 0 : index
    %c0_8 = arith.constant 0 : index
    %11 = vector.load %arg5[%c0_7, %c0_8] : memref<32x64xbf16, #tpu.memory_space<vmem>>, vector<32x64xbf16>
    %cst_9 = arith.constant dense<0.000000e+00> : vector<32x4xf32>
    %12 = tpu.matmul %11, %10, %cst_9 {dimension_numbers = #tpu.dot_dimension_numbers<[1], [0], [0], [1], [0, 0, 1, 1], [], []>} : vector<32x64xbf16>, vector<64x4xbf16>, vector<32x4xf32> -> vector<32x4xf32>
    %c0_10 = arith.constant 0 : index
    %c0_11 = arith.constant 0 : index
    %13 = vector.load %arg6[%c0_10, %c0_11] : memref<32x1xf32, #tpu.memory_space<vmem>>, vector<32x1xf32>
    %14 = vector.broadcast %13 : vector<32x1xf32> to vector<32x4xf32>
    %15 = arith.addf %12, %14 : vector<32x4xf32>
    %16 = arith.truncf %15 : vector<32x4xf32> to vector<32x4xbf16>
    %c0_12 = arith.constant 0 : index
    %c0_13 = arith.constant 0 : index
    %c0_14 = arith.constant 0 : index
    %17 = vector.load %arg2[%c0_12, %c0_13, %c0_14] : memref<1x32x1xf32, #tpu.memory_space<vmem>>, vector<1x32x1xf32>
    %18 = vector.shape_cast %17 : vector<1x32x1xf32> to vector<32x1xf32>
    %19 = arith.truncf %18 : vector<32x1xf32> to vector<32x1xbf16>
    %c0_15 = arith.constant 0 : index
    %c0_16 = arith.constant 0 : index
    %20 = vector.load %arg7[%c0_15, %c0_16] : memref<512x32xbf16, #tpu.memory_space<vmem>>, vector<512x32xbf16>
    %cst_17 = arith.constant dense<0.000000e+00> : vector<512x1xf32>
    %21 = tpu.matmul %20, %19, %cst_17 {dimension_numbers = #tpu.dot_dimension_numbers<[1], [0], [0], [1], [0, 0, 1, 1], [], []>} : vector<512x32xbf16>, vector<32x1xbf16>, vector<512x1xf32> -> vector<512x1xf32>
    %c0_18 = arith.constant 0 : index
    %c0_19 = arith.constant 0 : index
    %c0_20 = arith.constant 0 : index
    %22 = vector.load %arg8[%c0_18, %c0_19, %c0_20] : memref<4x512x32xbf16, #tpu.memory_space<vmem>>, vector<1x512x32xbf16>
    %23 = vector.shape_cast %22 : vector<1x512x32xbf16> to vector<512x32xbf16>
    %24 = vector.extract_strided_slice %16 {offsets = [0, 0], sizes = [32, 1], strides = [1, 1]} : vector<32x4xbf16> to vector<32x1xbf16>
    %cst_21 = arith.constant dense<0.000000e+00> : vector<512x1xf32>
    %25 = tpu.matmul %23, %24, %cst_21 {dimension_numbers = #tpu.dot_dimension_numbers<[1], [0], [0], [1], [0, 0, 1, 1], [], []>} : vector<512x32xbf16>, vector<32x1xbf16>, vector<512x1xf32> -> vector<512x1xf32>
    %26 = arith.addf %21, %25 : vector<512x1xf32>
    %c1 = arith.constant 1 : index
    %c0_22 = arith.constant 0 : index
    %c0_23 = arith.constant 0 : index
    %27 = vector.load %arg8[%c1, %c0_22, %c0_23] : memref<4x512x32xbf16, #tpu.memory_space<vmem>>, vector<1x512x32xbf16>
    %28 = vector.shape_cast %27 : vector<1x512x32xbf16> to vector<512x32xbf16>
    %29 = vector.extract_strided_slice %16 {offsets = [0, 1], sizes = [32, 1], strides = [1, 1]} : vector<32x4xbf16> to vector<32x1xbf16>
    %cst_24 = arith.constant dense<0.000000e+00> : vector<512x1xf32>
    %30 = tpu.matmul %28, %29, %cst_24 {dimension_numbers = #tpu.dot_dimension_numbers<[1], [0], [0], [1], [0, 0, 1, 1], [], []>} : vector<512x32xbf16>, vector<32x1xbf16>, vector<512x1xf32> -> vector<512x1xf32>
    %31 = arith.addf %26, %30 : vector<512x1xf32>
    %c2 = arith.constant 2 : index
    %c0_25 = arith.constant 0 : index
    %c0_26 = arith.constant 0 : index
    %32 = vector.load %arg8[%c2, %c0_25, %c0_26] : memref<4x512x32xbf16, #tpu.memory_space<vmem>>, vector<1x512x32xbf16>
    %33 = vector.shape_cast %32 : vector<1x512x32xbf16> to vector<512x32xbf16>
    %34 = vector.extract_strided_slice %16 {offsets = [0, 2], sizes = [32, 1], strides = [1, 1]} : vector<32x4xbf16> to vector<32x1xbf16>
    %cst_27 = arith.constant dense<0.000000e+00> : vector<512x1xf32>
    %35 = tpu.matmul %33, %34, %cst_27 {dimension_numbers = #tpu.dot_dimension_numbers<[1], [0], [0], [1], [0, 0, 1, 1], [], []>} : vector<512x32xbf16>, vector<32x1xbf16>, vector<512x1xf32> -> vector<512x1xf32>
    %36 = arith.addf %31, %35 : vector<512x1xf32>
    %c3 = arith.constant 3 : index
    %c0_28 = arith.constant 0 : index
    %c0_29 = arith.constant 0 : index
    %37 = vector.load %arg8[%c3, %c0_28, %c0_29] : memref<4x512x32xbf16, #tpu.memory_space<vmem>>, vector<1x512x32xbf16>
    %38 = vector.shape_cast %37 : vector<1x512x32xbf16> to vector<512x32xbf16>
    %39 = vector.extract_strided_slice %16 {offsets = [0, 3], sizes = [32, 1], strides = [1, 1]} : vector<32x4xbf16> to vector<32x1xbf16>
    %cst_30 = arith.constant dense<0.000000e+00> : vector<512x1xf32>
    %40 = tpu.matmul %38, %39, %cst_30 {dimension_numbers = #tpu.dot_dimension_numbers<[1], [0], [0], [1], [0, 0, 1, 1], [], []>} : vector<512x32xbf16>, vector<32x1xbf16>, vector<512x1xf32> -> vector<512x1xf32>
    %41 = arith.addf %36, %40 : vector<512x1xf32>
    %c0_31 = arith.constant 0 : index
    %c0_32 = arith.constant 0 : index
    %42 = vector.load %arg9[%c0_31, %c0_32] : memref<512x1xf32, #tpu.memory_space<vmem>>, vector<512x1xf32>
    %43 = arith.addf %41, %42 : vector<512x1xf32>
    %cst_33 = arith.constant 0.000000e+00 : f32
    %44 = vector.broadcast %cst_33 : f32 to vector<512x1xf32>
    %45 = arith.maximumf %43, %44 : vector<512x1xf32>
    %46 = arith.truncf %45 : vector<512x1xf32> to vector<512x1xbf16>
    %c0_34 = arith.constant 0 : index
    %c0_35 = arith.constant 0 : index
    %47 = vector.load %arg10[%c0_34, %c0_35] : memref<512x512xbf16, #tpu.memory_space<vmem>>, vector<512x512xbf16>
    %cst_36 = arith.constant dense<0.000000e+00> : vector<512x1xf32>
    %48 = tpu.matmul %47, %46, %cst_36 {dimension_numbers = #tpu.dot_dimension_numbers<[1], [0], [0], [1], [0, 0, 1, 1], [], []>} : vector<512x512xbf16>, vector<512x1xbf16>, vector<512x1xf32> -> vector<512x1xf32>
    %c0_37 = arith.constant 0 : index
    %c0_38 = arith.constant 0 : index
    %49 = vector.load %arg11[%c0_37, %c0_38] : memref<512x1xf32, #tpu.memory_space<vmem>>, vector<512x1xf32>
    %50 = arith.addf %48, %49 : vector<512x1xf32>
    %cst_39 = arith.constant 0.000000e+00 : f32
    %51 = vector.broadcast %cst_39 : f32 to vector<512x1xf32>
    %52 = arith.maximumf %50, %51 : vector<512x1xf32>
    %c0_40 = arith.constant 0 : index
    %c0_41 = arith.constant 0 : index
    %53 = vector.load %arg12[%c0_40, %c0_41] : memref<512x1xf32, #tpu.memory_space<vmem>>, vector<512x1xf32>
    %54 = arith.mulf %53, %52 : vector<512x1xf32>
    %cst_42 = arith.constant dense<0.000000e+00> : vector<1xf32>
    %55 = vector.multi_reduction <add>, %54, %cst_42 [0] : vector<512x1xf32> to vector<1xf32>
    %56 = vector.shape_cast %55 : vector<1xf32> to vector<1x1xf32>
    %c0_43 = arith.constant 0 : index
    %c0_44 = arith.constant 0 : index
    %57 = vector.load %arg13[%c0_43, %c0_44] : memref<1x1xf32, #tpu.memory_space<vmem>>, vector<1x1xf32>
    %58 = arith.addf %56, %57 : vector<1x1xf32>
    %c0_45 = arith.constant 0 : index
    %c0_46 = arith.constant 0 : index
    %c0_47 = arith.constant 0 : index
    %59 = vector.load %arg14[%c0_45, %c0_46, %c0_47] : memref<1x1x1xf32, #tpu.memory_space<vmem>>, vector<1x1x1xf32>
    %60 = vector.shape_cast %59 : vector<1x1x1xf32> to vector<1x1xf32>
    %61 = vector.shape_cast %58 : vector<1x1xf32> to vector<1x1x1xf32>
    tpu.vector_store %arg14[%c0_45, %c0_46, %c0_47], %61 {strides = array<i32>} : memref<1x1x1xf32, #tpu.memory_space<vmem>>, vector<1x1x1xf32>,
    return
  }
  func.func @transform_0(%arg0: i32) -> (i32, i32, i32) {
    %c0_i32 = arith.constant 0 : i32
    %c0_i32_0 = arith.constant 0 : i32
    %c0_i32_1 = arith.constant 0 : i32
    return %arg0, %c0_i32, %c0_i32_0 : i32, i32, i32
  }
  func.func @transform_1(%arg0: i32) -> (i32, i32, i32) {
    %c0_i32 = arith.constant 0 : i32
    %c0_i32_0 = arith.constant 0 : i32
    %c0_i32_1 = arith.constant 0 : i32
    return %arg0, %c0_i32, %c0_i32_0 : i32, i32, i32
  }
  func.func @transform_2(%arg0: i32) -> (i32, i32) {
    %c0_i32 = arith.constant 0 : i32
    %c0_i32_0 = arith.constant 0 : i32
    %c0_i32_1 = arith.constant 0 : i32
    return %c0_i32, %c0_i32_0 : i32, i32
  }
  func.func @transform_3(%arg0: i32) -> (i32, i32) {
    %c0_i32 = arith.constant 0 : i32
    %c0_i32_0 = arith.constant 0 : i32
    %c0_i32_1 = arith.constant 0 : i32
    return %c0_i32, %c0_i32_0 : i32, i32
  }
  func.func @transform_4(%arg0: i32) -> (i32, i32) {
    %c0_i32 = arith.constant 0 : i32
    %c0_i32_0 = arith.constant 0 : i32
    %c0_i32_1 = arith.constant 0 : i32
    return %c0_i32, %c0_i32_0 : i32, i32
  }
  func.func @transform_5(%arg0: i32) -> (i32, i32) {
    %c0_i32 = arith.constant 0 : i32
    %c0_i32_0 = arith.constant 0 : i32
    %c0_i32_1 = arith.constant 0 : i32
    return %c0_i32, %c0_i32_0 : i32, i32
  }
  func.func @transform_6(%arg0: i32) -> (i32, i32) {
    %c0_i32 = arith.constant 0 : i32
    %c0_i32_0 = arith.constant 0 : i32
    %c0_i32_1 = arith.constant 0 : i32
    return %c0_i32, %c0_i32_0 : i32, i32
  }
  func.func @transform_7(%arg0: i32) -> (i32, i32, i32) {
    %c0_i32 = arith.constant 0 : i32
    %c0_i32_0 = arith.constant 0 : i32
    %c0_i32_1 = arith.constant 0 : i32
    %c0_i32_2 = arith.constant 0 : i32
    return %c0_i32, %c0_i32_0, %c0_i32_1 : i32, i32, i32
  }
  func.func @transform_8(%arg0: i32) -> (i32, i32) {
    %c0_i32 = arith.constant 0 : i32
    %c0_i32_0 = arith.constant 0 : i32
    %c0_i32_1 = arith.constant 0 : i32
    return %c0_i32, %c0_i32_0 : i32, i32
  }
  func.func @transform_9(%arg0: i32) -> (i32, i32) {
    %c0_i32 = arith.constant 0 : i32
    %c0_i32_0 = arith.constant 0 : i32
    %c0_i32_1 = arith.constant 0 : i32
    return %c0_i32, %c0_i32_0 : i32, i32
  }
  func.func @transform_10(%arg0: i32) -> (i32, i32) {
    %c0_i32 = arith.constant 0 : i32
    %c0_i32_0 = arith.constant 0 : i32
    %c0_i32_1 = arith.constant 0 : i32
    return %c0_i32, %c0_i32_0 : i32, i32
  }
  func.func @transform_11(%arg0: i32) -> (i32, i32) {
    %c0_i32 = arith.constant 0 : i32
    %c0_i32_0 = arith.constant 0 : i32
    %c0_i32_1 = arith.constant 0 : i32
    return %c0_i32, %c0_i32_0 : i32, i32
  }
  func.func @transform_12(%arg0: i32) -> (i32, i32) {
    %c0_i32 = arith.constant 0 : i32
    %c0_i32_0 = arith.constant 0 : i32
    %c0_i32_1 = arith.constant 0 : i32
    return %c0_i32, %c0_i32_0 : i32, i32
  }
  func.func @transform_13(%arg0: i32) -> (i32, i32, i32) {
    %c0_i32 = arith.constant 0 : i32
    %c0_i32_0 = arith.constant 0 : i32
    %c0_i32_1 = arith.constant 0 : i32
    return %arg0, %c0_i32, %c0_i32_0 : i32, i32, i32
  }
}

</mosaic_0001>

<llo_original>
// kernel: global_discriminator_forward.1
$region0: #{global_discriminator_forward.1}
  #allocation0 [shape = 'u32[]', space=smem, size = 0x4, offset = 0x4, fixed_abs, tag = 'smem constant byte address 0x4 - core index']
  #allocation1 [shape = 'u32[72,128]{1,0:T(1,128)}', space=vmem, size = 0x9000, scoped, tag = 'internal scratch']
  #allocation2 [shape = 'f32[1,1]{1,0:T(1,128)S(1)}', space=vmem, size = 0x200, scoped, tag = 'scoped memory for global_discriminator_forward.1']
  %s0 = inlined_call_operand.vmem [shape: f32[2,2048,4], index: 0, kind: input, shape index: {}]
  %s1 = inlined_call_operand.vmem [shape: f32[2,32,1], index: 1, kind: input, shape index: {}]
  %s2 = inlined_call_operand.vmem [shape: bf16[64,2048], index: 2, kind: input, shape index: {}]
  %s3 = inlined_call_operand.vmem [shape: f32[64,1], index: 3, kind: input, shape index: {}]
  %s4 = inlined_call_operand.vmem [shape: bf16[32,64], index: 4, kind: input, shape index: {}]
  %s5 = inlined_call_operand.vmem [shape: f32[32,1], index: 5, kind: input, shape index: {}]
  %s6 = inlined_call_operand.vmem [shape: bf16[512,32], index: 6, kind: input, shape index: {}]
  %s7 = inlined_call_operand.vmem [shape: bf16[4,512,32], index: 7, kind: input, shape index: {}]
  %s8 = inlined_call_operand.vmem [shape: f32[512,1], index: 8, kind: input, shape index: {}]
  %s9 = inlined_call_operand.vmem [shape: bf16[512,512], index: 9, kind: input, shape index: {}]
  %s10 = inlined_call_operand.vmem [shape: f32[512,1], index: 10, kind: input, shape index: {}]
  %s11 = inlined_call_operand.vmem [shape: f32[512,1], index: 11, kind: input, shape index: {}]
  %s12 = inlined_call_operand.<no memory space> [shape: f32[1,1], index: 12, kind: input, shape index: {}]
  %s13 = inlined_call_operand.vmem [shape: f32[2,1,1], index: 13, kind: output, shape index: {}]
  %s14 = sld [smem:[#allocation0]]
  $region85: #{global_discriminator_forward.1} parent=0
    _
  %s16 = ssub.s32 1, %s14
  %s17 = scalar_select 0, %s16, %s14
  %v18 = vstv %s12
  %19 = vst [vmem:[#allocation2] sm:$0x1] %v18
  loop: start=0, step=1, limit=4
  $region2: #{global_discriminator_forward.1} parent=0 // loop_pre_header
    _
  $region3: #{global_discriminator_forward.1} parent=0 // loop_header
    %s21 = sphi 0, %s25
    %p22 = scmp.ge.s32.totalorder %s21, 4
    %s31 = sphi 0, %s33
    %s34 = sphi 0, %s31
    %s35 = sphi 0, %s34
    %s51 = sphi 0, %s35
    %s57 = sphi 0, %s59
    %s60 = sphi 0, %s57
    %s61 = sphi 0, %s60
    %s77 = sphi 0, %s61
    %s81 = sphi 0, %s81
    %s83 = sphi 0, %s81
    %s84 = sphi 0, %s83
    %s98 = sphi 0, %s84
    %s102 = sphi 0, %s102
    %s104 = sphi 0, %s102
    %s105 = sphi 0, %s104
    %s119 = sphi 0, %s105
    %s123 = sphi 0, %s123
    %s125 = sphi 0, %s123
    %s126 = sphi 0, %s125
    %s140 = sphi 0, %s126
    %s144 = sphi 0, %s144
    %s146 = sphi 0, %s144
    %s147 = sphi 0, %s146
    %s161 = sphi 0, %s147
    %s165 = sphi 0, %s165
    %s167 = sphi 0, %s165
    %s168 = sphi 0, %s167
    %s182 = sphi 0, %s168
    %s186 = sphi 0, %s186
    %s188 = sphi 0, %s186
    %s189 = sphi 0, %s188
    %s203 = sphi 0, %s189
    %s207 = sphi 0, %s207
    %s209 = sphi 0, %s207
    %s210 = sphi 0, %s209
    %s224 = sphi 0, %s210
    %s228 = sphi 0, %s228
    %s230 = sphi 0, %s228
    %s231 = sphi 0, %s230
    %s245 = sphi 0, %s231
    %s249 = sphi 0, %s249
    %s251 = sphi 0, %s249
    %s252 = sphi 0, %s251
    %s266 = sphi 0, %s252
    %s270 = sphi 0, %s270
    %s272 = sphi 0, %s270
    %s273 = sphi 0, %s272
    %s287 = sphi 0, %s273
    %s291 = sphi 0, %s291
    %s293 = sphi 0, %s291
    %s294 = sphi 0, %s293
    %s308 = sphi 0, %s294
    %s314 = sphi 0, %s316
    %s317 = sphi 0, %s314
    %s318 = sphi 0, %s317
    %s334 = sphi 0, %s318
  $region4: #{global_discriminator_forward.1} parent=0 // loop_header_branch
    %24 = sbr.rel (%p22) target = $region8
  $region5: #{global_discriminator_forward.1} parent=0 // loop_body
    %s26 = ssub.s32 %s21, 1
    %s27 = ssub.s32 %s21, 2
    %s28 = sadd.s32 %s21, 1
    %s29 = ssub.s32 %s21, %s28
    %p30 = scmp.eq.s32.totalorder %s29, 0
    %s32 = sadd.s32 %s31, 1
    %s33 = scalar_select %p30, %s31, %s32
    %p36 = pneg %p30
    %p37 = scmp.eq.s32.totalorder %s21, 1
    %p38 = por %p36, %p37
    %p39 = scmp.ne.s32.totalorder %s31, %s34
    %p40 = scmp.eq.s32.totalorder %s21, 0
    %p41 = por %p39, %p40
    %p42 = scmp.ne.s32.totalorder %s31, %s34
    %p43 = scmp.eq.s32.totalorder %s26, 1
    %p44 = por %p42, %p43
    %p45 = scmp.ne.s32.totalorder %s34, %s35
    %p46 = scmp.eq.s32.totalorder %s26, 0
    %p47 = por %p45, %p46
    %p48 = scmp.ne.s32.totalorder %s34, %s35
    %p49 = scmp.eq.s32.totalorder %s27, 1
    %p50 = por %p48, %p49
    %p52 = scmp.ne.s32.totalorder %s35, %s51
    %p53 = scmp.eq.s32.totalorder %s27, 0
    %p54 = por %p52, %p53
    %s55 = ssub.s32 %s21, %s28
    %p56 = scmp.eq.s32.totalorder %s55, 0
    %s58 = sadd.s32 %s57, 1
    %s59 = scalar_select %p56, %s57, %s58
    %p62 = pneg %p56
    %p63 = scmp.eq.s32.totalorder %s21, 1
    %p64 = por %p62, %p63
    %p65 = scmp.ne.s32.totalorder %s57, %s60
    %p66 = scmp.eq.s32.totalorder %s21, 0
    %p67 = por %p65, %p66
    %p68 = scmp.ne.s32.totalorder %s57, %s60
    %p69 = scmp.eq.s32.totalorder %s26, 1
    %p70 = por %p68, %p69
    %p71 = scmp.ne.s32.totalorder %s60, %s61
    %p72 = scmp.eq.s32.totalorder %s26, 0
    %p73 = por %p71, %p72
    %p74 = scmp.ne.s32.totalorder %s60, %s61
    %p75 = scmp.eq.s32.totalorder %s27, 1
    %p76 = por %p74, %p75
    %p78 = scmp.ne.s32.totalorder %s61, %s77
    %p79 = scmp.eq.s32.totalorder %s27, 0
    %p80 = por %p78, %p79
    %s82 = sadd.s32 %s81, 1
    %p85 = scmp.eq.s32.totalorder %s21, 1
    %p86 = scmp.ne.s32.totalorder %s81, %s83
    %p87 = scmp.eq.s32.totalorder %s21, 0
    %p88 = por %p86, %p87
    %p89 = scmp.ne.s32.totalorder %s81, %s83
    %p90 = scmp.eq.s32.totalorder %s26, 1
    %p91 = por %p89, %p90
    %p92 = scmp.ne.s32.totalorder %s83, %s84
    %p93 = scmp.eq.s32.totalorder %s26, 0
    %p94 = por %p92, %p93
    %p95 = scmp.ne.s32.totalorder %s83, %s84
    %p96 = scmp.eq.s32.totalorder %s27, 1
    %p97 = por %p95, %p96
    %p99 = scmp.ne.s32.totalorder %s84, %s98
    %p100 = scmp.eq.s32.totalorder %s27, 0
    %p101 = por %p99, %p100
    %s103 = sadd.s32 %s102, 1
    %p106 = scmp.eq.s32.totalorder %s21, 1
    %p107 = scmp.ne.s32.totalorder %s102, %s104
    %p108 = scmp.eq.s32.totalorder %s21, 0
    %p109 = por %p107, %p108
    %p110 = scmp.ne.s32.totalorder %s102, %s104
    %p111 = scmp.eq.s32.totalorder %s26, 1
    %p112 = por %p110, %p111
    %p113 = scmp.ne.s32.totalorder %s104, %s105
    %p114 = scmp.eq.s32.totalorder %s26, 0
    %p115 = por %p113, %p114
    %p116 = scmp.ne.s32.totalorder %s104, %s105
    %p117 = scmp.eq.s32.totalorder %s27, 1
    %p118 = por %p116, %p117
    %p120 = scmp.ne.s32.totalorder %s105, %s119
    %p121 = scmp.eq.s32.totalorder %s27, 0
    %p122 = por %p120, %p121
    %s124 = sadd.s32 %s123, 1
    %p127 = scmp.eq.s32.totalorder %s21, 1
    %p128 = scmp.ne.s32.totalorder %s123, %s125
    %p129 = scmp.eq.s32.totalorder %s21, 0
    %p130 = por %p128, %p129
    %p131 = scmp.ne.s32.totalorder %s123, %s125
    %p132 = scmp.eq.s32.totalorder %s26, 1
    %p133 = por %p131, %p132
    %p134 = scmp.ne.s32.totalorder %s125, %s126
    %p135 = scmp.eq.s32.totalorder %s26, 0
    %p136 = por %p134, %p135
    %p137 = scmp.ne.s32.totalorder %s125, %s126
    %p138 = scmp.eq.s32.totalorder %s27, 1
    %p139 = por %p137, %p138
    %p141 = scmp.ne.s32.totalorder %s126, %s140
    %p142 = scmp.eq.s32.totalorder %s27, 0
    %p143 = por %p141, %p142
    %s145 = sadd.s32 %s144, 1
    %p148 = scmp.eq.s32.totalorder %s21, 1
    %p149 = scmp.ne.s32.totalorder %s144, %s146
    %p150 = scmp.eq.s32.totalorder %s21, 0
    %p151 = por %p149, %p150
    %p152 = scmp.ne.s32.totalorder %s144, %s146
    %p153 = scmp.eq.s32.totalorder %s26, 1
    %p154 = por %p152, %p153
    %p155 = scmp.ne.s32.totalorder %s146, %s147
    %p156 = scmp.eq.s32.totalorder %s26, 0
    %p157 = por %p155, %p156
    %p158 = scmp.ne.s32.totalorder %s146, %s147
    %p159 = scmp.eq.s32.totalorder %s27, 1
    %p160 = por %p158, %p159
    %p162 = scmp.ne.s32.totalorder %s147, %s161
    %p163 = scmp.eq.s32.totalorder %s27, 0
    %p164 = por %p162, %p163
    %s166 = sadd.s32 %s165, 1
    %p169 = scmp.eq.s32.totalorder %s21, 1
    %p170 = scmp.ne.s32.totalorder %s165, %s167
    %p171 = scmp.eq.s32.totalorder %s21, 0
    %p172 = por %p170, %p171
    %p173 = scmp.ne.s32.totalorder %s165, %s167
    %p174 = scmp.eq.s32.totalorder %s26, 1
    %p175 = por %p173, %p174
    %p176 = scmp.ne.s32.totalorder %s167, %s168
    %p177 = scmp.eq.s32.totalorder %s26, 0
    %p178 = por %p176, %p177
    %p179 = scmp.ne.s32.totalorder %s167, %s168
    %p180 = scmp.eq.s32.totalorder %s27, 1
    %p181 = por %p179, %p180
    %p183 = scmp.ne.s32.totalorder %s168, %s182
    %p184 = scmp.eq.s32.totalorder %s27, 0
    %p185 = por %p183, %p184
    %s187 = sadd.s32 %s186, 1
    %p190 = scmp.eq.s32.totalorder %s21, 1
    %p191 = scmp.ne.s32.totalorder %s186, %s188
    %p192 = scmp.eq.s32.totalorder %s21, 0
    %p193 = por %p191, %p192
    %p194 = scmp.ne.s32.totalorder %s186, %s188
    %p195 = scmp.eq.s32.totalorder %s26, 1
    %p196 = por %p194, %p195
    %p197 = scmp.ne.s32.totalorder %s188, %s189
    %p198 = scmp.eq.s32.totalorder %s26, 0
    %p199 = por %p197, %p198
    %p200 = scmp.ne.s32.totalorder %s188, %s189
    %p201 = scmp.eq.s32.totalorder %s27, 1
    %p202 = por %p200, %p201
    %p204 = scmp.ne.s32.totalorder %s189, %s203
    %p205 = scmp.eq.s32.totalorder %s27, 0
    %p206 = por %p204, %p205
    %s208 = sadd.s32 %s207, 1
    %p211 = scmp.eq.s32.totalorder %s21, 1
    %p212 = scmp.ne.s32.totalorder %s207, %s209
    %p213 = scmp.eq.s32.totalorder %s21, 0
    %p214 = por %p212, %p213
    %p215 = scmp.ne.s32.totalorder %s207, %s209
    %p216 = scmp.eq.s32.totalorder %s26, 1
    %p217 = por %p215, %p216
    %p218 = scmp.ne.s32.totalorder %s209, %s210
    %p219 = scmp.eq.s32.totalorder %s26, 0
    %p220 = por %p218, %p219
    %p221 = scmp.ne.s32.totalorder %s209, %s210
    %p222 = scmp.eq.s32.totalorder %s27, 1
    %p223 = por %p221, %p222
    %p225 = scmp.ne.s32.totalorder %s210, %s224
    %p226 = scmp.eq.s32.totalorder %s27, 0
    %p227 = por %p225, %p226
    %s229 = sadd.s32 %s228, 1
    %p232 = scmp.eq.s32.totalorder %s21, 1
    %p233 = scmp.ne.s32.totalorder %s228, %s230
    %p234 = scmp.eq.s32.totalorder %s21, 0
    %p235 = por %p233, %p234
    %p236 = scmp.ne.s32.totalorder %s228, %s230
    %p237 = scmp.eq.s32.totalorder %s26, 1
    %p238 = por %p236, %p237
    %p239 = scmp.ne.s32.totalorder %s230, %s231
    %p240 = scmp.eq.s32.totalorder %s26, 0
    %p241 = por %p239, %p240
    %p242 = scmp.ne.s32.totalorder %s230, %s231
    %p243 = scmp.eq.s32.totalorder %s27, 1
    %p244 = por %p242, %p243
    %p246 = scmp.ne.s32.totalorder %s231, %s245
    %p247 = scmp.eq.s32.totalorder %s27, 0
    %p248 = por %p246, %p247
    %s250 = sadd.s32 %s249, 1
    %p253 = scmp.eq.s32.totalorder %s21, 1
    %p254 = scmp.ne.s32.totalorder %s249, %s251
    %p255 = scmp.eq.s32.totalorder %s21, 0
    %p256 = por %p254, %p255
    %p257 = scmp.ne.s32.totalorder %s249, %s251
    %p258 = scmp.eq.s32.totalorder %s26, 1
    %p259 = por %p257, %p258
    %p260 = scmp.ne.s32.totalorder %s251, %s252
    %p261 = scmp.eq.s32.totalorder %s26, 0
    %p262 = por %p260, %p261
    %p263 = scmp.ne.s32.totalorder %s251, %s252
    %p264 = scmp.eq.s32.totalorder %s27, 1
    %p265 = por %p263, %p264
    %p267 = scmp.ne.s32.totalorder %s252, %s266
    %p268 = scmp.eq.s32.totalorder %s27, 0
    %p269 = por %p267, %p268
    %s271 = sadd.s32 %s270, 1
    %p274 = scmp.eq.s32.totalorder %s21, 1
    %p275 = scmp.ne.s32.totalorder %s270, %s272
    %p276 = scmp.eq.s32.totalorder %s21, 0
    %p277 = por %p275, %p276
    %p278 = scmp.ne.s32.totalorder %s270, %s272
    %p279 = scmp.eq.s32.totalorder %s26, 1
    %p280 = por %p278, %p279
    %p281 = scmp.ne.s32.totalorder %s272, %s273
    %p282 = scmp.eq.s32.totalorder %s26, 0
    %p283 = por %p281, %p282
    %p284 = scmp.ne.s32.totalorder %s272, %s273
    %p285 = scmp.eq.s32.totalorder %s27, 1
    %p286 = por %p284, %p285
    %p288 = scmp.ne.s32.totalorder %s273, %s287
    %p289 = scmp.eq.s32.totalorder %s27, 0
    %p290 = por %p288, %p289
    %s292 = sadd.s32 %s291, 1
    %p295 = scmp.eq.s32.totalorder %s21, 1
    %p296 = scmp.ne.s32.totalorder %s291, %s293
    %p297 = scmp.eq.s32.totalorder %s21, 0
    %p298 = por %p296, %p297
    %p299 = scmp.ne.s32.totalorder %s291, %s293
    %p300 = scmp.eq.s32.totalorder %s26, 1
    %p301 = por %p299, %p300
    %p302 = scmp.ne.s32.totalorder %s293, %s294
    %p303 = scmp.eq.s32.totalorder %s26, 0
    %p304 = por %p302, %p303
    %p305 = scmp.ne.s32.totalorder %s293, %s294
    %p306 = scmp.eq.s32.totalorder %s27, 1
    %p307 = por %p305, %p306
    %p309 = scmp.ne.s32.totalorder %s294, %s308
    %p310 = scmp.eq.s32.totalorder %s27, 0
    %p311 = por %p309, %p310
    %s312 = ssub.s32 %s21, %s28
    %p313 = scmp.eq.s32.totalorder %s312, 0
    %s315 = sadd.s32 %s314, 1
    %s316 = scalar_select %p313, %s314, %s315
    %p319 = pneg %p313
    %p320 = scmp.eq.s32.totalorder %s21, 1
    %p321 = por %p319, %p320
    %p322 = scmp.ne.s32.totalorder %s314, %s317
    %p323 = scmp.eq.s32.totalorder %s21, 0
    %p324 = por %p322, %p323
    %p325 = scmp.ne.s32.totalorder %s314, %s317
    %p326 = scmp.eq.s32.totalorder %s26, 1
    %p327 = por %p325, %p326
    %p328 = scmp.ne.s32.totalorder %s317, %s318
    %p329 = scmp.eq.s32.totalorder %s26, 0
    %p330 = por %p328, %p329
    %p331 = scmp.ne.s32.totalorder %s317, %s318
    %p332 = scmp.eq.s32.totalorder %s27, 1
    %p333 = por %p331, %p332
    %p335 = scmp.ne.s32.totalorder %s318, %s334
    %p336 = scmp.eq.s32.totalorder %s27, 0
    %p337 = por %p335, %p336
    %p338 = scmp.le.s32.totalorder 1, %s21
    %p339 = scmp.lt.s32.totalorder %s21, 3
    %p340 = pnand %p338, %p339
    %p341 = pneg %p340
    // Predicated region
    $region9: #{global_discriminator_forward.1} parent=5 // pred_check
      _
    $region10: #{global_discriminator_forward.1} parent=5 // pred_check_branch
      %343 = sbr.rel (%p340) target = $region12
    $region11: #{global_discriminator_forward.1} parent=5 // pred_region
      %s344 = ssub.s32 %s21, 1
      // Predicated region
      $region13: #{global_discriminator_forward.1} parent=11 // pred_check
        %p345 = pneg %p94
      $region14: #{global_discriminator_forward.1} parent=11 // pred_check_branch
        %347 = sbr.rel (%p345) target = $region16
      $region15: #{global_discriminator_forward.1} parent=11 // pred_region
        _
      $region16: #{global_discriminator_forward.1} parent=11 // pred_fallthru
        _
      // Predicated region
      $region17: #{global_discriminator_forward.1} parent=11 // pred_check
        %p348 = pneg %p115
      $region18: #{global_discriminator_forward.1} parent=11 // pred_check_branch
        %350 = sbr.rel (%p348) target = $region20
      $region19: #{global_discriminator_forward.1} parent=11 // pred_region
        _
      $region20: #{global_discriminator_forward.1} parent=11 // pred_fallthru
        _
      // Predicated region
      $region21: #{global_discriminator_forward.1} parent=11 // pred_check
        %p351 = pneg %p136
      $region22: #{global_discriminator_forward.1} parent=11 // pred_check_branch
        %353 = sbr.rel (%p351) target = $region24
      $region23: #{global_discriminator_forward.1} parent=11 // pred_region
        _
      $region24: #{global_discriminator_forward.1} parent=11 // pred_fallthru
        _
      // Predicated region
      $region25: #{global_discriminator_forward.1} parent=11 // pred_check
        %p354 = pneg %p157
      $region26: #{global_discriminator_forward.1} parent=11 // pred_check_branch
        %356 = sbr.rel (%p354) target = $region28
      $region27: #{global_discriminator_forward.1} parent=11 // pred_region
        _
      $region28: #{global_discriminator_forward.1} parent=11 // pred_fallthru
        _
      // Predicated region
      $region29: #{global_discriminator_forward.1} parent=11 // pred_check
        %p357 = pneg %p178
      $region30: #{global_discriminator_forward.1} parent=11 // pred_check_branch
        %359 = sbr.rel (%p357) target = $region32
      $region31: #{global_discriminator_forward.1} parent=11 // pred_region
        _
      $region32: #{global_discriminator_forward.1} parent=11 // pred_fallthru
        _
      // Predicated region
      $region33: #{global_discriminator_forward.1} parent=11 // pred_check
        %p360 = pneg %p199
      $region34: #{global_discriminator_forward.1} parent=11 // pred_check_branch
        %362 = sbr.rel (%p360) target = $region36
      $region35: #{global_discriminator_forward.1} parent=11 // pred_region
        _
      $region36: #{global_discriminator_forward.1} parent=11 // pred_fallthru
        _
      // Predicated region
      $region37: #{global_discriminator_forward.1} parent=11 // pred_check
        %p363 = pneg %p220
      $region38: #{global_discriminator_forward.1} parent=11 // pred_check_branch
        %365 = sbr.rel (%p363) target = $region40
      $region39: #{global_discriminator_forward.1} parent=11 // pred_region
        _
      $region40: #{global_discriminator_forward.1} parent=11 // pred_fallthru
        _
      // Predicated region
      $region41: #{global_discriminator_forward.1} parent=11 // pred_check
        %p366 = pneg %p241
      $region42: #{global_discriminator_forward.1} parent=11 // pred_check_branch
        %368 = sbr.rel (%p366) target = $region44
      $region43: #{global_discriminator_forward.1} parent=11 // pred_region
        _
      $region44: #{global_discriminator_forward.1} parent=11 // pred_fallthru
        _
      // Predicated region
      $region45: #{global_discriminator_forward.1} parent=11 // pred_check
        %p369 = pneg %p262
      $region46: #{global_discriminator_forward.1} parent=11 // pred_check_branch
        %371 = sbr.rel (%p369) target = $region48
      $region47: #{global_discriminator_forward.1} parent=11 // pred_region
        _
      $region48: #{global_discriminator_forward.1} parent=11 // pred_fallthru
        _
      // Predicated region
      $region49: #{global_discriminator_forward.1} parent=11 // pred_check
        %p372 = pneg %p283
      $region50: #{global_discriminator_forward.1} parent=11 // pred_check_branch
        %374 = sbr.rel (%p372) target = $region52
      $region51: #{global_discriminator_forward.1} parent=11 // pred_region
        _
      $region52: #{global_discriminator_forward.1} parent=11 // pred_fallthru
        _
      // Predicated region
      $region53: #{global_discriminator_forward.1} parent=11 // pred_check
        %p375 = pneg %p304
      $region54: #{global_discriminator_forward.1} parent=11 // pred_check_branch
        %377 = sbr.rel (%p375) target = $region56
      $region55: #{global_discriminator_forward.1} parent=11 // pred_region
        _
      $region56: #{global_discriminator_forward.1} parent=11 // pred_fallthru
        _
    $region12: #{global_discriminator_forward.1} parent=5 // pred_fallthru
      _
    %p378 = scmp.lt.s32.totalorder %s21, 2
    // Predicated region
    $region57: #{global_discriminator_forward.1} parent=5 // pred_check
      %p379 = pneg %p378
    $region58: #{global_discriminator_forward.1} parent=5 // pred_check_branch
      %381 = sbr.rel (%p379) target = $region60
    $region59: #{global_discriminator_forward.1} parent=5 // pred_region
      // Predicated region
      $region61: #{global_discriminator_forward.1} parent=59 // pred_check
        %p382 = pneg %p41
      $region62: #{global_discriminator_forward.1} parent=59 // pred_check_branch
        %384 = sbr.rel (%p382) target = $region64
      $region63: #{global_discriminator_forward.1} parent=59 // pred_region
        %p385 = scmp.lt.s32.totalorder %s21, 1
        %s386 = scalar_select %p385, %s21, 1
        %s387 = smul.addr %s386, 256
        %s388 = smul.addr %s387, 8
        %s389 = scalar_lea.vmem %s0, %s388
      $region64: #{global_discriminator_forward.1} parent=59 // pred_fallthru
        _
      // Predicated region
      $region65: #{global_discriminator_forward.1} parent=59 // pred_check
        %p390 = pneg %p67
      $region66: #{global_discriminator_forward.1} parent=59 // pred_check_branch
        %392 = sbr.rel (%p390) target = $region68
      $region67: #{global_discriminator_forward.1} parent=59 // pred_region
        %p393 = scmp.lt.s32.totalorder %s21, 1
        %s394 = scalar_select %p393, %s21, 1
        %s395 = smul.addr %s394, 4
        %s396 = smul.addr %s395, 8
        %s397 = scalar_lea.vmem %s1, %s396
      $region68: #{global_discriminator_forward.1} parent=59 // pred_fallthru
        _
    $region60: #{global_discriminator_forward.1} parent=5 // pred_fallthru
      _
    %p398 = scmp.le.s32.totalorder 1, %s21
    %p399 = scmp.lt.s32.totalorder %s21, 3
    %p400 = pnand %p398, %p399
    %p401 = pneg %p400
    // Predicated region
    $region69: #{global_discriminator_forward.1} parent=5 // pred_check
      _
    $region70: #{global_discriminator_forward.1} parent=5 // pred_check_branch
      %403 = sbr.rel (%p400) target = $region72
    $region71: #{global_discriminator_forward.1} parent=5 // pred_region
      %s404 = ssub.s32 %s21, 1
      %p405 = scmp.lt.s32.totalorder %s26, 1
      %s406 = scalar_select %p405, %s26, 1
      %s407 = smul.addr %s406, 256
      %s408 = smul.addr %s407, 8
      %s409 = scalar_lea.vmem %s0, %s408
      %p410 = pneg %p47
      %p411 = pneg %p44
      %p412 = scmp.lt.s32.totalorder %s26, 1
      %s413 = scalar_select %p412, %s26, 1
      %s414 = smul.addr %s413, 4
      %s415 = smul.addr %s414, 8
      %s416 = scalar_lea.vmem %s1, %s415
      %p417 = pneg %p73
      %p418 = pneg %p70
      %p419 = pneg %p94
      %p420 = pneg %p91
      %p421 = pneg %p115
      %p422 = pneg %p112
      %p423 = pneg %p136
      %p424 = pneg %p133
      %p425 = pneg %p157
      %p426 = pneg %p154
      %p427 = pneg %p178
      %p428 = pneg %p175
      %p429 = pneg %p199
      %p430 = pneg %p196
      %p431 = pneg %p220
      %p432 = pneg %p217
      %p433 = pneg %p241
      %p434 = pneg %p238
      %p435 = pneg %p262
      %p436 = pneg %p259
      %p437 = pneg %p283
      %p438 = pneg %p280
      %p439 = pneg %p304
      %p440 = pneg %p301
      %p441 = pneg %p330
      %p442 = pneg %p327
      %p443 = scmp.lt.s32.totalorder %s26, 1
      %s444 = scalar_select %p443, %s26, 1
      %s445 = scalar_lea.vmem %s13, %s444
      %p446 = scmp.lt.s32.totalorder %s26, 1
      %s447 = scalar_select %p446, %s26, 1
      %s448 = smul.addr %s447, 256
      %s449 = smul.addr %s448, 8
      %s450 = scalar_lea.vmem %s0, %s449
      %p451 = scmp.lt.s32.totalorder %s26, 1
      %s452 = scalar_select %p451, %s26, 1
      %s453 = smul.addr %s452, 4
      %s454 = smul.addr %s453, 8
      %s455 = scalar_lea.vmem %s1, %s454
      %p456 = scmp.lt.s32.totalorder %s26, 1
      %s457 = scalar_select %p456, %s26, 1
      %s458 = scalar_lea.vmem %s13, %s457
      %v460 = vld [vmem:[%s450] sm:$0xff]
      %v461 = vld [vmem:[%s450 + $0x8] sm:$0xff]
      %v462 = vld [vmem:[%s450 + $0x10] sm:$0xff]
      %v463 = vld [vmem:[%s450 + $0x18] sm:$0xff]
      %v464 = vld [vmem:[%s450 + $0x20] sm:$0xff]
      %v465 = vld [vmem:[%s450 + $0x28] sm:$0xff]
      %v466 = vld [vmem:[%s450 + $0x30] sm:$0xff]
      %v467 = vld [vmem:[%s450 + $0x38] sm:$0xff]
      %v468 = vld [vmem:[%s450 + $0x40] sm:$0xff]
      %v469 = vld [vmem:[%s450 + $0x48] sm:$0xff]
      %v470 = vld [vmem:[%s450 + $0x50] sm:$0xff]
      %v471 = vld [vmem:[%s450 + $0x58] sm:$0xff]
      %v472 = vld [vmem:[%s450 + $0x60] sm:$0xff]
      %v473 = vld [vmem:[%s450 + $0x68] sm:$0xff]
      %v474 = vld [vmem:[%s450 + $0x70] sm:$0xff]
      %v475 = vld [vmem:[%s450 + $0x78] sm:$0xff]
      %v476 = vld [vmem:[%s450 + $0x80] sm:$0xff]
      %v477 = vld [vmem:[%s450 + $0x88] sm:$0xff]
      %v478 = vld [vmem:[%s450 + $0x90] sm:$0xff]
      %v479 = vld [vmem:[%s450 + $0x98] sm:$0xff]
      %v480 = vld [vmem:[%s450 + $0xa0] sm:$0xff]
      %v481 = vld [vmem:[%s450 + $0xa8] sm:$0xff]
      %v482 = vld [vmem:[%s450 + $0xb0] sm:$0xff]
      %v483 = vld [vmem:[%s450 + $0xb8] sm:$0xff]
      %v484 = vld [vmem:[%s450 + $0xc0] sm:$0xff]
      %v485 = vld [vmem:[%s450 + $0xc8] sm:$0xff]
      %v486 = vld [vmem:[%s450 + $0xd0] sm:$0xff]
      %v487 = vld [vmem:[%s450 + $0xd8] sm:$0xff]
      %v488 = vld [vmem:[%s450 + $0xe0] sm:$0xff]
      %v489 = vld [vmem:[%s450 + $0xe8] sm:$0xff]
      %v490 = vld [vmem:[%s450 + $0xf0] sm:$0xff]
      %v491 = vld [vmem:[%s450 + $0xf8] sm:$0xff]
      %v492 = vld [vmem:[%s450 + $0x100] sm:$0xff]
      %v493 = vld [vmem:[%s450 + $0x108] sm:$0xff]
      %v494 = vld [vmem:[%s450 + $0x110] sm:$0xff]
      %v495 = vld [vmem:[%s450 + $0x118] sm:$0xff]
      %v496 = vld [vmem:[%s450 + $0x120] sm:$0xff]
      %v497 = vld [vmem:[%s450 + $0x128] sm:$0xff]
      %v498 = vld [vmem:[%s450 + $0x130] sm:$0xff]
      %v499 = vld [vmem:[%s450 + $0x138] sm:$0xff]
      %v500 = vld [vmem:[%s450 + $0x140] sm:$0xff]
      %v501 = vld [vmem:[%s450 + $0x148] sm:$0xff]
      %v502 = vld [vmem:[%s450 + $0x150] sm:$0xff]
      %v503 = vld [vmem:[%s450 + $0x158] sm:$0xff]
      %v504 = vld [vmem:[%s450 + $0x160] sm:$0xff]
      %v505 = vld [vmem:[%s450 + $0x168] sm:$0xff]
      %v506 = vld [vmem:[%s450 + $0x170] sm:$0xff]
      %v507 = vld [vmem:[%s450 + $0x178] sm:$0xff]
      %v508 = vld [vmem:[%s450 + $0x180] sm:$0xff]
      %v509 = vld [vmem:[%s450 + $0x188] sm:$0xff]
      %v510 = vld [vmem:[%s450 + $0x190] sm:$0xff]
      %v511 = vld [vmem:[%s450 + $0x198] sm:$0xff]
      %v512 = vld [vmem:[%s450 + $0x1a0] sm:$0xff]
      %v513 = vld [vmem:[%s450 + $0x1a8] sm:$0xff]
      %v514 = vld [vmem:[%s450 + $0x1b0] sm:$0xff]
      %v515 = vld [vmem:[%s450 + $0x1b8] sm:$0xff]
      %v516 = vld [vmem:[%s450 + $0x1c0] sm:$0xff]
      %v517 = vld [vmem:[%s450 + $0x1c8] sm:$0xff]
      %v518 = vld [vmem:[%s450 + $0x1d0] sm:$0xff]
      %v519 = vld [vmem:[%s450 + $0x1d8] sm:$0xff]
      %v520 = vld [vmem:[%s450 + $0x1e0] sm:$0xff]
      %v521 = vld [vmem:[%s450 + $0x1e8] sm:$0xff]
      %v522 = vld [vmem:[%s450 + $0x1f0] sm:$0xff]
      %v523 = vld [vmem:[%s450 + $0x1f8] sm:$0xff]
      %v524 = vld [vmem:[%s450 + $0x200] sm:$0xff]
      %v525 = vld [vmem:[%s450 + $0x208] sm:$0xff]
      %v526 = vld [vmem:[%s450 + $0x210] sm:$0xff]
      %v527 = vld [vmem:[%s450 + $0x218] sm:$0xff]
      %v528 = vld [vmem:[%s450 + $0x220] sm:$0xff]
      %v529 = vld [vmem:[%s450 + $0x228] sm:$0xff]
      %v530 = vld [vmem:[%s450 + $0x230] sm:$0xff]
      %v531 = vld [vmem:[%s450 + $0x238] sm:$0xff]
      %v532 = vld [vmem:[%s450 + $0x240] sm:$0xff]
      %v533 = vld [vmem:[%s450 + $0x248] sm:$0xff]
      %v534 = vld [vmem:[%s450 + $0x250] sm:$0xff]
      %v535 = vld [vmem:[%s450 + $0x258] sm:$0xff]
      %v536 = vld [vmem:[%s450 + $0x260] sm:$0xff]
      %v537 = vld [vmem:[%s450 + $0x268] sm:$0xff]
      %v538 = vld [vmem:[%s450 + $0x270] sm:$0xff]
      %v539 = vld [vmem:[%s450 + $0x278] sm:$0xff]
      %v540 = vld [vmem:[%s450 + $0x280] sm:$0xff]
      %v541 = vld [vmem:[%s450 + $0x288] sm:$0xff]
      %v542 = vld [vmem:[%s450 + $0x290] sm:$0xff]
      %v543 = vld [vmem:[%s450 + $0x298] sm:$0xff]
      %v544 = vld [vmem:[%s450 + $0x2a0] sm:$0xff]
      %v545 = vld [vmem:[%s450 + $0x2a8] sm:$0xff]
      %v546 = vld [vmem:[%s450 + $0x2b0] sm:$0xff]
      %v547 = vld [vmem:[%s450 + $0x2b8] sm:$0xff]
      %v548 = vld [vmem:[%s450 + $0x2c0] sm:$0xff]
      %v549 = vld [vmem:[%s450 + $0x2c8] sm:$0xff]
      %v550 = vld [vmem:[%s450 + $0x2d0] sm:$0xff]
      %v551 = vld [vmem:[%s450 + $0x2d8] sm:$0xff]
      %v552 = vld [vmem:[%s450 + $0x2e0] sm:$0xff]
      %v553 = vld [vmem:[%s450 + $0x2e8] sm:$0xff]
      %v554 = vld [vmem:[%s450 + $0x2f0] sm:$0xff]
      %v555 = vld [vmem:[%s450 + $0x2f8] sm:$0xff]
      %v556 = vld [vmem:[%s450 + $0x300] sm:$0xff]
      %v557 = vld [vmem:[%s450 + $0x308] sm:$0xff]
      %v558 = vld [vmem:[%s450 + $0x310] sm:$0xff]
      %v559 = vld [vmem:[%s450 + $0x318] sm:$0xff]
      %v560 = vld [vmem:[%s450 + $0x320] sm:$0xff]
      %v561 = vld [vmem:[%s450 + $0x328] sm:$0xff]
      %v562 = vld [vmem:[%s450 + $0x330] sm:$0xff]
      %v563 = vld [vmem:[%s450 + $0x338] sm:$0xff]
      %v564 = vld [vmem:[%s450 + $0x340] sm:$0xff]
      %v565 = vld [vmem:[%s450 + $0x348] sm:$0xff]
      %v566 = vld [vmem:[%s450 + $0x350] sm:$0xff]
      %v567 = vld [vmem:[%s450 + $0x358] sm:$0xff]
      %v568 = vld [vmem:[%s450 + $0x360] sm:$0xff]
      %v569 = vld [vmem:[%s450 + $0x368] sm:$0xff]
      %v570 = vld [vmem:[%s450 + $0x370] sm:$0xff]
      %v571 = vld [vmem:[%s450 + $0x378] sm:$0xff]
      %v572 = vld [vmem:[%s450 + $0x380] sm:$0xff]
      %v573 = vld [vmem:[%s450 + $0x388] sm:$0xff]
      %v574 = vld [vmem:[%s450 + $0x390] sm:$0xff]
      %v575 = vld [vmem:[%s450 + $0x398] sm:$0xff]
      %v576 = vld [vmem:[%s450 + $0x3a0] sm:$0xff]
      %v577 = vld [vmem:[%s450 + $0x3a8] sm:$0xff]
      %v578 = vld [vmem:[%s450 + $0x3b0] sm:$0xff]
      %v579 = vld [vmem:[%s450 + $0x3b8] sm:$0xff]
      %v580 = vld [vmem:[%s450 + $0x3c0] sm:$0xff]
      %v581 = vld [vmem:[%s450 + $0x3c8] sm:$0xff]
      %v582 = vld [vmem:[%s450 + $0x3d0] sm:$0xff]
      %v583 = vld [vmem:[%s450 + $0x3d8] sm:$0xff]
      %v584 = vld [vmem:[%s450 + $0x3e0] sm:$0xff]
      %v585 = vld [vmem:[%s450 + $0x3e8] sm:$0xff]
      %v586 = vld [vmem:[%s450 + $0x3f0] sm:$0xff]
      %v587 = vld [vmem:[%s450 + $0x3f8] sm:$0xff]
      %v588 = vld [vmem:[%s450 + $0x400] sm:$0xff]
      %v589 = vld [vmem:[%s450 + $0x408] sm:$0xff]
      %v590 = vld [vmem:[%s450 + $0x410] sm:$0xff]
      %v591 = vld [vmem:[%s450 + $0x418] sm:$0xff]
      %v592 = vld [vmem:[%s450 + $0x420] sm:$0xff]
      %v593 = vld [vmem:[%s450 + $0x428] sm:$0xff]
      %v594 = vld [vmem:[%s450 + $0x430] sm:$0xff]
      %v595 = vld [vmem:[%s450 + $0x438] sm:$0xff]
      %v596 = vld [vmem:[%s450 + $0x440] sm:$0xff]
      %v597 = vld [vmem:[%s450 + $0x448] sm:$0xff]
      %v598 = vld [vmem:[%s450 + $0x450] sm:$0xff]
      %v599 = vld [vmem:[%s450 + $0x458] sm:$0xff]
      %v600 = vld [vmem:[%s450 + $0x460] sm:$0xff]
      %v601 = vld [vmem:[%s450 + $0x468] sm:$0xff]
      %v602 = vld [vmem:[%s450 + $0x470] sm:$0xff]
      %v603 = vld [vmem:[%s450 + $0x478] sm:$0xff]
      %v604 = vld [vmem:[%s450 + $0x480] sm:$0xff]
      %v605 = vld [vmem:[%s450 + $0x488] sm:$0xff]
      %v606 = vld [vmem:[%s450 + $0x490] sm:$0xff]
      %v607 = vld [vmem:[%s450 + $0x498] sm:$0xff]
      %v608 = vld [vmem:[%s450 + $0x4a0] sm:$0xff]
      %v609 = vld [vmem:[%s450 + $0x4a8] sm:$0xff]
      %v610 = vld [vmem:[%s450 + $0x4b0] sm:$0xff]
      %v611 = vld [vmem:[%s450 + $0x4b8] sm:$0xff]
      %v612 = vld [vmem:[%s450 + $0x4c0] sm:$0xff]
      %v613 = vld [vmem:[%s450 + $0x4c8] sm:$0xff]
      %v614 = vld [vmem:[%s450 + $0x4d0] sm:$0xff]
      %v615 = vld [vmem:[%s450 + $0x4d8] sm:$0xff]
      %v616 = vld [vmem:[%s450 + $0x4e0] sm:$0xff]
      %v617 = vld [vmem:[%s450 + $0x4e8] sm:$0xff]
      %v618 = vld [vmem:[%s450 + $0x4f0] sm:$0xff]
      %v619 = vld [vmem:[%s450 + $0x4f8] sm:$0xff]
      %v620 = vld [vmem:[%s450 + $0x500] sm:$0xff]
      %v621 = vld [vmem:[%s450 + $0x508] sm:$0xff]
      %v622 = vld [vmem:[%s450 + $0x510] sm:$0xff]
      %v623 = vld [vmem:[%s450 + $0x518] sm:$0xff]
      %v624 = vld [vmem:[%s450 + $0x520] sm:$0xff]
      %v625 = vld [vmem:[%s450 + $0x528] sm:$0xff]
      %v626 = vld [vmem:[%s450 + $0x530] sm:$0xff]
      %v627 = vld [vmem:[%s450 + $0x538] sm:$0xff]
      %v628 = vld [vmem:[%s450 + $0x540] sm:$0xff]
      %v629 = vld [vmem:[%s450 + $0x548] sm:$0xff]
      %v630 = vld [vmem:[%s450 + $0x550] sm:$0xff]
      %v631 = vld [vmem:[%s450 + $0x558] sm:$0xff]
      %v632 = vld [vmem:[%s450 + $0x560] sm:$0xff]
      %v633 = vld [vmem:[%s450 + $0x568] sm:$0xff]
      %v634 = vld [vmem:[%s450 + $0x570] sm:$0xff]
      %v635 = vld [vmem:[%s450 + $0x578] sm:$0xff]
      %v636 = vld [vmem:[%s450 + $0x580] sm:$0xff]
      %v637 = vld [vmem:[%s450 + $0x588] sm:$0xff]
      %v638 = vld [vmem:[%s450 + $0x590] sm:$0xff]
      %v639 = vld [vmem:[%s450 + $0x598] sm:$0xff]
      %v640 = vld [vmem:[%s450 + $0x5a0] sm:$0xff]
      %v641 = vld [vmem:[%s450 + $0x5a8] sm:$0xff]
      %v642 = vld [vmem:[%s450 + $0x5b0] sm:$0xff]
      %v643 = vld [vmem:[%s450 + $0x5b8] sm:$0xff]
      %v644 = vld [vmem:[%s450 + $0x5c0] sm:$0xff]
      %v645 = vld [vmem:[%s450 + $0x5c8] sm:$0xff]
      %v646 = vld [vmem:[%s450 + $0x5d0] sm:$0xff]
      %v647 = vld [vmem:[%s450 + $0x5d8] sm:$0xff]
      %v648 = vld [vmem:[%s450 + $0x5e0] sm:$0xff]
      %v649 = vld [vmem:[%s450 + $0x5e8] sm:$0xff]
      %v650 = vld [vmem:[%s450 + $0x5f0] sm:$0xff]
      %v651 = vld [vmem:[%s450 + $0x5f8] sm:$0xff]
      %v652 = vld [vmem:[%s450 + $0x600] sm:$0xff]
      %v653 = vld [vmem:[%s450 + $0x608] sm:$0xff]
      %v654 = vld [vmem:[%s450 + $0x610] sm:$0xff]
      %v655 = vld [vmem:[%s450 + $0x618] sm:$0xff]
      %v656 = vld [vmem:[%s450 + $0x620] sm:$0xff]
      %v657 = vld [vmem:[%s450 + $0x628] sm:$0xff]
      %v658 = vld [vmem:[%s450 + $0x630] sm:$0xff]
      %v659 = vld [vmem:[%s450 + $0x638] sm:$0xff]
      %v660 = vld [vmem:[%s450 + $0x640] sm:$0xff]
      %v661 = vld [vmem:[%s450 + $0x648] sm:$0xff]
      %v662 = vld [vmem:[%s450 + $0x650] sm:$0xff]
      %v663 = vld [vmem:[%s450 + $0x658] sm:$0xff]
      %v664 = vld [vmem:[%s450 + $0x660] sm:$0xff]
      %v665 = vld [vmem:[%s450 + $0x668] sm:$0xff]
      %v666 = vld [vmem:[%s450 + $0x670] sm:$0xff]
      %v667 = vld [vmem:[%s450 + $0x678] sm:$0xff]
      %v668 = vld [vmem:[%s450 + $0x680] sm:$0xff]
      %v669 = vld [vmem:[%s450 + $0x688] sm:$0xff]
      %v670 = vld [vmem:[%s450 + $0x690] sm:$0xff]
      %v671 = vld [vmem:[%s450 + $0x698] sm:$0xff]
      %v672 = vld [vmem:[%s450 + $0x6a0] sm:$0xff]
      %v673 = vld [vmem:[%s450 + $0x6a8] sm:$0xff]
      %v674 = vld [vmem:[%s450 + $0x6b0] sm:$0xff]
      %v675 = vld [vmem:[%s450 + $0x6b8] sm:$0xff]
      %v676 = vld [vmem:[%s450 + $0x6c0] sm:$0xff]
      %v677 = vld [vmem:[%s450 + $0x6c8] sm:$0xff]
      %v678 = vld [vmem:[%s450 + $0x6d0] sm:$0xff]
      %v679 = vld [vmem:[%s450 + $0x6d8] sm:$0xff]
      %v680 = vld [vmem:[%s450 + $0x6e0] sm:$0xff]
      %v681 = vld [vmem:[%s450 + $0x6e8] sm:$0xff]
      %v682 = vld [vmem:[%s450 + $0x6f0] sm:$0xff]
      %v683 = vld [vmem:[%s450 + $0x6f8] sm:$0xff]
      %v684 = vld [vmem:[%s450 + $0x700] sm:$0xff]
      %v685 = vld [vmem:[%s450 + $0x708] sm:$0xff]
      %v686 = vld [vmem:[%s450 + $0x710] sm:$0xff]
      %v687 = vld [vmem:[%s450 + $0x718] sm:$0xff]
      %v688 = vld [vmem:[%s450 + $0x720] sm:$0xff]
      %v689 = vld [vmem:[%s450 + $0x728] sm:$0xff]
      %v690 = vld [vmem:[%s450 + $0x730] sm:$0xff]
      %v691 = vld [vmem:[%s450 + $0x738] sm:$0xff]
      %v692 = vld [vmem:[%s450 + $0x740] sm:$0xff]
      %v693 = vld [vmem:[%s450 + $0x748] sm:$0xff]
      %v694 = vld [vmem:[%s450 + $0x750] sm:$0xff]
      %v695 = vld [vmem:[%s450 + $0x758] sm:$0xff]
      %v696 = vld [vmem:[%s450 + $0x760] sm:$0xff]
      %v697 = vld [vmem:[%s450 + $0x768] sm:$0xff]
      %v698 = vld [vmem:[%s450 + $0x770] sm:$0xff]
      %v699 = vld [vmem:[%s450 + $0x778] sm:$0xff]
      %v700 = vld [vmem:[%s450 + $0x780] sm:$0xff]
      %v701 = vld [vmem:[%s450 + $0x788] sm:$0xff]
      %v702 = vld [vmem:[%s450 + $0x790] sm:$0xff]
      %v703 = vld [vmem:[%s450 + $0x798] sm:$0xff]
      %v704 = vld [vmem:[%s450 + $0x7a0] sm:$0xff]
      %v705 = vld [vmem:[%s450 + $0x7a8] sm:$0xff]
      %v706 = vld [vmem:[%s450 + $0x7b0] sm:$0xff]
      %v707 = vld [vmem:[%s450 + $0x7b8] sm:$0xff]
      %v708 = vld [vmem:[%s450 + $0x7c0] sm:$0xff]
      %v709 = vld [vmem:[%s450 + $0x7c8] sm:$0xff]
      %v710 = vld [vmem:[%s450 + $0x7d0] sm:$0xff]
      %v711 = vld [vmem:[%s450 + $0x7d8] sm:$0xff]
      %v712 = vld [vmem:[%s450 + $0x7e0] sm:$0xff]
      %v713 = vld [vmem:[%s450 + $0x7e8] sm:$0xff]
      %v714 = vld [vmem:[%s450 + $0x7f0] sm:$0xff]
      %v715 = vld [vmem:[%s450 + $0x7f8] sm:$0xff]
      %v716 = vpack.c.bf16 %v461, %v460
      %v717 = vpack.c.bf16 %v463, %v462
      %v718 = vpack.c.bf16 %v465, %v464
      %v719 = vpack.c.bf16 %v467, %v466
      %v720 = vpack.c.bf16 %v469, %v468
      %v721 = vpack.c.bf16 %v471, %v470
      %v722 = vpack.c.bf16 %v473, %v472
      %v723 = vpack.c.bf16 %v475, %v474
      %v724 = vpack.c.bf16 %v477, %v476
      %v725 = vpack.c.bf16 %v479, %v478
      %v726 = vpack.c.bf16 %v481, %v480
      %v727 = vpack.c.bf16 %v483, %v482
      %v728 = vpack.c.bf16 %v485, %v484
      %v729 = vpack.c.bf16 %v487, %v486
      %v730 = vpack.c.bf16 %v489, %v488
      %v731 = vpack.c.bf16 %v491, %v490
      %v732 = vpack.c.bf16 %v493, %v492
      %v733 = vpack.c.bf16 %v495, %v494
      %v734 = vpack.c.bf16 %v497, %v496
      %v735 = vpack.c.bf16 %v499, %v498
      %v736 = vpack.c.bf16 %v501, %v500
      %v737 = vpack.c.bf16 %v503, %v502
      %v738 = vpack.c.bf16 %v505, %v504
      %v739 = vpack.c.bf16 %v507, %v506
      %v740 = vpack.c.bf16 %v509, %v508
      %v741 = vpack.c.bf16 %v511, %v510
      %v742 = vpack.c.bf16 %v513, %v512
      %v743 = vpack.c.bf16 %v515, %v514
      %v744 = vpack.c.bf16 %v517, %v516
      %v745 = vpack.c.bf16 %v519, %v518
      %v746 = vpack.c.bf16 %v521, %v520
      %v747 = vpack.c.bf16 %v523, %v522
      %v748 = vpack.c.bf16 %v525, %v524
      %v749 = vpack.c.bf16 %v527, %v526
      %v750 = vpack.c.bf16 %v529, %v528
      %v751 = vpack.c.bf16 %v531, %v530
      %v752 = vpack.c.bf16 %v533, %v532
      %v753 = vpack.c.bf16 %v535, %v534
      %v754 = vpack.c.bf16 %v537, %v536
      %v755 = vpack.c.bf16 %v539, %v538
      %v756 = vpack.c.bf16 %v541, %v540
      %v757 = vpack.c.bf16 %v543, %v542
      %v758 = vpack.c.bf16 %v545, %v544
      %v759 = vpack.c.bf16 %v547, %v546
      %v760 = vpack.c.bf16 %v549, %v548
      %v761 = vpack.c.bf16 %v551, %v550
      %v762 = vpack.c.bf16 %v553, %v552
      %v763 = vpack.c.bf16 %v555, %v554
      %v764 = vpack.c.bf16 %v557, %v556
      %v765 = vpack.c.bf16 %v559, %v558
      %v766 = vpack.c.bf16 %v561, %v560
      %v767 = vpack.c.bf16 %v563, %v562
      %v768 = vpack.c.bf16 %v565, %v564
      %v769 = vpack.c.bf16 %v567, %v566
      %v770 = vpack.c.bf16 %v569, %v568
      %v771 = vpack.c.bf16 %v571, %v570
      %v772 = vpack.c.bf16 %v573, %v572
      %v773 = vpack.c.bf16 %v575, %v574
      %v774 = vpack.c.bf16 %v577, %v576
      %v775 = vpack.c.bf16 %v579, %v578
      %v776 = vpack.c.bf16 %v581, %v580
      %v777 = vpack.c.bf16 %v583, %v582
      %v778 = vpack.c.bf16 %v585, %v584
      %v779 = vpack.c.bf16 %v587, %v586
      %v780 = vpack.c.bf16 %v589, %v588
      %v781 = vpack.c.bf16 %v591, %v590
      %v782 = vpack.c.bf16 %v593, %v592
      %v783 = vpack.c.bf16 %v595, %v594
      %v784 = vpack.c.bf16 %v597, %v596
      %v785 = vpack.c.bf16 %v599, %v598
      %v786 = vpack.c.bf16 %v601, %v600
      %v787 = vpack.c.bf16 %v603, %v602
      %v788 = vpack.c.bf16 %v605, %v604
      %v789 = vpack.c.bf16 %v607, %v606
      %v790 = vpack.c.bf16 %v609, %v608
      %v791 = vpack.c.bf16 %v611, %v610
      %v792 = vpack.c.bf16 %v613, %v612
      %v793 = vpack.c.bf16 %v615, %v614
      %v794 = vpack.c.bf16 %v617, %v616
      %v795 = vpack.c.bf16 %v619, %v618
      %v796 = vpack.c.bf16 %v621, %v620
      %v797 = vpack.c.bf16 %v623, %v622
      %v798 = vpack.c.bf16 %v625, %v624
      %v799 = vpack.c.bf16 %v627, %v626
      %v800 = vpack.c.bf16 %v629, %v628
      %v801 = vpack.c.bf16 %v631, %v630
      %v802 = vpack.c.bf16 %v633, %v632
      %v803 = vpack.c.bf16 %v635, %v634
      %v804 = vpack.c.bf16 %v637, %v636
      %v805 = vpack.c.bf16 %v639, %v638
      %v806 = vpack.c.bf16 %v641, %v640
      %v807 = vpack.c.bf16 %v643, %v642
      %v808 = vpack.c.bf16 %v645, %v644
      %v809 = vpack.c.bf16 %v647, %v646
      %v810 = vpack.c.bf16 %v649, %v648
      %v811 = vpack.c.bf16 %v651, %v650
      %v812 = vpack.c.bf16 %v653, %v652
      %v813 = vpack.c.bf16 %v655, %v654
      %v814 = vpack.c.bf16 %v657, %v656
      %v815 = vpack.c.bf16 %v659, %v658
      %v816 = vpack.c.bf16 %v661, %v660
      %v817 = vpack.c.bf16 %v663, %v662
      %v818 = vpack.c.bf16 %v665, %v664
      %v819 = vpack.c.bf16 %v667, %v666
      %v820 = vpack.c.bf16 %v669, %v668
      %v821 = vpack.c.bf16 %v671, %v670
      %v822 = vpack.c.bf16 %v673, %v672
      %v823 = vpack.c.bf16 %v675, %v674
      %v824 = vpack.c.bf16 %v677, %v676
      %v825 = vpack.c.bf16 %v679, %v678
      %v826 = vpack.c.bf16 %v681, %v680
      %v827 = vpack.c.bf16 %v683, %v682
      %v828 = vpack.c.bf16 %v685, %v684
      %v829 = vpack.c.bf16 %v687, %v686
      %v830 = vpack.c.bf16 %v689, %v688
      %v831 = vpack.c.bf16 %v691, %v690
      %v832 = vpack.c.bf16 %v693, %v692
      %v833 = vpack.c.bf16 %v695, %v694
      %v834 = vpack.c.bf16 %v697, %v696
      %v835 = vpack.c.bf16 %v699, %v698
      %v836 = vpack.c.bf16 %v701, %v700
      %v837 = vpack.c.bf16 %v703, %v702
      %v838 = vpack.c.bf16 %v705, %v704
      %v839 = vpack.c.bf16 %v707, %v706
      %v840 = vpack.c.bf16 %v709, %v708
      %v841 = vpack.c.bf16 %v711, %v710
      %v842 = vpack.c.bf16 %v713, %v712
      %v843 = vpack.c.bf16 %v715, %v714
      %v844 = vld [vmem:[%s2] sm:$0xff]
      %v845 = vld [vmem:[%s2 + $0x8] sm:$0xff]
      %v846 = vld [vmem:[%s2 + $0x10] sm:$0xff]
      %v847 = vld [vmem:[%s2 + $0x18] sm:$0xff]
      %v848 = vld [vmem:[%s2 + $0x20] sm:$0xff]
      %v849 = vld [vmem:[%s2 + $0x28] sm:$0xff]
      %v850 = vld [vmem:[%s2 + $0x30] sm:$0xff]
      %v851 = vld [vmem:[%s2 + $0x38] sm:$0xff]
      %v852 = vld [vmem:[%s2 + $0x40] sm:$0xff]
      %v853 = vld [vmem:[%s2 + $0x48] sm:$0xff]
      %v854 = vld [vmem:[%s2 + $0x50] sm:$0xff]
      %v855 = vld [vmem:[%s2 + $0x58] sm:$0xff]
      %v856 = vld [vmem:[%s2 + $0x60] sm:$0xff]
      %v857 = vld [vmem:[%s2 + $0x68] sm:$0xff]
      %v858 = vld [vmem:[%s2 + $0x70] sm:$0xff]
      %v859 = vld [vmem:[%s2 + $0x78] sm:$0xff]
      %v860 = vld [vmem:[%s2 + $0x80] sm:$0xff]
      %v861 = vld [vmem:[%s2 + $0x88] sm:$0xff]
      %v862 = vld [vmem:[%s2 + $0x90] sm:$0xff]
      %v863 = vld [vmem:[%s2 + $0x98] sm:$0xff]
      %v864 = vld [vmem:[%s2 + $0xa0] sm:$0xff]
      %v865 = vld [vmem:[%s2 + $0xa8] sm:$0xff]
      %v866 = vld [vmem:[%s2 + $0xb0] sm:$0xff]
      %v867 = vld [vmem:[%s2 + $0xb8] sm:$0xff]
      %v868 = vld [vmem:[%s2 + $0xc0] sm:$0xff]
      %v869 = vld [vmem:[%s2 + $0xc8] sm:$0xff]
      %v870 = vld [vmem:[%s2 + $0xd0] sm:$0xff]
      %v871 = vld [vmem:[%s2 + $0xd8] sm:$0xff]
      %v872 = vld [vmem:[%s2 + $0xe0] sm:$0xff]
      %v873 = vld [vmem:[%s2 + $0xe8] sm:$0xff]
      %v874 = vld [vmem:[%s2 + $0xf0] sm:$0xff]
      %v875 = vld [vmem:[%s2 + $0xf8] sm:$0xff]
      %v876 = vld [vmem:[%s2 + $0x100] sm:$0xff]
      %v877 = vld [vmem:[%s2 + $0x108] sm:$0xff]
      %v878 = vld [vmem:[%s2 + $0x110] sm:$0xff]
      %v879 = vld [vmem:[%s2 + $0x118] sm:$0xff]
      %v880 = vld [vmem:[%s2 + $0x120] sm:$0xff]
      %v881 = vld [vmem:[%s2 + $0x128] sm:$0xff]
      %v882 = vld [vmem:[%s2 + $0x130] sm:$0xff]
      %v883 = vld [vmem:[%s2 + $0x138] sm:$0xff]
      %v884 = vld [vmem:[%s2 + $0x140] sm:$0xff]
      %v885 = vld [vmem:[%s2 + $0x148] sm:$0xff]
      %v886 = vld [vmem:[%s2 + $0x150] sm:$0xff]
      %v887 = vld [vmem:[%s2 + $0x158] sm:$0xff]
      %v888 = vld [vmem:[%s2 + $0x160] sm:$0xff]
      %v889 = vld [vmem:[%s2 + $0x168] sm:$0xff]
      %v890 = vld [vmem:[%s2 + $0x170] sm:$0xff]
      %v891 = vld [vmem:[%s2 + $0x178] sm:$0xff]
      %v892 = vld [vmem:[%s2 + $0x180] sm:$0xff]
      %v893 = vld [vmem:[%s2 + $0x188] sm:$0xff]
      %v894 = vld [vmem:[%s2 + $0x190] sm:$0xff]
      %v895 = vld [vmem:[%s2 + $0x198] sm:$0xff]
      %v896 = vld [vmem:[%s2 + $0x1a0] sm:$0xff]
      %v897 = vld [vmem:[%s2 + $0x1a8] sm:$0xff]
      %v898 = vld [vmem:[%s2 + $0x1b0] sm:$0xff]
      %v899 = vld [vmem:[%s2 + $0x1b8] sm:$0xff]
      %v900 = vld [vmem:[%s2 + $0x1c0] sm:$0xff]
      %v901 = vld [vmem:[%s2 + $0x1c8] sm:$0xff]
      %v902 = vld [vmem:[%s2 + $0x1d0] sm:$0xff]
      %v903 = vld [vmem:[%s2 + $0x1d8] sm:$0xff]
      %v904 = vld [vmem:[%s2 + $0x1e0] sm:$0xff]
      %v905 = vld [vmem:[%s2 + $0x1e8] sm:$0xff]
      %v906 = vld [vmem:[%s2 + $0x1f0] sm:$0xff]
      %v907 = vld [vmem:[%s2 + $0x1f8] sm:$0xff]
      %v908 = vld [vmem:[%s3] sm:$0xff]
      %v909 = vld [vmem:[%s3 + $0x8] sm:$0xff]
      %v910 = vld [vmem:[%s3 + $0x10] sm:$0xff]
      %v911 = vld [vmem:[%s3 + $0x18] sm:$0xff]
      %v912 = vld [vmem:[%s3 + $0x20] sm:$0xff]
      %v913 = vld [vmem:[%s3 + $0x28] sm:$0xff]
      %v914 = vld [vmem:[%s3 + $0x30] sm:$0xff]
      %v915 = vld [vmem:[%s3 + $0x38] sm:$0xff]
      %917 = vset.pattern.permute.xlu0 0
      %918 = vperm.xlu0 %917, %v908
      %v919 = vpop.permute.xlu0 %918
      %922 = vset.pattern.permute.xlu0 0
      %923 = vperm.xlu0 %922, %v909
      %v924 = vpop.permute.xlu0 %923
      %927 = vset.pattern.permute.xlu0 0
      %928 = vperm.xlu0 %927, %v910
      %v929 = vpop.permute.xlu0 %928
      %932 = vset.pattern.permute.xlu0 0
      %933 = vperm.xlu0 %932, %v911
      %v934 = vpop.permute.xlu0 %933
      %937 = vset.pattern.permute.xlu0 0
      %938 = vperm.xlu0 %937, %v912
      %v939 = vpop.permute.xlu0 %938
      %942 = vset.pattern.permute.xlu0 0
      %943 = vperm.xlu0 %942, %v913
      %v944 = vpop.permute.xlu0 %943
      %947 = vset.pattern.permute.xlu0 0
      %948 = vperm.xlu0 %947, %v914
      %v949 = vpop.permute.xlu0 %948
      %952 = vset.pattern.permute.xlu0 0
      %953 = vperm.xlu0 %952, %v915
      %v954 = vpop.permute.xlu0 %953
      %v1020 = vunpack.c.l.b16 %v844
      %v1021 = vunpack.c.h.b16 %v844
      %v1022 = vunpack.c.l.b16 %v845
      %v1023 = vunpack.c.h.b16 %v845
      %v1024 = vunpack.c.l.b16 %v846
      %v1025 = vunpack.c.h.b16 %v846
      %v1026 = vunpack.c.l.b16 %v847
      %v1027 = vunpack.c.h.b16 %v847
      %v1028 = vunpack.c.l.b16 %v848
      %v1029 = vunpack.c.h.b16 %v848
      %v1030 = vunpack.c.l.b16 %v849
      %v1031 = vunpack.c.h.b16 %v849
      %v1032 = vunpack.c.l.b16 %v850
      %v1033 = vunpack.c.h.b16 %v850
      %v1034 = vunpack.c.l.b16 %v851
      %v1035 = vunpack.c.h.b16 %v851
      %v1036 = vunpack.c.l.b16 %v852
      %v1037 = vunpack.c.h.b16 %v852
      %v1038 = vunpack.c.l.b16 %v853
      %v1039 = vunpack.c.h.b16 %v853
      %v1040 = vunpack.c.l.b16 %v854
      %v1041 = vunpack.c.h.b16 %v854
      %v1042 = vunpack.c.l.b16 %v855
      %v1043 = vunpack.c.h.b16 %v855
      %v1044 = vunpack.c.l.b16 %v856
      %v1045 = vunpack.c.h.b16 %v856
      %v1046 = vunpack.c.l.b16 %v857
      %v1047 = vunpack.c.h.b16 %v857
      %v1048 = vunpack.c.l.b16 %v858
      %v1049 = vunpack.c.h.b16 %v858
      %v1050 = vunpack.c.l.b16 %v859
      %v1051 = vunpack.c.h.b16 %v859
      %v1052 = vunpack.c.l.b16 %v860
      %v1053 = vunpack.c.h.b16 %v860
      %v1054 = vunpack.c.l.b16 %v861
      %v1055 = vunpack.c.h.b16 %v861
      %v1056 = vunpack.c.l.b16 %v862
      %v1057 = vunpack.c.h.b16 %v862
      %v1058 = vunpack.c.l.b16 %v863
      %v1059 = vunpack.c.h.b16 %v863
      %v1060 = vunpack.c.l.b16 %v864
      %v1061 = vunpack.c.h.b16 %v864
      %v1062 = vunpack.c.l.b16 %v865
      %v1063 = vunpack.c.h.b16 %v865
      %v1064 = vunpack.c.l.b16 %v866
      %v1065 = vunpack.c.h.b16 %v866
      %v1066 = vunpack.c.l.b16 %v867
      %v1067 = vunpack.c.h.b16 %v867
      %v1068 = vunpack.c.l.b16 %v868
      %v1069 = vunpack.c.h.b16 %v868
      %v1070 = vunpack.c.l.b16 %v869
      %v1071 = vunpack.c.h.b16 %v869
      %v1072 = vunpack.c.l.b16 %v870
      %v1073 = vunpack.c.h.b16 %v870
      %v1074 = vunpack.c.l.b16 %v871
      %v1075 = vunpack.c.h.b16 %v871
      %v1076 = vunpack.c.l.b16 %v872
      %v1077 = vunpack.c.h.b16 %v872
      %v1078 = vunpack.c.l.b16 %v873
      %v1079 = vunpack.c.h.b16 %v873
      %v1080 = vunpack.c.l.b16 %v874
      %v1081 = vunpack.c.h.b16 %v874
      %v1082 = vunpack.c.l.b16 %v875
      %v1083 = vunpack.c.h.b16 %v875
      %v1084 = vunpack.c.l.b16 %v876
      %v1085 = vunpack.c.h.b16 %v876
      %v1086 = vunpack.c.l.b16 %v877
      %v1087 = vunpack.c.h.b16 %v877
      %v1088 = vunpack.c.l.b16 %v878
      %v1089 = vunpack.c.h.b16 %v878
      %v1090 = vunpack.c.l.b16 %v879
      %v1091 = vunpack.c.h.b16 %v879
      %v1092 = vunpack.c.l.b16 %v880
      %v1093 = vunpack.c.h.b16 %v880
      %v1094 = vunpack.c.l.b16 %v881
      %v1095 = vunpack.c.h.b16 %v881
      %v1096 = vunpack.c.l.b16 %v882
      %v1097 = vunpack.c.h.b16 %v882
      %v1098 = vunpack.c.l.b16 %v883
      %v1099 = vunpack.c.h.b16 %v883
      %v1100 = vunpack.c.l.b16 %v884
      %v1101 = vunpack.c.h.b16 %v884
      %v1102 = vunpack.c.l.b16 %v885
      %v1103 = vunpack.c.h.b16 %v885
      %v1104 = vunpack.c.l.b16 %v886
      %v1105 = vunpack.c.h.b16 %v886
      %v1106 = vunpack.c.l.b16 %v887
      %v1107 = vunpack.c.h.b16 %v887
      %v1108 = vunpack.c.l.b16 %v888
      %v1109 = vunpack.c.h.b16 %v888
      %v1110 = vunpack.c.l.b16 %v889
      %v1111 = vunpack.c.h.b16 %v889
      %v1112 = vunpack.c.l.b16 %v890
      %v1113 = vunpack.c.h.b16 %v890
      %v1114 = vunpack.c.l.b16 %v891
      %v1115 = vunpack.c.h.b16 %v891
      %v1116 = vunpack.c.l.b16 %v892
      %v1117 = vunpack.c.h.b16 %v892
      %v1118 = vunpack.c.l.b16 %v893
      %v1119 = vunpack.c.h.b16 %v893
      %v1120 = vunpack.c.l.b16 %v894
      %v1121 = vunpack.c.h.b16 %v894
      %v1122 = vunpack.c.l.b16 %v895
      %v1123 = vunpack.c.h.b16 %v895
      %v1124 = vunpack.c.l.b16 %v896
      %v1125 = vunpack.c.h.b16 %v896
      %v1126 = vunpack.c.l.b16 %v897
      %v1127 = vunpack.c.h.b16 %v897
      %v1128 = vunpack.c.l.b16 %v898
      %v1129 = vunpack.c.h.b16 %v898
      %v1130 = vunpack.c.l.b16 %v899
      %v1131 = vunpack.c.h.b16 %v899
      %v1132 = vunpack.c.l.b16 %v900
      %v1133 = vunpack.c.h.b16 %v900
      %v1134 = vunpack.c.l.b16 %v901
      %v1135 = vunpack.c.h.b16 %v901
      %v1136 = vunpack.c.l.b16 %v902
      %v1137 = vunpack.c.h.b16 %v902
      %v1138 = vunpack.c.l.b16 %v903
      %v1139 = vunpack.c.h.b16 %v903
      %v1140 = vunpack.c.l.b16 %v904
      %v1141 = vunpack.c.h.b16 %v904
      %v1142 = vunpack.c.l.b16 %v905
      %v1143 = vunpack.c.h.b16 %v905
      %v1144 = vunpack.c.l.b16 %v906
      %v1145 = vunpack.c.h.b16 %v906
      %v1146 = vunpack.c.l.b16 %v907
      %v1147 = vunpack.c.h.b16 %v907
      %v1148 = vpack.c.b16 %v1036, %v1020
      %v1149 = vpack.c.b16 %v1037, %v1021
      %v1150 = vpack.c.b16 %v1038, %v1022
      %v1151 = vpack.c.b16 %v1039, %v1023
      %v1152 = vpack.c.b16 %v1040, %v1024
      %v1153 = vpack.c.b16 %v1041, %v1025
      %v1154 = vpack.c.b16 %v1042, %v1026
      %v1155 = vpack.c.b16 %v1043, %v1027
      %v1156 = vpack.c.b16 %v1044, %v1028
      %v1157 = vpack.c.b16 %v1045, %v1029
      %v1158 = vpack.c.b16 %v1046, %v1030
      %v1159 = vpack.c.b16 %v1047, %v1031
      %v1160 = vpack.c.b16 %v1048, %v1032
      %v1161 = vpack.c.b16 %v1049, %v1033
      %v1162 = vpack.c.b16 %v1050, %v1034
      %v1163 = vpack.c.b16 %v1051, %v1035
      %v1164 = vpack.c.b16 %v1068, %v1052
      %v1165 = vpack.c.b16 %v1069, %v1053
      %v1166 = vpack.c.b16 %v1070, %v1054
      %v1167 = vpack.c.b16 %v1071, %v1055
      %v1168 = vpack.c.b16 %v1072, %v1056
      %v1169 = vpack.c.b16 %v1073, %v1057
      %v1170 = vpack.c.b16 %v1074, %v1058
      %v1171 = vpack.c.b16 %v1075, %v1059
      %v1172 = vpack.c.b16 %v1076, %v1060
      %v1173 = vpack.c.b16 %v1077, %v1061
      %v1174 = vpack.c.b16 %v1078, %v1062
      %v1175 = vpack.c.b16 %v1079, %v1063
      %v1176 = vpack.c.b16 %v1080, %v1064
      %v1177 = vpack.c.b16 %v1081, %v1065
      %v1178 = vpack.c.b16 %v1082, %v1066
      %v1179 = vpack.c.b16 %v1083, %v1067
      %v1180 = vpack.c.b16 %v1100, %v1084
      %v1181 = vpack.c.b16 %v1101, %v1085
      %v1182 = vpack.c.b16 %v1102, %v1086
      %v1183 = vpack.c.b16 %v1103, %v1087
      %v1184 = vpack.c.b16 %v1104, %v1088
      %v1185 = vpack.c.b16 %v1105, %v1089
      %v1186 = vpack.c.b16 %v1106, %v1090
      %v1187 = vpack.c.b16 %v1107, %v1091
      %v1188 = vpack.c.b16 %v1108, %v1092
      %v1189 = vpack.c.b16 %v1109, %v1093
      %v1190 = vpack.c.b16 %v1110, %v1094
      %v1191 = vpack.c.b16 %v1111, %v1095
      %v1192 = vpack.c.b16 %v1112, %v1096
      %v1193 = vpack.c.b16 %v1113, %v1097
      %v1194 = vpack.c.b16 %v1114, %v1098
      %v1195 = vpack.c.b16 %v1115, %v1099
      %v1196 = vpack.c.b16 %v1132, %v1116
      %v1197 = vpack.c.b16 %v1133, %v1117
      %v1198 = vpack.c.b16 %v1134, %v1118
      %v1199 = vpack.c.b16 %v1135, %v1119
      %v1200 = vpack.c.b16 %v1136, %v1120
      %v1201 = vpack.c.b16 %v1137, %v1121
      %v1202 = vpack.c.b16 %v1138, %v1122
      %v1203 = vpack.c.b16 %v1139, %v1123
      %v1204 = vpack.c.b16 %v1140, %v1124
      %v1205 = vpack.c.b16 %v1141, %v1125
      %v1206 = vpack.c.b16 %v1142, %v1126
      %v1207 = vpack.c.b16 %v1143, %v1127
      %v1208 = vpack.c.b16 %v1144, %v1128
      %v1209 = vpack.c.b16 %v1145, %v1129
      %v1210 = vpack.c.b16 %v1146, %v1130
      %v1211 = vpack.c.b16 %v1147, %v1131
      %1276 = vmatpush.bf16.msra.mxu0 %v723
      %1277 = vmatpush.bf16.msra.mxu0 %v722
      %1278 = vmatpush.bf16.msra.mxu0 %v721
      %1279 = vmatpush.bf16.msra.mxu0 %v720
      %1280 = vmatpush.bf16.msra.mxu0 %v719
      %1281 = vmatpush.bf16.msra.mxu0 %v718
      %1282 = vmatpush.bf16.msra.mxu0 %v717
      %1283 = vmatpush.bf16.msra.mxu0 %v716
      %1284 = vmatmul.bf16.gmra.mxu0 %v1148
      %v1285 = vpop.f32.mrf.mxu0
      %v1286 = vadd.f32 %v919, %v1285
      %v1287 = vpop.f32.mrf.mxu0
      %v1288 = vadd.f32 %v924, %v1287
      %1289 = vmatmul.bf16.gmra.mxu0 %v1164
      %v1290 = vpop.f32.mrf.mxu0
      %v1291 = vadd.f32 %v929, %v1290
      %v1292 = vpop.f32.mrf.mxu0
      %v1293 = vadd.f32 %v934, %v1292
      %1294 = vmatmul.bf16.gmra.mxu0 %v1180
      %v1295 = vpop.f32.mrf.mxu0
      %v1296 = vadd.f32 %v939, %v1295
      %v1297 = vpop.f32.mrf.mxu0
      %v1298 = vadd.f32 %v944, %v1297
      %1299 = vmatmul.bf16.gmra.mxu0 %v1196
      %v1300 = vpop.f32.mrf.mxu0
      %v1301 = vadd.f32 %v949, %v1300
      %v1302 = vpop.f32.mrf.mxu0
      %v1303 = vadd.f32 %v954, %v1302
      %1304 = vdwg.mxu0
      %1305 = vmatpush.bf16.msra.mxu0 %v731
      %1306 = vmatpush.bf16.msra.mxu0 %v730
      %1307 = vmatpush.bf16.msra.mxu0 %v729
      %1308 = vmatpush.bf16.msra.mxu0 %v728
      %1309 = vmatpush.bf16.msra.mxu0 %v727
      %1310 = vmatpush.bf16.msra.mxu0 %v726
      %1311 = vmatpush.bf16.msra.mxu0 %v725
      %1312 = vmatpush.bf16.msra.mxu0 %v724
      %1313 = vmatmul.bf16.gmra.mxu0 %v1149
      %v1314 = vpop.f32.mrf.mxu0
      %v1315 = vadd.f32 %v1286, %v1314
      %v1316 = vpop.f32.mrf.mxu0
      %v1317 = vadd.f32 %v1288, %v1316
      %1318 = vmatmul.bf16.gmra.mxu0 %v1165
      %v1319 = vpop.f32.mrf.mxu0
      %v1320 = vadd.f32 %v1291, %v1319
      %v1321 = vpop.f32.mrf.mxu0
      %v1322 = vadd.f32 %v1293, %v1321
      %1323 = vmatmul.bf16.gmra.mxu0 %v1181
      %v1324 = vpop.f32.mrf.mxu0
      %v1325 = vadd.f32 %v1296, %v1324
      %v1326 = vpop.f32.mrf.mxu0
      %v1327 = vadd.f32 %v1298, %v1326
      %1328 = vmatmul.bf16.gmra.mxu0 %v1197
      %v1329 = vpop.f32.mrf.mxu0
      %v1330 = vadd.f32 %v1301, %v1329
      %v1331 = vpop.f32.mrf.mxu0
      %v1332 = vadd.f32 %v1303, %v1331
      %1333 = vdwg.mxu0
      %1334 = vmatpush.bf16.msra.mxu0 %v739
      %1335 = vmatpush.bf16.msra.mxu0 %v738
      %1336 = vmatpush.bf16.msra.mxu0 %v737
      %1337 = vmatpush.bf16.msra.mxu0 %v736
      %1338 = vmatpush.bf16.msra.mxu0 %v735
      %1339 = vmatpush.bf16.msra.mxu0 %v734
      %1340 = vmatpush.bf16.msra.mxu0 %v733
      %1341 = vmatpush.bf16.msra.mxu0 %v732
      %1342 = vmatmul.bf16.gmra.mxu0 %v1150
      %v1343 = vpop.f32.mrf.mxu0
      %v1344 = vadd.f32 %v1315, %v1343
      %v1345 = vpop.f32.mrf.mxu0
      %v1346 = vadd.f32 %v1317, %v1345
      %1347 = vmatmul.bf16.gmra.mxu0 %v1166
      %v1348 = vpop.f32.mrf.mxu0
      %v1349 = vadd.f32 %v1320, %v1348
      %v1350 = vpop.f32.mrf.mxu0
      %v1351 = vadd.f32 %v1322, %v1350
      %1352 = vmatmul.bf16.gmra.mxu0 %v1182
      %v1353 = vpop.f32.mrf.mxu0
      %v1354 = vadd.f32 %v1325, %v1353
      %v1355 = vpop.f32.mrf.mxu0
      %v1356 = vadd.f32 %v1327, %v1355
      %1357 = vmatmul.bf16.gmra.mxu0 %v1198
      %v1358 = vpop.f32.mrf.mxu0
      %v1359 = vadd.f32 %v1330, %v1358
      %v1360 = vpop.f32.mrf.mxu0
      %v1361 = vadd.f32 %v1332, %v1360
      %1362 = vdwg.mxu0
      %1363 = vmatpush.bf16.msra.mxu0 %v747
      %1364 = vmatpush.bf16.msra.mxu0 %v746
      %1365 = vmatpush.bf16.msra.mxu0 %v745
      %1366 = vmatpush.bf16.msra.mxu0 %v744
      %1367 = vmatpush.bf16.msra.mxu0 %v743
      %1368 = vmatpush.bf16.msra.mxu0 %v742
      %1369 = vmatpush.bf16.msra.mxu0 %v741
      %1370 = vmatpush.bf16.msra.mxu0 %v740
      %1371 = vmatmul.bf16.gmra.mxu0 %v1151
      %v1372 = vpop.f32.mrf.mxu0
      %v1373 = vadd.f32 %v1344, %v1372
      %v1374 = vpop.f32.mrf.mxu0
      %v1375 = vadd.f32 %v1346, %v1374
      %1376 = vmatmul.bf16.gmra.mxu0 %v1167
      %v1377 = vpop.f32.mrf.mxu0
      %v1378 = vadd.f32 %v1349, %v1377
      %v1379 = vpop.f32.mrf.mxu0
      %v1380 = vadd.f32 %v1351, %v1379
      %1381 = vmatmul.bf16.gmra.mxu0 %v1183
      %v1382 = vpop.f32.mrf.mxu0
      %v1383 = vadd.f32 %v1354, %v1382
      %v1384 = vpop.f32.mrf.mxu0
      %v1385 = vadd.f32 %v1356, %v1384
      %1386 = vmatmul.bf16.gmra.mxu0 %v1199
      %v1387 = vpop.f32.mrf.mxu0
      %v1388 = vadd.f32 %v1359, %v1387
      %v1389 = vpop.f32.mrf.mxu0
      %v1390 = vadd.f32 %v1361, %v1389
      %1391 = vdwg.mxu0
      %1392 = vmatpush.bf16.msra.mxu0 %v755
      %1393 = vmatpush.bf16.msra.mxu0 %v754
      %1394 = vmatpush.bf16.msra.mxu0 %v753
      %1395 = vmatpush.bf16.msra.mxu0 %v752
      %1396 = vmatpush.bf16.msra.mxu0 %v751
      %1397 = vmatpush.bf16.msra.mxu0 %v750
      %1398 = vmatpush.bf16.msra.mxu0 %v749
      %1399 = vmatpush.bf16.msra.mxu0 %v748
      %1400 = vmatmul.bf16.gmra.mxu0 %v1152
      %v1401 = vpop.f32.mrf.mxu0
      %v1402 = vadd.f32 %v1373, %v1401
      %v1403 = vpop.f32.mrf.mxu0
      %v1404 = vadd.f32 %v1375, %v1403
      %1405 = vmatmul.bf16.gmra.mxu0 %v1168
      %v1406 = vpop.f32.mrf.mxu0
      %v1407 = vadd.f32 %v1378, %v1406
      %v1408 = vpop.f32.mrf.mxu0
      %v1409 = vadd.f32 %v1380, %v1408
      %1410 = vmatmul.bf16.gmra.mxu0 %v1184
      %v1411 = vpop.f32.mrf.mxu0
      %v1412 = vadd.f32 %v1383, %v1411
      %v1413 = vpop.f32.mrf.mxu0
      %v1414 = vadd.f32 %v1385, %v1413
      %1415 = vmatmul.bf16.gmra.mxu0 %v1200
      %v1416 = vpop.f32.mrf.mxu0
      %v1417 = vadd.f32 %v1388, %v1416
      %v1418 = vpop.f32.mrf.mxu0
      %v1419 = vadd.f32 %v1390, %v1418
      %1420 = vdwg.mxu0
      %1421 = vmatpush.bf16.msra.mxu0 %v763
      %1422 = vmatpush.bf16.msra.mxu0 %v762
      %1423 = vmatpush.bf16.msra.mxu0 %v761
      %1424 = vmatpush.bf16.msra.mxu0 %v760
      %1425 = vmatpush.bf16.msra.mxu0 %v759
      %1426 = vmatpush.bf16.msra.mxu0 %v758
      %1427 = vmatpush.bf16.msra.mxu0 %v757
      %1428 = vmatpush.bf16.msra.mxu0 %v756
      %1429 = vmatmul.bf16.gmra.mxu0 %v1153
      %v1430 = vpop.f32.mrf.mxu0
      %v1431 = vadd.f32 %v1402, %v1430
      %v1432 = vpop.f32.mrf.mxu0
      %v1433 = vadd.f32 %v1404, %v1432
      %1434 = vmatmul.bf16.gmra.mxu0 %v1169
      %v1435 = vpop.f32.mrf.mxu0
      %v1436 = vadd.f32 %v1407, %v1435
      %v1437 = vpop.f32.mrf.mxu0
      %v1438 = vadd.f32 %v1409, %v1437
      %1439 = vmatmul.bf16.gmra.mxu0 %v1185
      %v1440 = vpop.f32.mrf.mxu0
      %v1441 = vadd.f32 %v1412, %v1440
      %v1442 = vpop.f32.mrf.mxu0
      %v1443 = vadd.f32 %v1414, %v1442
      %1444 = vmatmul.bf16.gmra.mxu0 %v1201
      %v1445 = vpop.f32.mrf.mxu0
      %v1446 = vadd.f32 %v1417, %v1445
      %v1447 = vpop.f32.mrf.mxu0
      %v1448 = vadd.f32 %v1419, %v1447
      %1449 = vdwg.mxu0
      %1450 = vmatpush.bf16.msra.mxu0 %v771
      %1451 = vmatpush.bf16.msra.mxu0 %v770
      %1452 = vmatpush.bf16.msra.mxu0 %v769
      %1453 = vmatpush.bf16.msra.mxu0 %v768
      %1454 = vmatpush.bf16.msra.mxu0 %v767
      %1455 = vmatpush.bf16.msra.mxu0 %v766
      %1456 = vmatpush.bf16.msra.mxu0 %v765
      %1457 = vmatpush.bf16.msra.mxu0 %v764
      %1458 = vmatmul.bf16.gmra.mxu0 %v1154
      %v1459 = vpop.f32.mrf.mxu0
      %v1460 = vadd.f32 %v1431, %v1459
      %v1461 = vpop.f32.mrf.mxu0
      %v1462 = vadd.f32 %v1433, %v1461
      %1463 = vmatmul.bf16.gmra.mxu0 %v1170
      %v1464 = vpop.f32.mrf.mxu0
      %v1465 = vadd.f32 %v1436, %v1464
      %v1466 = vpop.f32.mrf.mxu0
      %v1467 = vadd.f32 %v1438, %v1466
      %1468 = vmatmul.bf16.gmra.mxu0 %v1186
      %v1469 = vpop.f32.mrf.mxu0
      %v1470 = vadd.f32 %v1441, %v1469
      %v1471 = vpop.f32.mrf.mxu0
      %v1472 = vadd.f32 %v1443, %v1471
      %1473 = vmatmul.bf16.gmra.mxu0 %v1202
      %v1474 = vpop.f32.mrf.mxu0
      %v1475 = vadd.f32 %v1446, %v1474
      %v1476 = vpop.f32.mrf.mxu0
      %v1477 = vadd.f32 %v1448, %v1476
      %1478 = vdwg.mxu0
      %1479 = vmatpush.bf16.msra.mxu0 %v779
      %1480 = vmatpush.bf16.msra.mxu0 %v778
      %1481 = vmatpush.bf16.msra.mxu0 %v777
      %1482 = vmatpush.bf16.msra.mxu0 %v776
      %1483 = vmatpush.bf16.msra.mxu0 %v775
      %1484 = vmatpush.bf16.msra.mxu0 %v774
      %1485 = vmatpush.bf16.msra.mxu0 %v773
      %1486 = vmatpush.bf16.msra.mxu0 %v772
      %1487 = vmatmul.bf16.gmra.mxu0 %v1155
      %v1488 = vpop.f32.mrf.mxu0
      %v1489 = vadd.f32 %v1460, %v1488
      %v1490 = vpop.f32.mrf.mxu0
      %v1491 = vadd.f32 %v1462, %v1490
      %1492 = vmatmul.bf16.gmra.mxu0 %v1171
      %v1493 = vpop.f32.mrf.mxu0
      %v1494 = vadd.f32 %v1465, %v1493
      %v1495 = vpop.f32.mrf.mxu0
      %v1496 = vadd.f32 %v1467, %v1495
      %1497 = vmatmul.bf16.gmra.mxu0 %v1187
      %v1498 = vpop.f32.mrf.mxu0
      %v1499 = vadd.f32 %v1470, %v1498
      %v1500 = vpop.f32.mrf.mxu0
      %v1501 = vadd.f32 %v1472, %v1500
      %1502 = vmatmul.bf16.gmra.mxu0 %v1203
      %v1503 = vpop.f32.mrf.mxu0
      %v1504 = vadd.f32 %v1475, %v1503
      %v1505 = vpop.f32.mrf.mxu0
      %v1506 = vadd.f32 %v1477, %v1505
      %1507 = vdwg.mxu0
      %1508 = vmatpush.bf16.msra.mxu0 %v787
      %1509 = vmatpush.bf16.msra.mxu0 %v786
      %1510 = vmatpush.bf16.msra.mxu0 %v785
      %1511 = vmatpush.bf16.msra.mxu0 %v784
      %1512 = vmatpush.bf16.msra.mxu0 %v783
      %1513 = vmatpush.bf16.msra.mxu0 %v782
      %1514 = vmatpush.bf16.msra.mxu0 %v781
      %1515 = vmatpush.bf16.msra.mxu0 %v780
      %1516 = vmatmul.bf16.gmra.mxu0 %v1156
      %v1517 = vpop.f32.mrf.mxu0
      %v1518 = vadd.f32 %v1489, %v1517
      %v1519 = vpop.f32.mrf.mxu0
      %v1520 = vadd.f32 %v1491, %v1519
      %1521 = vmatmul.bf16.gmra.mxu0 %v1172
      %v1522 = vpop.f32.mrf.mxu0
      %v1523 = vadd.f32 %v1494, %v1522
      %v1524 = vpop.f32.mrf.mxu0
      %v1525 = vadd.f32 %v1496, %v1524
      %1526 = vmatmul.bf16.gmra.mxu0 %v1188
      %v1527 = vpop.f32.mrf.mxu0
      %v1528 = vadd.f32 %v1499, %v1527
      %v1529 = vpop.f32.mrf.mxu0
      %v1530 = vadd.f32 %v1501, %v1529
      %1531 = vmatmul.bf16.gmra.mxu0 %v1204
      %v1532 = vpop.f32.mrf.mxu0
      %v1533 = vadd.f32 %v1504, %v1532
      %v1534 = vpop.f32.mrf.mxu0
      %v1535 = vadd.f32 %v1506, %v1534
      %1536 = vdwg.mxu0
      %1537 = vmatpush.bf16.msra.mxu0 %v795
      %1538 = vmatpush.bf16.msra.mxu0 %v794
      %1539 = vmatpush.bf16.msra.mxu0 %v793
      %1540 = vmatpush.bf16.msra.mxu0 %v792
      %1541 = vmatpush.bf16.msra.mxu0 %v791
      %1542 = vmatpush.bf16.msra.mxu0 %v790
      %1543 = vmatpush.bf16.msra.mxu0 %v789
      %1544 = vmatpush.bf16.msra.mxu0 %v788
      %1545 = vmatmul.bf16.gmra.mxu0 %v1157
      %v1546 = vpop.f32.mrf.mxu0
      %v1547 = vadd.f32 %v1518, %v1546
      %v1548 = vpop.f32.mrf.mxu0
      %v1549 = vadd.f32 %v1520, %v1548
      %1550 = vmatmul.bf16.gmra.mxu0 %v1173
      %v1551 = vpop.f32.mrf.mxu0
      %v1552 = vadd.f32 %v1523, %v1551
      %v1553 = vpop.f32.mrf.mxu0
      %v1554 = vadd.f32 %v1525, %v1553
      %1555 = vmatmul.bf16.gmra.mxu0 %v1189
      %v1556 = vpop.f32.mrf.mxu0
      %v1557 = vadd.f32 %v1528, %v1556
      %v1558 = vpop.f32.mrf.mxu0
      %v1559 = vadd.f32 %v1530, %v1558
      %1560 = vmatmul.bf16.gmra.mxu0 %v1205
      %v1561 = vpop.f32.mrf.mxu0
      %v1562 = vadd.f32 %v1533, %v1561
      %v1563 = vpop.f32.mrf.mxu0
      %v1564 = vadd.f32 %v1535, %v1563
      %1565 = vdwg.mxu0
      %1566 = vmatpush.bf16.msra.mxu0 %v803
      %1567 = vmatpush.bf16.msra.mxu0 %v802
      %1568 = vmatpush.bf16.msra.mxu0 %v801
      %1569 = vmatpush.bf16.msra.mxu0 %v800
      %1570 = vmatpush.bf16.msra.mxu0 %v799
      %1571 = vmatpush.bf16.msra.mxu0 %v798
      %1572 = vmatpush.bf16.msra.mxu0 %v797
      %1573 = vmatpush.bf16.msra.mxu0 %v796
      %1574 = vmatmul.bf16.gmra.mxu0 %v1158
      %v1575 = vpop.f32.mrf.mxu0
      %v1576 = vadd.f32 %v1547, %v1575
      %v1577 = vpop.f32.mrf.mxu0
      %v1578 = vadd.f32 %v1549, %v1577
      %1579 = vmatmul.bf16.gmra.mxu0 %v1174
      %v1580 = vpop.f32.mrf.mxu0
      %v1581 = vadd.f32 %v1552, %v1580
      %v1582 = vpop.f32.mrf.mxu0
      %v1583 = vadd.f32 %v1554, %v1582
      %1584 = vmatmul.bf16.gmra.mxu0 %v1190
      %v1585 = vpop.f32.mrf.mxu0
      %v1586 = vadd.f32 %v1557, %v1585
      %v1587 = vpop.f32.mrf.mxu0
      %v1588 = vadd.f32 %v1559, %v1587
      %1589 = vmatmul.bf16.gmra.mxu0 %v1206
      %v1590 = vpop.f32.mrf.mxu0
      %v1591 = vadd.f32 %v1562, %v1590
      %v1592 = vpop.f32.mrf.mxu0
      %v1593 = vadd.f32 %v1564, %v1592
      %1594 = vdwg.mxu0
      %1595 = vmatpush.bf16.msra.mxu0 %v811
      %1596 = vmatpush.bf16.msra.mxu0 %v810
      %1597 = vmatpush.bf16.msra.mxu0 %v809
      %1598 = vmatpush.bf16.msra.mxu0 %v808
      %1599 = vmatpush.bf16.msra.mxu0 %v807
      %1600 = vmatpush.bf16.msra.mxu0 %v806
      %1601 = vmatpush.bf16.msra.mxu0 %v805
      %1602 = vmatpush.bf16.msra.mxu0 %v804
      %1603 = vmatmul.bf16.gmra.mxu0 %v1159
      %v1604 = vpop.f32.mrf.mxu0
      %v1605 = vadd.f32 %v1576, %v1604
      %v1606 = vpop.f32.mrf.mxu0
      %v1607 = vadd.f32 %v1578, %v1606
      %1608 = vmatmul.bf16.gmra.mxu0 %v1175
      %v1609 = vpop.f32.mrf.mxu0
      %v1610 = vadd.f32 %v1581, %v1609
      %v1611 = vpop.f32.mrf.mxu0
      %v1612 = vadd.f32 %v1583, %v1611
      %1613 = vmatmul.bf16.gmra.mxu0 %v1191
      %v1614 = vpop.f32.mrf.mxu0
      %v1615 = vadd.f32 %v1586, %v1614
      %v1616 = vpop.f32.mrf.mxu0
      %v1617 = vadd.f32 %v1588, %v1616
      %1618 = vmatmul.bf16.gmra.mxu0 %v1207
      %v1619 = vpop.f32.mrf.mxu0
      %v1620 = vadd.f32 %v1591, %v1619
      %v1621 = vpop.f32.mrf.mxu0
      %v1622 = vadd.f32 %v1593, %v1621
      %1623 = vdwg.mxu0
      %1624 = vmatpush.bf16.msra.mxu0 %v819
      %1625 = vmatpush.bf16.msra.mxu0 %v818
      %1626 = vmatpush.bf16.msra.mxu0 %v817
      %1627 = vmatpush.bf16.msra.mxu0 %v816
      %1628 = vmatpush.bf16.msra.mxu0 %v815
      %1629 = vmatpush.bf16.msra.mxu0 %v814
      %1630 = vmatpush.bf16.msra.mxu0 %v813
      %1631 = vmatpush.bf16.msra.mxu0 %v812
      %1632 = vmatmul.bf16.gmra.mxu0 %v1160
      %v1633 = vpop.f32.mrf.mxu0
      %v1634 = vadd.f32 %v1605, %v1633
      %v1635 = vpop.f32.mrf.mxu0
      %v1636 = vadd.f32 %v1607, %v1635
      %1637 = vmatmul.bf16.gmra.mxu0 %v1176
      %v1638 = vpop.f32.mrf.mxu0
      %v1639 = vadd.f32 %v1610, %v1638
      %v1640 = vpop.f32.mrf.mxu0
      %v1641 = vadd.f32 %v1612, %v1640
      %1642 = vmatmul.bf16.gmra.mxu0 %v1192
      %v1643 = vpop.f32.mrf.mxu0
      %v1644 = vadd.f32 %v1615, %v1643
      %v1645 = vpop.f32.mrf.mxu0
      %v1646 = vadd.f32 %v1617, %v1645
      %1647 = vmatmul.bf16.gmra.mxu0 %v1208
      %v1648 = vpop.f32.mrf.mxu0
      %v1649 = vadd.f32 %v1620, %v1648
      %v1650 = vpop.f32.mrf.mxu0
      %v1651 = vadd.f32 %v1622, %v1650
      %1652 = vdwg.mxu0
      %1653 = vmatpush.bf16.msra.mxu0 %v827
      %1654 = vmatpush.bf16.msra.mxu0 %v826
      %1655 = vmatpush.bf16.msra.mxu0 %v825
      %1656 = vmatpush.bf16.msra.mxu0 %v824
      %1657 = vmatpush.bf16.msra.mxu0 %v823
      %1658 = vmatpush.bf16.msra.mxu0 %v822
      %1659 = vmatpush.bf16.msra.mxu0 %v821
      %1660 = vmatpush.bf16.msra.mxu0 %v820
      %1661 = vmatmul.bf16.gmra.mxu0 %v1161
      %v1662 = vpop.f32.mrf.mxu0
      %v1663 = vadd.f32 %v1634, %v1662
      %v1664 = vpop.f32.mrf.mxu0
      %v1665 = vadd.f32 %v1636, %v1664
      %1666 = vmatmul.bf16.gmra.mxu0 %v1177
      %v1667 = vpop.f32.mrf.mxu0
      %v1668 = vadd.f32 %v1639, %v1667
      %v1669 = vpop.f32.mrf.mxu0
      %v1670 = vadd.f32 %v1641, %v1669
      %1671 = vmatmul.bf16.gmra.mxu0 %v1193
      %v1672 = vpop.f32.mrf.mxu0
      %v1673 = vadd.f32 %v1644, %v1672
      %v1674 = vpop.f32.mrf.mxu0
      %v1675 = vadd.f32 %v1646, %v1674
      %1676 = vmatmul.bf16.gmra.mxu0 %v1209
      %v1677 = vpop.f32.mrf.mxu0
      %v1678 = vadd.f32 %v1649, %v1677
      %v1679 = vpop.f32.mrf.mxu0
      %v1680 = vadd.f32 %v1651, %v1679
      %1681 = vdwg.mxu0
      %1682 = vmatpush.bf16.msra.mxu0 %v835
      %1683 = vmatpush.bf16.msra.mxu0 %v834
      %1684 = vmatpush.bf16.msra.mxu0 %v833
      %1685 = vmatpush.bf16.msra.mxu0 %v832
      %1686 = vmatpush.bf16.msra.mxu0 %v831
      %1687 = vmatpush.bf16.msra.mxu0 %v830
      %1688 = vmatpush.bf16.msra.mxu0 %v829
      %1689 = vmatpush.bf16.msra.mxu0 %v828
      %1690 = vmatmul.bf16.gmra.mxu0 %v1162
      %v1691 = vpop.f32.mrf.mxu0
      %v1692 = vadd.f32 %v1663, %v1691
      %v1693 = vpop.f32.mrf.mxu0
      %v1694 = vadd.f32 %v1665, %v1693
      %1695 = vmatmul.bf16.gmra.mxu0 %v1178
      %v1696 = vpop.f32.mrf.mxu0
      %v1697 = vadd.f32 %v1668, %v1696
      %v1698 = vpop.f32.mrf.mxu0
      %v1699 = vadd.f32 %v1670, %v1698
      %1700 = vmatmul.bf16.gmra.mxu0 %v1194
      %v1701 = vpop.f32.mrf.mxu0
      %v1702 = vadd.f32 %v1673, %v1701
      %v1703 = vpop.f32.mrf.mxu0
      %v1704 = vadd.f32 %v1675, %v1703
      %1705 = vmatmul.bf16.gmra.mxu0 %v1210
      %v1706 = vpop.f32.mrf.mxu0
      %v1707 = vadd.f32 %v1678, %v1706
      %v1708 = vpop.f32.mrf.mxu0
      %v1709 = vadd.f32 %v1680, %v1708
      %1710 = vdwg.mxu0
      %1711 = vmatpush.bf16.msra.mxu0 %v843
      %1712 = vmatpush.bf16.msra.mxu0 %v842
      %1713 = vmatpush.bf16.msra.mxu0 %v841
      %1714 = vmatpush.bf16.msra.mxu0 %v840
      %1715 = vmatpush.bf16.msra.mxu0 %v839
      %1716 = vmatpush.bf16.msra.mxu0 %v838
      %1717 = vmatpush.bf16.msra.mxu0 %v837
      %1718 = vmatpush.bf16.msra.mxu0 %v836
      %1719 = vmatmul.bf16.gmra.mxu0 %v1163
      %v1720 = vpop.f32.mrf.mxu0
      %v1721 = vadd.f32 %v1692, %v1720
      %v1722 = vpop.f32.mrf.mxu0
      %v1723 = vadd.f32 %v1694, %v1722
      %1724 = vmatmul.bf16.gmra.mxu0 %v1179
      %v1725 = vpop.f32.mrf.mxu0
      %v1726 = vadd.f32 %v1697, %v1725
      %v1727 = vpop.f32.mrf.mxu0
      %v1728 = vadd.f32 %v1699, %v1727
      %1729 = vmatmul.bf16.gmra.mxu0 %v1195
      %v1730 = vpop.f32.mrf.mxu0
      %v1731 = vadd.f32 %v1702, %v1730
      %v1732 = vpop.f32.mrf.mxu0
      %v1733 = vadd.f32 %v1704, %v1732
      %1734 = vmatmul.bf16.gmra.mxu0 %v1211
      %v1735 = vpop.f32.mrf.mxu0
      %v1736 = vadd.f32 %v1707, %v1735
      %v1737 = vpop.f32.mrf.mxu0
      %v1738 = vadd.f32 %v1709, %v1737
      %1739 = vdwg.mxu0
      %v1740 = vmax.f32 %v1721, 0.0
      %v1741 = vmax.f32 %v1723, 0.0
      %v1742 = vmax.f32 %v1726, 0.0
      %v1743 = vmax.f32 %v1728, 0.0
      %v1744 = vmax.f32 %v1731, 0.0
      %v1745 = vmax.f32 %v1733, 0.0
      %v1746 = vmax.f32 %v1736, 0.0
      %v1747 = vmax.f32 %v1738, 0.0
      %v1748 = vpack.c.bf16 %v1741, %v1740
      %v1749 = vpack.c.bf16 %v1743, %v1742
      %v1750 = vpack.c.bf16 %v1745, %v1744
      %v1751 = vpack.c.bf16 %v1747, %v1746
      %v1752 = vld [vmem:[%s4] sm:$0xf]
      %v1753 = vld [vmem:[%s4 + $0x4] sm:$0xf]
      %v1754 = vld [vmem:[%s4 + $0x8] sm:$0xf]
      %v1755 = vld [vmem:[%s4 + $0xc] sm:$0xf]
      %v1756 = vld [vmem:[%s5] sm:$0xff]
      %v1757 = vld [vmem:[%s5 + $0x8] sm:$0xff]
      %v1758 = vld [vmem:[%s5 + $0x10] sm:$0xff]
      %v1759 = vld [vmem:[%s5 + $0x18] sm:$0xff]
      %1761 = vset.pattern.permute.xlu0 0
      %1762 = vperm.xlu0 %1761, %v1756
      %v1763 = vpop.permute.xlu0 %1762
      %1766 = vset.pattern.permute.xlu0 0
      %1767 = vperm.xlu0 %1766, %v1757
      %v1768 = vpop.permute.xlu0 %1767
      %1771 = vset.pattern.permute.xlu0 0
      %1772 = vperm.xlu0 %1771, %v1758
      %v1773 = vpop.permute.xlu0 %1772
      %1776 = vset.pattern.permute.xlu0 0
      %1777 = vperm.xlu0 %1776, %v1759
      %v1778 = vpop.permute.xlu0 %1777
      %v1784 = vunpack.c.l.b16 %v1752
      %v1785 = vunpack.c.l.b16 %v1753
      %v1786 = vunpack.c.l.b16 %v1754
      %v1787 = vunpack.c.l.b16 %v1755
      %v1788 = vpack.c.b16 %v1785, %v1784
      %v1789 = vpack.c.b16 %v1787, %v1786
      %vm1790 = vcmask 523264
      %v1792 = vsel %vm1790, %v1788, 0
      %v1795 = vsel %vm1790, %v1789, 0
      %1797 = vmatpush.bf16.msra.mxu0 0
      %1798 = vmatpush.bf16.msra.mxu0 0
      %1799 = vmatpush.bf16.msra.mxu0 0
      %1800 = vmatpush.bf16.msra.mxu0 0
      %1801 = vmatpush.bf16.msra.mxu0 %v1751
      %1802 = vmatpush.bf16.msra.mxu0 %v1750
      %1803 = vmatpush.bf16.msra.mxu0 %v1749
      %1804 = vmatpush.bf16.msra.mxu0 %v1748
      %1805 = vmatmul.bf16.gmra.mxu0 %v1792
      %v1806 = vpop.f32.mrf.mxu0
      %v1807 = vadd.f32 %v1763, %v1806
      %v1808 = vpop.f32.mrf.mxu0
      %v1809 = vadd.f32 %v1768, %v1808
      %1810 = vmatmul.bf16.gmra.mxu0 %v1795
      %v1811 = vpop.f32.mrf.mxu0
      %v1812 = vadd.f32 %v1773, %v1811
      %v1813 = vpop.f32.mrf.mxu0
      %v1814 = vadd.f32 %v1778, %v1813
      %1815 = vdwg.mxu0
      %v1816 = vpack.c.bf16 %v1807, %v1807
      %v1817 = vpack.c.bf16 %v1809, %v1809
      %v1818 = vpack.c.bf16 %v1812, %v1812
      %v1819 = vpack.c.bf16 %v1814, %v1814
      %v1820 = vld [vmem:[%s455] sm:$0xff]
      %v1821 = vld [vmem:[%s455 + $0x8] sm:$0xff]
      %v1822 = vld [vmem:[%s455 + $0x10] sm:$0xff]
      %v1823 = vld [vmem:[%s455 + $0x18] sm:$0xff]
      %v1824 = vpack.c.bf16 %v1821, %v1820
      %v1825 = vpack.c.bf16 %v1823, %v1822
      %v1826 = vld [vmem:[%s6] sm:$0xf]
      %v1827 = vld [vmem:[%s6 + $0x4] sm:$0xf]
      %v1828 = vld [vmem:[%s6 + $0x8] sm:$0xf]
      %v1829 = vld [vmem:[%s6 + $0xc] sm:$0xf]
      %v1830 = vld [vmem:[%s6 + $0x10] sm:$0xf]
      %v1831 = vld [vmem:[%s6 + $0x14] sm:$0xf]
      %v1832 = vld [vmem:[%s6 + $0x18] sm:$0xf]
      %v1833 = vld [vmem:[%s6 + $0x1c] sm:$0xf]
      %v1834 = vld [vmem:[%s6 + $0x20] sm:$0xf]
      %v1835 = vld [vmem:[%s6 + $0x24] sm:$0xf]
      %v1836 = vld [vmem:[%s6 + $0x28] sm:$0xf]
      %v1837 = vld [vmem:[%s6 + $0x2c] sm:$0xf]
      %v1838 = vld [vmem:[%s6 + $0x30] sm:$0xf]
      %v1839 = vld [vmem:[%s6 + $0x34] sm:$0xf]
      %v1840 = vld [vmem:[%s6 + $0x38] sm:$0xf]
      %v1841 = vld [vmem:[%s6 + $0x3c] sm:$0xf]
      %v1842 = vld [vmem:[%s6 + $0x40] sm:$0xf]
      %v1843 = vld [vmem:[%s6 + $0x44] sm:$0xf]
      %v1844 = vld [vmem:[%s6 + $0x48] sm:$0xf]
      %v1845 = vld [vmem:[%s6 + $0x4c] sm:$0xf]
      %v1846 = vld [vmem:[%s6 + $0x50] sm:$0xf]
      %v1847 = vld [vmem:[%s6 + $0x54] sm:$0xf]
      %v1848 = vld [vmem:[%s6 + $0x58] sm:$0xf]
      %v1849 = vld [vmem:[%s6 + $0x5c] sm:$0xf]
      %v1850 = vld [vmem:[%s6 + $0x60] sm:$0xf]
      %v1851 = vld [vmem:[%s6 + $0x64] sm:$0xf]
      %v1852 = vld [vmem:[%s6 + $0x68] sm:$0xf]
      %v1853 = vld [vmem:[%s6 + $0x6c] sm:$0xf]
      %v1854 = vld [vmem:[%s6 + $0x70] sm:$0xf]
      %v1855 = vld [vmem:[%s6 + $0x74] sm:$0xf]
      %v1856 = vld [vmem:[%s6 + $0x78] sm:$0xf]
      %v1857 = vld [vmem:[%s6 + $0x7c] sm:$0xf]
      %v1858 = vld [vmem:[%s6 + $0x80] sm:$0xf]
      %v1859 = vld [vmem:[%s6 + $0x84] sm:$0xf]
      %v1860 = vld [vmem:[%s6 + $0x88] sm:$0xf]
      %v1861 = vld [vmem:[%s6 + $0x8c] sm:$0xf]
      %v1862 = vld [vmem:[%s6 + $0x90] sm:$0xf]
      %v1863 = vld [vmem:[%s6 + $0x94] sm:$0xf]
      %v1864 = vld [vmem:[%s6 + $0x98] sm:$0xf]
      %v1865 = vld [vmem:[%s6 + $0x9c] sm:$0xf]
      %v1866 = vld [vmem:[%s6 + $0xa0] sm:$0xf]
      %v1867 = vld [vmem:[%s6 + $0xa4] sm:$0xf]
      %v1868 = vld [vmem:[%s6 + $0xa8] sm:$0xf]
      %v1869 = vld [vmem:[%s6 + $0xac] sm:$0xf]
      %v1870 = vld [vmem:[%s6 + $0xb0] sm:$0xf]
      %v1871 = vld [vmem:[%s6 + $0xb4] sm:$0xf]
      %v1872 = vld [vmem:[%s6 + $0xb8] sm:$0xf]
      %v1873 = vld [vmem:[%s6 + $0xbc] sm:$0xf]
      %v1874 = vld [vmem:[%s6 + $0xc0] sm:$0xf]
      %v1875 = vld [vmem:[%s6 + $0xc4] sm:$0xf]
      %v1876 = vld [vmem:[%s6 + $0xc8] sm:$0xf]
      %v1877 = vld [vmem:[%s6 + $0xcc] sm:$0xf]
      %v1878 = vld [vmem:[%s6 + $0xd0] sm:$0xf]
      %v1879 = vld [vmem:[%s6 + $0xd4] sm:$0xf]
      %v1880 = vld [vmem:[%s6 + $0xd8] sm:$0xf]
      %v1881 = vld [vmem:[%s6 + $0xdc] sm:$0xf]
      %v1882 = vld [vmem:[%s6 + $0xe0] sm:$0xf]
      %v1883 = vld [vmem:[%s6 + $0xe4] sm:$0xf]
      %v1884 = vld [vmem:[%s6 + $0xe8] sm:$0xf]
      %v1885 = vld [vmem:[%s6 + $0xec] sm:$0xf]
      %v1886 = vld [vmem:[%s6 + $0xf0] sm:$0xf]
      %v1887 = vld [vmem:[%s6 + $0xf4] sm:$0xf]
      %v1888 = vld [vmem:[%s6 + $0xf8] sm:$0xf]
      %v1889 = vld [vmem:[%s6 + $0xfc] sm:$0xf]
      %v1890 = vld [vmem:[%s7] sm:$0xf]
      %v1891 = vld [vmem:[%s7 + $0x4] sm:$0xf]
      %v1892 = vld [vmem:[%s7 + $0x8] sm:$0xf]
      %v1893 = vld [vmem:[%s7 + $0xc] sm:$0xf]
      %v1894 = vld [vmem:[%s7 + $0x10] sm:$0xf]
      %v1895 = vld [vmem:[%s7 + $0x14] sm:$0xf]
      %v1896 = vld [vmem:[%s7 + $0x18] sm:$0xf]
      %v1897 = vld [vmem:[%s7 + $0x1c] sm:$0xf]
      %v1898 = vld [vmem:[%s7 + $0x20] sm:$0xf]
      %v1899 = vld [vmem:[%s7 + $0x24] sm:$0xf]
      %v1900 = vld [vmem:[%s7 + $0x28] sm:$0xf]
      %v1901 = vld [vmem:[%s7 + $0x2c] sm:$0xf]
      %v1902 = vld [vmem:[%s7 + $0x30] sm:$0xf]
      %v1903 = vld [vmem:[%s7 + $0x34] sm:$0xf]
      %v1904 = vld [vmem:[%s7 + $0x38] sm:$0xf]
      %v1905 = vld [vmem:[%s7 + $0x3c] sm:$0xf]
      %v1906 = vld [vmem:[%s7 + $0x40] sm:$0xf]
      %v1907 = vld [vmem:[%s7 + $0x44] sm:$0xf]
      %v1908 = vld [vmem:[%s7 + $0x48] sm:$0xf]
      %v1909 = vld [vmem:[%s7 + $0x4c] sm:$0xf]
      %v1910 = vld [vmem:[%s7 + $0x50] sm:$0xf]
      %v1911 = vld [vmem:[%s7 + $0x54] sm:$0xf]
      %v1912 = vld [vmem:[%s7 + $0x58] sm:$0xf]
      %v1913 = vld [vmem:[%s7 + $0x5c] sm:$0xf]
      %v1914 = vld [vmem:[%s7 + $0x60] sm:$0xf]
      %v1915 = vld [vmem:[%s7 + $0x64] sm:$0xf]
      %v1916 = vld [vmem:[%s7 + $0x68] sm:$0xf]
      %v1917 = vld [vmem:[%s7 + $0x6c] sm:$0xf]
      %v1918 = vld [vmem:[%s7 + $0x70] sm:$0xf]
      %v1919 = vld [vmem:[%s7 + $0x74] sm:$0xf]
      %v1920 = vld [vmem:[%s7 + $0x78] sm:$0xf]
      %v1921 = vld [vmem:[%s7 + $0x7c] sm:$0xf]
      %v1922 = vld [vmem:[%s7 + $0x80] sm:$0xf]
      %v1923 = vld [vmem:[%s7 + $0x84] sm:$0xf]
      %v1924 = vld [vmem:[%s7 + $0x88] sm:$0xf]
      %v1925 = vld [vmem:[%s7 + $0x8c] sm:$0xf]
      %v1926 = vld [vmem:[%s7 + $0x90] sm:$0xf]
      %v1927 = vld [vmem:[%s7 + $0x94] sm:$0xf]
      %v1928 = vld [vmem:[%s7 + $0x98] sm:$0xf]
      %v1929 = vld [vmem:[%s7 + $0x9c] sm:$0xf]
      %v1930 = vld [vmem:[%s7 + $0xa0] sm:$0xf]
      %v1931 = vld [vmem:[%s7 + $0xa4] sm:$0xf]
      %v1932 = vld [vmem:[%s7 + $0xa8] sm:$0xf]
      %v1933 = vld [vmem:[%s7 + $0xac] sm:$0xf]
      %v1934 = vld [vmem:[%s7 + $0xb0] sm:$0xf]
      %v1935 = vld [vmem:[%s7 + $0xb4] sm:$0xf]
      %v1936 = vld [vmem:[%s7 + $0xb8] sm:$0xf]
      %v1937 = vld [vmem:[%s7 + $0xbc] sm:$0xf]
      %v1938 = vld [vmem:[%s7 + $0xc0] sm:$0xf]
      %v1939 = vld [vmem:[%s7 + $0xc4] sm:$0xf]
      %v1940 = vld [vmem:[%s7 + $0xc8] sm:$0xf]
      %v1941 = vld [vmem:[%s7 + $0xcc] sm:$0xf]
      %v1942 = vld [vmem:[%s7 + $0xd0] sm:$0xf]
      %v1943 = vld [vmem:[%s7 + $0xd4] sm:$0xf]
      %v1944 = vld [vmem:[%s7 + $0xd8] sm:$0xf]
      %v1945 = vld [vmem:[%s7 + $0xdc] sm:$0xf]
      %v1946 = vld [vmem:[%s7 + $0xe0] sm:$0xf]
      %v1947 = vld [vmem:[%s7 + $0xe4] sm:$0xf]
      %v1948 = vld [vmem:[%s7 + $0xe8] sm:$0xf]
      %v1949 = vld [vmem:[%s7 + $0xec] sm:$0xf]
      %v1950 = vld [vmem:[%s7 + $0xf0] sm:$0xf]
      %v1951 = vld [vmem:[%s7 + $0xf4] sm:$0xf]
      %v1952 = vld [vmem:[%s7 + $0xf8] sm:$0xf]
      %v1953 = vld [vmem:[%s7 + $0xfc] sm:$0xf]
      %v2018 = vunpack.c.l.b16 %v1890
      %v2019 = vunpack.c.l.b16 %v1891
      %v2020 = vunpack.c.l.b16 %v1892
      %v2021 = vunpack.c.l.b16 %v1893
      %v2022 = vunpack.c.l.b16 %v1894
      %v2023 = vunpack.c.l.b16 %v1895
      %v2024 = vunpack.c.l.b16 %v1896
      %v2025 = vunpack.c.l.b16 %v1897
      %v2026 = vunpack.c.l.b16 %v1898
      %v2027 = vunpack.c.l.b16 %v1899
      %v2028 = vunpack.c.l.b16 %v1900
      %v2029 = vunpack.c.l.b16 %v1901
      %v2030 = vunpack.c.l.b16 %v1902
      %v2031 = vunpack.c.l.b16 %v1903
      %v2032 = vunpack.c.l.b16 %v1904
      %v2033 = vunpack.c.l.b16 %v1905
      %v2034 = vunpack.c.l.b16 %v1906
      %v2035 = vunpack.c.l.b16 %v1907
      %v2036 = vunpack.c.l.b16 %v1908
      %v2037 = vunpack.c.l.b16 %v1909
      %v2038 = vunpack.c.l.b16 %v1910
      %v2039 = vunpack.c.l.b16 %v1911
      %v2040 = vunpack.c.l.b16 %v1912
      %v2041 = vunpack.c.l.b16 %v1913
      %v2042 = vunpack.c.l.b16 %v1914
      %v2043 = vunpack.c.l.b16 %v1915
      %v2044 = vunpack.c.l.b16 %v1916
      %v2045 = vunpack.c.l.b16 %v1917
      %v2046 = vunpack.c.l.b16 %v1918
      %v2047 = vunpack.c.l.b16 %v1919
      %v2048 = vunpack.c.l.b16 %v1920
      %v2049 = vunpack.c.l.b16 %v1921
      %v2050 = vunpack.c.l.b16 %v1922
      %v2051 = vunpack.c.l.b16 %v1923
      %v2052 = vunpack.c.l.b16 %v1924
      %v2053 = vunpack.c.l.b16 %v1925
      %v2054 = vunpack.c.l.b16 %v1926
      %v2055 = vunpack.c.l.b16 %v1927
      %v2056 = vunpack.c.l.b16 %v1928
      %v2057 = vunpack.c.l.b16 %v1929
      %v2058 = vunpack.c.l.b16 %v1930
      %v2059 = vunpack.c.l.b16 %v1931
      %v2060 = vunpack.c.l.b16 %v1932
      %v2061 = vunpack.c.l.b16 %v1933
      %v2062 = vunpack.c.l.b16 %v1934
      %v2063 = vunpack.c.l.b16 %v1935
      %v2064 = vunpack.c.l.b16 %v1936
      %v2065 = vunpack.c.l.b16 %v1937
      %v2066 = vunpack.c.l.b16 %v1938
      %v2067 = vunpack.c.l.b16 %v1939
      %v2068 = vunpack.c.l.b16 %v1940
      %v2069 = vunpack.c.l.b16 %v1941
      %v2070 = vunpack.c.l.b16 %v1942
      %v2071 = vunpack.c.l.b16 %v1943
      %v2072 = vunpack.c.l.b16 %v1944
      %v2073 = vunpack.c.l.b16 %v1945
      %v2074 = vunpack.c.l.b16 %v1946
      %v2075 = vunpack.c.l.b16 %v1947
      %v2076 = vunpack.c.l.b16 %v1948
      %v2077 = vunpack.c.l.b16 %v1949
      %v2078 = vunpack.c.l.b16 %v1950
      %v2079 = vunpack.c.l.b16 %v1951
      %v2080 = vunpack.c.l.b16 %v1952
      %v2081 = vunpack.c.l.b16 %v1953
      %v2082 = vpack.c.b16 %v2019, %v2018
      %v2083 = vpack.c.b16 %v2021, %v2020
      %v2084 = vpack.c.b16 %v2023, %v2022
      %v2085 = vpack.c.b16 %v2025, %v2024
      %v2086 = vpack.c.b16 %v2027, %v2026
      %v2087 = vpack.c.b16 %v2029, %v2028
      %v2088 = vpack.c.b16 %v2031, %v2030
      %v2089 = vpack.c.b16 %v2033, %v2032
      %v2090 = vpack.c.b16 %v2035, %v2034
      %v2091 = vpack.c.b16 %v2037, %v2036
      %v2092 = vpack.c.b16 %v2039, %v2038
      %v2093 = vpack.c.b16 %v2041, %v2040
      %v2094 = vpack.c.b16 %v2043, %v2042
      %v2095 = vpack.c.b16 %v2045, %v2044
      %v2096 = vpack.c.b16 %v2047, %v2046
      %v2097 = vpack.c.b16 %v2049, %v2048
      %v2098 = vpack.c.b16 %v2051, %v2050
      %v2099 = vpack.c.b16 %v2053, %v2052
      %v2100 = vpack.c.b16 %v2055, %v2054
      %v2101 = vpack.c.b16 %v2057, %v2056
      %v2102 = vpack.c.b16 %v2059, %v2058
      %v2103 = vpack.c.b16 %v2061, %v2060
      %v2104 = vpack.c.b16 %v2063, %v2062
      %v2105 = vpack.c.b16 %v2065, %v2064
      %v2106 = vpack.c.b16 %v2067, %v2066
      %v2107 = vpack.c.b16 %v2069, %v2068
      %v2108 = vpack.c.b16 %v2071, %v2070
      %v2109 = vpack.c.b16 %v2073, %v2072
      %v2110 = vpack.c.b16 %v2075, %v2074
      %v2111 = vpack.c.b16 %v2077, %v2076
      %v2112 = vpack.c.b16 %v2079, %v2078
      %v2113 = vpack.c.b16 %v2081, %v2080
      %v2118 = vunpack.c.l.b16 %v1816
      %v2119 = vunpack.c.l.b16 %v1817
      %v2120 = vunpack.c.l.b16 %v1818
      %v2121 = vunpack.c.l.b16 %v1819
      %v2122 = vpack.c.b16 %v2119, %v2118
      %v2123 = vpack.c.b16 %v2121, %v2120
      %vm2126 = vcmask 261120
      %v2128 = vsel %vm2126, %v2082, 0
      %v2131 = vsel %vm2126, %v2083, 0
      %v2134 = vsel %vm2126, %v2084, 0
      %v2137 = vsel %vm2126, %v2085, 0
      %v2140 = vsel %vm2126, %v2086, 0
      %v2143 = vsel %vm2126, %v2087, 0
      %v2146 = vsel %vm2126, %v2088, 0
      %v2149 = vsel %vm2126, %v2089, 0
      %v2152 = vsel %vm2126, %v2090, 0
      %v2155 = vsel %vm2126, %v2091, 0
      %v2158 = vsel %vm2126, %v2092, 0
      %v2161 = vsel %vm2126, %v2093, 0
      %v2164 = vsel %vm2126, %v2094, 0
      %v2167 = vsel %vm2126, %v2095, 0
      %v2170 = vsel %vm2126, %v2096, 0
      %v2173 = vsel %vm2126, %v2097, 0
      %v2176 = vsel %vm2126, %v2098, 0
      %v2179 = vsel %vm2126, %v2099, 0
      %v2182 = vsel %vm2126, %v2100, 0
      %v2185 = vsel %vm2126, %v2101, 0
      %v2188 = vsel %vm2126, %v2102, 0
      %v2191 = vsel %vm2126, %v2103, 0
      %v2194 = vsel %vm2126, %v2104, 0
      %v2197 = vsel %vm2126, %v2105, 0
      %v2200 = vsel %vm2126, %v2106, 0
      %v2203 = vsel %vm2126, %v2107, 0
      %v2206 = vsel %vm2126, %v2108, 0
      %v2209 = vsel %vm2126, %v2109, 0
      %v2212 = vsel %vm2126, %v2110, 0
      %v2215 = vsel %vm2126, %v2111, 0
      %v2218 = vsel %vm2126, %v2112, 0
      %v2221 = vsel %vm2126, %v2113, 0
      %2223 = vmatpush.bf16.msra.mxu0 0
      %2224 = vmatpush.bf16.msra.mxu0 0
      %2225 = vmatpush.bf16.msra.mxu0 0
      %2226 = vmatpush.bf16.msra.mxu0 0
      %2227 = vmatpush.bf16.msra.mxu0 0
      %2228 = vmatpush.bf16.msra.mxu0 0
      %2229 = vmatpush.bf16.msra.mxu0 %v2123
      %2230 = vmatpush.bf16.msra.mxu0 %v2122
      %2231 = vmatmul.bf16.gmra.mxu0 %v2128
      %v2232 = vpop.f32.mrf.mxu0
      %v2233 = vadd.f32 0.0, %v2232
      %v2234 = vpop.f32.mrf.mxu0
      %v2235 = vadd.f32 0.0, %v2234
      %2236 = vmatmul.bf16.gmra.mxu0 %v2131
      %v2237 = vpop.f32.mrf.mxu0
      %v2238 = vadd.f32 0.0, %v2237
      %v2239 = vpop.f32.mrf.mxu0
      %v2240 = vadd.f32 0.0, %v2239
      %2241 = vmatmul.bf16.gmra.mxu0 %v2134
      %v2242 = vpop.f32.mrf.mxu0
      %v2243 = vadd.f32 0.0, %v2242
      %v2244 = vpop.f32.mrf.mxu0
      %v2245 = vadd.f32 0.0, %v2244
      %2246 = vmatmul.bf16.gmra.mxu0 %v2137
      %v2247 = vpop.f32.mrf.mxu0
      %v2248 = vadd.f32 0.0, %v2247
      %v2249 = vpop.f32.mrf.mxu0
      %v2250 = vadd.f32 0.0, %v2249
      %2251 = vmatmul.bf16.gmra.mxu0 %v2140
      %v2252 = vpop.f32.mrf.mxu0
      %v2253 = vadd.f32 0.0, %v2252
      %v2254 = vpop.f32.mrf.mxu0
      %v2255 = vadd.f32 0.0, %v2254
      %2256 = vmatmul.bf16.gmra.mxu0 %v2143
      %v2257 = vpop.f32.mrf.mxu0
      %v2258 = vadd.f32 0.0, %v2257
      %v2259 = vpop.f32.mrf.mxu0
      %v2260 = vadd.f32 0.0, %v2259
      %2261 = vmatmul.bf16.gmra.mxu0 %v2146
      %v2262 = vpop.f32.mrf.mxu0
      %v2263 = vadd.f32 0.0, %v2262
      %v2264 = vpop.f32.mrf.mxu0
      %v2265 = vadd.f32 0.0, %v2264
      %2266 = vmatmul.bf16.gmra.mxu0 %v2149
      %v2267 = vpop.f32.mrf.mxu0
      %v2268 = vadd.f32 0.0, %v2267
      %v2269 = vpop.f32.mrf.mxu0
      %v2270 = vadd.f32 0.0, %v2269
      %2271 = vmatmul.bf16.gmra.mxu0 %v2152
      %v2272 = vpop.f32.mrf.mxu0
      %v2273 = vadd.f32 0.0, %v2272
      %v2274 = vpop.f32.mrf.mxu0
      %v2275 = vadd.f32 0.0, %v2274
      %2276 = vmatmul.bf16.gmra.mxu0 %v2155
      %v2277 = vpop.f32.mrf.mxu0
      %v2278 = vadd.f32 0.0, %v2277
      %v2279 = vpop.f32.mrf.mxu0
      %v2280 = vadd.f32 0.0, %v2279
      %2281 = vmatmul.bf16.gmra.mxu0 %v2158
      %v2282 = vpop.f32.mrf.mxu0
      %v2283 = vadd.f32 0.0, %v2282
      %v2284 = vpop.f32.mrf.mxu0
      %v2285 = vadd.f32 0.0, %v2284
      %2286 = vmatmul.bf16.gmra.mxu0 %v2161
      %v2287 = vpop.f32.mrf.mxu0
      %v2288 = vadd.f32 0.0, %v2287
      %v2289 = vpop.f32.mrf.mxu0
      %v2290 = vadd.f32 0.0, %v2289
      %2291 = vmatmul.bf16.gmra.mxu0 %v2164
      %v2292 = vpop.f32.mrf.mxu0
      %v2293 = vadd.f32 0.0, %v2292
      %v2294 = vpop.f32.mrf.mxu0
      %v2295 = vadd.f32 0.0, %v2294
      %2296 = vmatmul.bf16.gmra.mxu0 %v2167
      %v2297 = vpop.f32.mrf.mxu0
      %v2298 = vadd.f32 0.0, %v2297
      %v2299 = vpop.f32.mrf.mxu0
      %v2300 = vadd.f32 0.0, %v2299
      %2301 = vmatmul.bf16.gmra.mxu0 %v2170
      %v2302 = vpop.f32.mrf.mxu0
      %v2303 = vadd.f32 0.0, %v2302
      %v2304 = vpop.f32.mrf.mxu0
      %v2305 = vadd.f32 0.0, %v2304
      %2306 = vmatmul.bf16.gmra.mxu0 %v2173
      %v2307 = vpop.f32.mrf.mxu0
      %v2308 = vadd.f32 0.0, %v2307
      %v2309 = vpop.f32.mrf.mxu0
      %v2310 = vadd.f32 0.0, %v2309
      %2311 = vmatmul.bf16.gmra.mxu0 %v2176
      %v2312 = vpop.f32.mrf.mxu0
      %v2313 = vadd.f32 0.0, %v2312
      %v2314 = vpop.f32.mrf.mxu0
      %v2315 = vadd.f32 0.0, %v2314
      %2316 = vmatmul.bf16.gmra.mxu0 %v2179
      %v2317 = vpop.f32.mrf.mxu0
      %v2318 = vadd.f32 0.0, %v2317
      %v2319 = vpop.f32.mrf.mxu0
      %v2320 = vadd.f32 0.0, %v2319
      %2321 = vmatmul.bf16.gmra.mxu0 %v2182
      %v2322 = vpop.f32.mrf.mxu0
      %v2323 = vadd.f32 0.0, %v2322
      %v2324 = vpop.f32.mrf.mxu0
      %v2325 = vadd.f32 0.0, %v2324
      %2326 = vmatmul.bf16.gmra.mxu0 %v2185
      %v2327 = vpop.f32.mrf.mxu0
      %v2328 = vadd.f32 0.0, %v2327
      %v2329 = vpop.f32.mrf.mxu0
      %v2330 = vadd.f32 0.0, %v2329
      %2331 = vmatmul.bf16.gmra.mxu0 %v2188
      %v2332 = vpop.f32.mrf.mxu0
      %v2333 = vadd.f32 0.0, %v2332
      %v2334 = vpop.f32.mrf.mxu0
      %v2335 = vadd.f32 0.0, %v2334
      %2336 = vmatmul.bf16.gmra.mxu0 %v2191
      %v2337 = vpop.f32.mrf.mxu0
      %v2338 = vadd.f32 0.0, %v2337
      %v2339 = vpop.f32.mrf.mxu0
      %v2340 = vadd.f32 0.0, %v2339
      %2341 = vmatmul.bf16.gmra.mxu0 %v2194
      %v2342 = vpop.f32.mrf.mxu0
      %v2343 = vadd.f32 0.0, %v2342
      %v2344 = vpop.f32.mrf.mxu0
      %v2345 = vadd.f32 0.0, %v2344
      %2346 = vmatmul.bf16.gmra.mxu0 %v2197
      %v2347 = vpop.f32.mrf.mxu0
      %v2348 = vadd.f32 0.0, %v2347
      %v2349 = vpop.f32.mrf.mxu0
      %v2350 = vadd.f32 0.0, %v2349
      %2351 = vmatmul.bf16.gmra.mxu0 %v2200
      %v2352 = vpop.f32.mrf.mxu0
      %v2353 = vadd.f32 0.0, %v2352
      %v2354 = vpop.f32.mrf.mxu0
      %v2355 = vadd.f32 0.0, %v2354
      %2356 = vmatmul.bf16.gmra.mxu0 %v2203
      %v2357 = vpop.f32.mrf.mxu0
      %v2358 = vadd.f32 0.0, %v2357
      %v2359 = vpop.f32.mrf.mxu0
      %v2360 = vadd.f32 0.0, %v2359
      %2361 = vmatmul.bf16.gmra.mxu0 %v2206
      %v2362 = vpop.f32.mrf.mxu0
      %v2363 = vadd.f32 0.0, %v2362
      %v2364 = vpop.f32.mrf.mxu0
      %v2365 = vadd.f32 0.0, %v2364
      %2366 = vmatmul.bf16.gmra.mxu0 %v2209
      %v2367 = vpop.f32.mrf.mxu0
      %v2368 = vadd.f32 0.0, %v2367
      %v2369 = vpop.f32.mrf.mxu0
      %v2370 = vadd.f32 0.0, %v2369
      %2371 = vmatmul.bf16.gmra.mxu0 %v2212
      %v2372 = vpop.f32.mrf.mxu0
      %v2373 = vadd.f32 0.0, %v2372
      %v2374 = vpop.f32.mrf.mxu0
      %v2375 = vadd.f32 0.0, %v2374
      %2376 = vmatmul.bf16.gmra.mxu0 %v2215
      %v2377 = vpop.f32.mrf.mxu0
      %v2378 = vadd.f32 0.0, %v2377
      %v2379 = vpop.f32.mrf.mxu0
      %v2380 = vadd.f32 0.0, %v2379
      %2381 = vmatmul.bf16.gmra.mxu0 %v2218
      %v2382 = vpop.f32.mrf.mxu0
      %v2383 = vadd.f32 0.0, %v2382
      %v2384 = vpop.f32.mrf.mxu0
      %v2385 = vadd.f32 0.0, %v2384
      %2386 = vmatmul.bf16.gmra.mxu0 %v2221
      %v2387 = vpop.f32.mrf.mxu0
      %v2388 = vadd.f32 0.0, %v2387
      %v2389 = vpop.f32.mrf.mxu0
      %v2390 = vadd.f32 0.0, %v2389
      %2391 = vdwg.mxu0
      %v2456 = vunpack.c.l.b16 %v1826
      %v2457 = vunpack.c.l.b16 %v1827
      %v2458 = vunpack.c.l.b16 %v1828
      %v2459 = vunpack.c.l.b16 %v1829
      %v2460 = vunpack.c.l.b16 %v1830
      %v2461 = vunpack.c.l.b16 %v1831
      %v2462 = vunpack.c.l.b16 %v1832
      %v2463 = vunpack.c.l.b16 %v1833
      %v2464 = vunpack.c.l.b16 %v1834
      %v2465 = vunpack.c.l.b16 %v1835
      %v2466 = vunpack.c.l.b16 %v1836
      %v2467 = vunpack.c.l.b16 %v1837
      %v2468 = vunpack.c.l.b16 %v1838
      %v2469 = vunpack.c.l.b16 %v1839
      %v2470 = vunpack.c.l.b16 %v1840
      %v2471 = vunpack.c.l.b16 %v1841
      %v2472 = vunpack.c.l.b16 %v1842
      %v2473 = vunpack.c.l.b16 %v1843
      %v2474 = vunpack.c.l.b16 %v1844
      %v2475 = vunpack.c.l.b16 %v1845
      %v2476 = vunpack.c.l.b16 %v1846
      %v2477 = vunpack.c.l.b16 %v1847
      %v2478 = vunpack.c.l.b16 %v1848
      %v2479 = vunpack.c.l.b16 %v1849
      %v2480 = vunpack.c.l.b16 %v1850
      %v2481 = vunpack.c.l.b16 %v1851
      %v2482 = vunpack.c.l.b16 %v1852
      %v2483 = vunpack.c.l.b16 %v1853
      %v2484 = vunpack.c.l.b16 %v1854
      %v2485 = vunpack.c.l.b16 %v1855
      %v2486 = vunpack.c.l.b16 %v1856
      %v2487 = vunpack.c.l.b16 %v1857
      %v2488 = vunpack.c.l.b16 %v1858
      %v2489 = vunpack.c.l.b16 %v1859
      %v2490 = vunpack.c.l.b16 %v1860
      %v2491 = vunpack.c.l.b16 %v1861
      %v2492 = vunpack.c.l.b16 %v1862
      %v2493 = vunpack.c.l.b16 %v1863
      %v2494 = vunpack.c.l.b16 %v1864
      %v2495 = vunpack.c.l.b16 %v1865
      %v2496 = vunpack.c.l.b16 %v1866
      %v2497 = vunpack.c.l.b16 %v1867
      %v2498 = vunpack.c.l.b16 %v1868
      %v2499 = vunpack.c.l.b16 %v1869
      %v2500 = vunpack.c.l.b16 %v1870
      %v2501 = vunpack.c.l.b16 %v1871
      %v2502 = vunpack.c.l.b16 %v1872
      %v2503 = vunpack.c.l.b16 %v1873
      %v2504 = vunpack.c.l.b16 %v1874
      %v2505 = vunpack.c.l.b16 %v1875
      %v2506 = vunpack.c.l.b16 %v1876
      %v2507 = vunpack.c.l.b16 %v1877
      %v2508 = vunpack.c.l.b16 %v1878
      %v2509 = vunpack.c.l.b16 %v1879
      %v2510 = vunpack.c.l.b16 %v1880
      %v2511 = vunpack.c.l.b16 %v1881
      %v2512 = vunpack.c.l.b16 %v1882
      %v2513 = vunpack.c.l.b16 %v1883
      %v2514 = vunpack.c.l.b16 %v1884
      %v2515 = vunpack.c.l.b16 %v1885
      %v2516 = vunpack.c.l.b16 %v1886
      %v2517 = vunpack.c.l.b16 %v1887
      %v2518 = vunpack.c.l.b16 %v1888
      %v2519 = vunpack.c.l.b16 %v1889
      %v2520 = vpack.c.b16 %v2457, %v2456
      %v2521 = vpack.c.b16 %v2459, %v2458
      %v2522 = vpack.c.b16 %v2461, %v2460
      %v2523 = vpack.c.b16 %v2463, %v2462
      %v2524 = vpack.c.b16 %v2465, %v2464
      %v2525 = vpack.c.b16 %v2467, %v2466
      %v2526 = vpack.c.b16 %v2469, %v2468
      %v2527 = vpack.c.b16 %v2471, %v2470
      %v2528 = vpack.c.b16 %v2473, %v2472
      %v2529 = vpack.c.b16 %v2475, %v2474
      %v2530 = vpack.c.b16 %v2477, %v2476
      %v2531 = vpack.c.b16 %v2479, %v2478
      %v2532 = vpack.c.b16 %v2481, %v2480
      %v2533 = vpack.c.b16 %v2483, %v2482
      %v2534 = vpack.c.b16 %v2485, %v2484
      %v2535 = vpack.c.b16 %v2487, %v2486
      %v2536 = vpack.c.b16 %v2489, %v2488
      %v2537 = vpack.c.b16 %v2491, %v2490
      %v2538 = vpack.c.b16 %v2493, %v2492
      %v2539 = vpack.c.b16 %v2495, %v2494
      %v2540 = vpack.c.b16 %v2497, %v2496
      %v2541 = vpack.c.b16 %v2499, %v2498
      %v2542 = vpack.c.b16 %v2501, %v2500
      %v2543 = vpack.c.b16 %v2503, %v2502
      %v2544 = vpack.c.b16 %v2505, %v2504
      %v2545 = vpack.c.b16 %v2507, %v2506
      %v2546 = vpack.c.b16 %v2509, %v2508
      %v2547 = vpack.c.b16 %v2511, %v2510
      %v2548 = vpack.c.b16 %v2513, %v2512
      %v2549 = vpack.c.b16 %v2515, %v2514
      %v2550 = vpack.c.b16 %v2517, %v2516
      %v2551 = vpack.c.b16 %v2519, %v2518
      %v2553 = vsel %vm2126, %v2520, 0
      %v2556 = vsel %vm2126, %v2521, 0
      %v2559 = vsel %vm2126, %v2522, 0
      %v2562 = vsel %vm2126, %v2523, 0
      %v2565 = vsel %vm2126, %v2524, 0
      %v2568 = vsel %vm2126, %v2525, 0
      %v2571 = vsel %vm2126, %v2526, 0
      %v2574 = vsel %vm2126, %v2527, 0
      %v2577 = vsel %vm2126, %v2528, 0
      %v2580 = vsel %vm2126, %v2529, 0
      %v2583 = vsel %vm2126, %v2530, 0
      %v2586 = vsel %vm2126, %v2531, 0
      %v2589 = vsel %vm2126, %v2532, 0
      %v2592 = vsel %vm2126, %v2533, 0
      %v2595 = vsel %vm2126, %v2534, 0
      %v2598 = vsel %vm2126, %v2535, 0
      %v2601 = vsel %vm2126, %v2536, 0
      %v2604 = vsel %vm2126, %v2537, 0
      %v2607 = vsel %vm2126, %v2538, 0
      %v2610 = vsel %vm2126, %v2539, 0
      %v2613 = vsel %vm2126, %v2540, 0
      %v2616 = vsel %vm2126, %v2541, 0
      %v2619 = vsel %vm2126, %v2542, 0
      %v2622 = vsel %vm2126, %v2543, 0
      %v2625 = vsel %vm2126, %v2544, 0
      %v2628 = vsel %vm2126, %v2545, 0
      %v2631 = vsel %vm2126, %v2546, 0
      %v2634 = vsel %vm2126, %v2547, 0
      %v2637 = vsel %vm2126, %v2548, 0
      %v2640 = vsel %vm2126, %v2549, 0
      %v2643 = vsel %vm2126, %v2550, 0
      %v2646 = vsel %vm2126, %v2551, 0
      %2648 = vmatpush.bf16.msra.mxu0 0
      %2649 = vmatpush.bf16.msra.mxu0 0
      %2650 = vmatpush.bf16.msra.mxu0 0
      %2651 = vmatpush.bf16.msra.mxu0 0
      %2652 = vmatpush.bf16.msra.mxu0 0
      %2653 = vmatpush.bf16.msra.mxu0 0
      %2654 = vmatpush.bf16.msra.mxu0 %v1825
      %2655 = vmatpush.bf16.msra.mxu0 %v1824
      %2656 = vmatmul.bf16.gmra.mxu0 %v2553
      %v2657 = vpop.f32.mrf.mxu0
      %v2658 = vadd.f32 %v2233, %v2657
      %v2659 = vpop.f32.mrf.mxu0
      %v2660 = vadd.f32 %v2235, %v2659
      %2661 = vmatmul.bf16.gmra.mxu0 %v2556
      %v2662 = vpop.f32.mrf.mxu0
      %v2663 = vadd.f32 %v2238, %v2662
      %v2664 = vpop.f32.mrf.mxu0
      %v2665 = vadd.f32 %v2240, %v2664
      %2666 = vmatmul.bf16.gmra.mxu0 %v2559
      %v2667 = vpop.f32.mrf.mxu0
      %v2668 = vadd.f32 %v2243, %v2667
      %v2669 = vpop.f32.mrf.mxu0
      %v2670 = vadd.f32 %v2245, %v2669
      %2671 = vmatmul.bf16.gmra.mxu0 %v2562
      %v2672 = vpop.f32.mrf.mxu0
      %v2673 = vadd.f32 %v2248, %v2672
      %v2674 = vpop.f32.mrf.mxu0
      %v2675 = vadd.f32 %v2250, %v2674
      %2676 = vmatmul.bf16.gmra.mxu0 %v2565
      %v2677 = vpop.f32.mrf.mxu0
      %v2678 = vadd.f32 %v2253, %v2677
      %v2679 = vpop.f32.mrf.mxu0
      %v2680 = vadd.f32 %v2255, %v2679
      %2681 = vmatmul.bf16.gmra.mxu0 %v2568
      %v2682 = vpop.f32.mrf.mxu0
      %v2683 = vadd.f32 %v2258, %v2682
      %v2684 = vpop.f32.mrf.mxu0
      %v2685 = vadd.f32 %v2260, %v2684
      %2686 = vmatmul.bf16.gmra.mxu0 %v2571
      %v2687 = vpop.f32.mrf.mxu0
      %v2688 = vadd.f32 %v2263, %v2687
      %v2689 = vpop.f32.mrf.mxu0
      %v2690 = vadd.f32 %v2265, %v2689
      %2691 = vmatmul.bf16.gmra.mxu0 %v2574
      %v2692 = vpop.f32.mrf.mxu0
      %v2693 = vadd.f32 %v2268, %v2692
      %v2694 = vpop.f32.mrf.mxu0
      %v2695 = vadd.f32 %v2270, %v2694
      %2696 = vmatmul.bf16.gmra.mxu0 %v2577
      %v2697 = vpop.f32.mrf.mxu0
      %v2698 = vadd.f32 %v2273, %v2697
      %v2699 = vpop.f32.mrf.mxu0
      %v2700 = vadd.f32 %v2275, %v2699
      %2701 = vmatmul.bf16.gmra.mxu0 %v2580
      %v2702 = vpop.f32.mrf.mxu0
      %v2703 = vadd.f32 %v2278, %v2702
      %v2704 = vpop.f32.mrf.mxu0
      %v2705 = vadd.f32 %v2280, %v2704
      %2706 = vmatmul.bf16.gmra.mxu0 %v2583
      %v2707 = vpop.f32.mrf.mxu0
      %v2708 = vadd.f32 %v2283, %v2707
      %v2709 = vpop.f32.mrf.mxu0
      %v2710 = vadd.f32 %v2285, %v2709
      %2711 = vmatmul.bf16.gmra.mxu0 %v2586
      %v2712 = vpop.f32.mrf.mxu0
      %v2713 = vadd.f32 %v2288, %v2712
      %v2714 = vpop.f32.mrf.mxu0
      %v2715 = vadd.f32 %v2290, %v2714
      %2716 = vmatmul.bf16.gmra.mxu0 %v2589
      %v2717 = vpop.f32.mrf.mxu0
      %v2718 = vadd.f32 %v2293, %v2717
      %v2719 = vpop.f32.mrf.mxu0
      %v2720 = vadd.f32 %v2295, %v2719
      %2721 = vmatmul.bf16.gmra.mxu0 %v2592
      %v2722 = vpop.f32.mrf.mxu0
      %v2723 = vadd.f32 %v2298, %v2722
      %v2724 = vpop.f32.mrf.mxu0
      %v2725 = vadd.f32 %v2300, %v2724
      %2726 = vmatmul.bf16.gmra.mxu0 %v2595
      %v2727 = vpop.f32.mrf.mxu0
      %v2728 = vadd.f32 %v2303, %v2727
      %v2729 = vpop.f32.mrf.mxu0
      %v2730 = vadd.f32 %v2305, %v2729
      %2731 = vmatmul.bf16.gmra.mxu0 %v2598
      %v2732 = vpop.f32.mrf.mxu0
      %v2733 = vadd.f32 %v2308, %v2732
      %v2734 = vpop.f32.mrf.mxu0
      %v2735 = vadd.f32 %v2310, %v2734
      %2736 = vmatmul.bf16.gmra.mxu0 %v2601
      %v2737 = vpop.f32.mrf.mxu0
      %v2738 = vadd.f32 %v2313, %v2737
      %v2739 = vpop.f32.mrf.mxu0
      %v2740 = vadd.f32 %v2315, %v2739
      %2741 = vmatmul.bf16.gmra.mxu0 %v2604
      %v2742 = vpop.f32.mrf.mxu0
      %v2743 = vadd.f32 %v2318, %v2742
      %v2744 = vpop.f32.mrf.mxu0
      %v2745 = vadd.f32 %v2320, %v2744
      %2746 = vmatmul.bf16.gmra.mxu0 %v2607
      %v2747 = vpop.f32.mrf.mxu0
      %v2748 = vadd.f32 %v2323, %v2747
      %v2749 = vpop.f32.mrf.mxu0
      %v2750 = vadd.f32 %v2325, %v2749
      %2751 = vmatmul.bf16.gmra.mxu0 %v2610
      %v2752 = vpop.f32.mrf.mxu0
      %v2753 = vadd.f32 %v2328, %v2752
      %v2754 = vpop.f32.mrf.mxu0
      %v2755 = vadd.f32 %v2330, %v2754
      %2756 = vmatmul.bf16.gmra.mxu0 %v2613
      %v2757 = vpop.f32.mrf.mxu0
      %v2758 = vadd.f32 %v2333, %v2757
      %v2759 = vpop.f32.mrf.mxu0
      %v2760 = vadd.f32 %v2335, %v2759
      %2761 = vmatmul.bf16.gmra.mxu0 %v2616
      %v2762 = vpop.f32.mrf.mxu0
      %v2763 = vadd.f32 %v2338, %v2762
      %v2764 = vpop.f32.mrf.mxu0
      %v2765 = vadd.f32 %v2340, %v2764
      %2766 = vmatmul.bf16.gmra.mxu0 %v2619
      %v2767 = vpop.f32.mrf.mxu0
      %v2768 = vadd.f32 %v2343, %v2767
      %v2769 = vpop.f32.mrf.mxu0
      %v2770 = vadd.f32 %v2345, %v2769
      %2771 = vmatmul.bf16.gmra.mxu0 %v2622
      %v2772 = vpop.f32.mrf.mxu0
      %v2773 = vadd.f32 %v2348, %v2772
      %v2774 = vpop.f32.mrf.mxu0
      %v2775 = vadd.f32 %v2350, %v2774
      %2776 = vmatmul.bf16.gmra.mxu0 %v2625
      %v2777 = vpop.f32.mrf.mxu0
      %v2778 = vadd.f32 %v2353, %v2777
      %v2779 = vpop.f32.mrf.mxu0
      %v2780 = vadd.f32 %v2355, %v2779
      %2781 = vmatmul.bf16.gmra.mxu0 %v2628
      %v2782 = vpop.f32.mrf.mxu0
      %v2783 = vadd.f32 %v2358, %v2782
      %v2784 = vpop.f32.mrf.mxu0
      %v2785 = vadd.f32 %v2360, %v2784
      %2786 = vmatmul.bf16.gmra.mxu0 %v2631
      %v2787 = vpop.f32.mrf.mxu0
      %v2788 = vadd.f32 %v2363, %v2787
      %v2789 = vpop.f32.mrf.mxu0
      %v2790 = vadd.f32 %v2365, %v2789
      %2791 = vmatmul.bf16.gmra.mxu0 %v2634
      %v2792 = vpop.f32.mrf.mxu0
      %v2793 = vadd.f32 %v2368, %v2792
      %v2794 = vpop.f32.mrf.mxu0
      %v2795 = vadd.f32 %v2370, %v2794
      %2796 = vmatmul.bf16.gmra.mxu0 %v2637
      %v2797 = vpop.f32.mrf.mxu0
      %v2798 = vadd.f32 %v2373, %v2797
      %v2799 = vpop.f32.mrf.mxu0
      %v2800 = vadd.f32 %v2375, %v2799
      %2801 = vmatmul.bf16.gmra.mxu0 %v2640
      %v2802 = vpop.f32.mrf.mxu0
      %v2803 = vadd.f32 %v2378, %v2802
      %v2804 = vpop.f32.mrf.mxu0
      %v2805 = vadd.f32 %v2380, %v2804
      %2806 = vmatmul.bf16.gmra.mxu0 %v2643
      %v2807 = vpop.f32.mrf.mxu0
      %v2808 = vadd.f32 %v2383, %v2807
      %v2809 = vpop.f32.mrf.mxu0
      %v2810 = vadd.f32 %v2385, %v2809
      %2811 = vmatmul.bf16.gmra.mxu0 %v2646
      %v2812 = vpop.f32.mrf.mxu0
      %v2813 = vadd.f32 %v2388, %v2812
      %v2814 = vpop.f32.mrf.mxu0
      %v2815 = vadd.f32 %v2390, %v2814
      %2816 = vdwg.mxu0
      %s2817 = scalar_lea.vmem %s7, 256
      %v2818 = vld [vmem:[%s2817] sm:$0xf]
      %v2819 = vld [vmem:[%s2817 + $0x4] sm:$0xf]
      %v2820 = vld [vmem:[%s2817 + $0x8] sm:$0xf]
      %v2821 = vld [vmem:[%s2817 + $0xc] sm:$0xf]
      %v2822 = vld [vmem:[%s2817 + $0x10] sm:$0xf]
      %v2823 = vld [vmem:[%s2817 + $0x14] sm:$0xf]
      %v2824 = vld [vmem:[%s2817 + $0x18] sm:$0xf]
      %v2825 = vld [vmem:[%s2817 + $0x1c] sm:$0xf]
      %v2826 = vld [vmem:[%s2817 + $0x20] sm:$0xf]
      %v2827 = vld [vmem:[%s2817 + $0x24] sm:$0xf]
      %v2828 = vld [vmem:[%s2817 + $0x28] sm:$0xf]
      %v2829 = vld [vmem:[%s2817 + $0x2c] sm:$0xf]
      %v2830 = vld [vmem:[%s2817 + $0x30] sm:$0xf]
      %v2831 = vld [vmem:[%s2817 + $0x34] sm:$0xf]
      %v2832 = vld [vmem:[%s2817 + $0x38] sm:$0xf]
      %v2833 = vld [vmem:[%s2817 + $0x3c] sm:$0xf]
      %v2834 = vld [vmem:[%s2817 + $0x40] sm:$0xf]
      %v2835 = vld [vmem:[%s2817 + $0x44] sm:$0xf]
      %v2836 = vld [vmem:[%s2817 + $0x48] sm:$0xf]
      %v2837 = vld [vmem:[%s2817 + $0x4c] sm:$0xf]
      %v2838 = vld [vmem:[%s2817 + $0x50] sm:$0xf]
      %v2839 = vld [vmem:[%s2817 + $0x54] sm:$0xf]
      %v2840 = vld [vmem:[%s2817 + $0x58] sm:$0xf]
      %v2841 = vld [vmem:[%s2817 + $0x5c] sm:$0xf]
      %v2842 = vld [vmem:[%s2817 + $0x60] sm:$0xf]
      %v2843 = vld [vmem:[%s2817 + $0x64] sm:$0xf]
      %v2844 = vld [vmem:[%s2817 + $0x68] sm:$0xf]
      %v2845 = vld [vmem:[%s2817 + $0x6c] sm:$0xf]
      %v2846 = vld [vmem:[%s2817 + $0x70] sm:$0xf]
      %v2847 = vld [vmem:[%s2817 + $0x74] sm:$0xf]
      %v2848 = vld [vmem:[%s2817 + $0x78] sm:$0xf]
      %v2849 = vld [vmem:[%s2817 + $0x7c] sm:$0xf]
      %v2850 = vld [vmem:[%s2817 + $0x80] sm:$0xf]
      %v2851 = vld [vmem:[%s2817 + $0x84] sm:$0xf]
      %v2852 = vld [vmem:[%s2817 + $0x88] sm:$0xf]
      %v2853 = vld [vmem:[%s2817 + $0x8c] sm:$0xf]
      %v2854 = vld [vmem:[%s2817 + $0x90] sm:$0xf]
      %v2855 = vld [vmem:[%s2817 + $0x94] sm:$0xf]
      %v2856 = vld [vmem:[%s2817 + $0x98] sm:$0xf]
      %v2857 = vld [vmem:[%s2817 + $0x9c] sm:$0xf]
      %v2858 = vld [vmem:[%s2817 + $0xa0] sm:$0xf]
      %v2859 = vld [vmem:[%s2817 + $0xa4] sm:$0xf]
      %v2860 = vld [vmem:[%s2817 + $0xa8] sm:$0xf]
      %v2861 = vld [vmem:[%s2817 + $0xac] sm:$0xf]
      %v2862 = vld [vmem:[%s2817 + $0xb0] sm:$0xf]
      %v2863 = vld [vmem:[%s2817 + $0xb4] sm:$0xf]
      %v2864 = vld [vmem:[%s2817 + $0xb8] sm:$0xf]
      %v2865 = vld [vmem:[%s2817 + $0xbc] sm:$0xf]
      %v2866 = vld [vmem:[%s2817 + $0xc0] sm:$0xf]
      %v2867 = vld [vmem:[%s2817 + $0xc4] sm:$0xf]
      %v2868 = vld [vmem:[%s2817 + $0xc8] sm:$0xf]
      %v2869 = vld [vmem:[%s2817 + $0xcc] sm:$0xf]
      %v2870 = vld [vmem:[%s2817 + $0xd0] sm:$0xf]
      %v2871 = vld [vmem:[%s2817 + $0xd4] sm:$0xf]
      %v2872 = vld [vmem:[%s2817 + $0xd8] sm:$0xf]
      %v2873 = vld [vmem:[%s2817 + $0xdc] sm:$0xf]
      %v2874 = vld [vmem:[%s2817 + $0xe0] sm:$0xf]
      %v2875 = vld [vmem:[%s2817 + $0xe4] sm:$0xf]
      %v2876 = vld [vmem:[%s2817 + $0xe8] sm:$0xf]
      %v2877 = vld [vmem:[%s2817 + $0xec] sm:$0xf]
      %v2878 = vld [vmem:[%s2817 + $0xf0] sm:$0xf]
      %v2879 = vld [vmem:[%s2817 + $0xf4] sm:$0xf]
      %v2880 = vld [vmem:[%s2817 + $0xf8] sm:$0xf]
      %v2881 = vld [vmem:[%s2817 + $0xfc] sm:$0xf]
      %v2946 = vunpack.c.l.b16 %v2818
      %v2947 = vunpack.c.l.b16 %v2819
      %v2948 = vunpack.c.l.b16 %v2820
      %v2949 = vunpack.c.l.b16 %v2821
      %v2950 = vunpack.c.l.b16 %v2822
      %v2951 = vunpack.c.l.b16 %v2823
      %v2952 = vunpack.c.l.b16 %v2824
      %v2953 = vunpack.c.l.b16 %v2825
      %v2954 = vunpack.c.l.b16 %v2826
      %v2955 = vunpack.c.l.b16 %v2827
      %v2956 = vunpack.c.l.b16 %v2828
      %v2957 = vunpack.c.l.b16 %v2829
      %v2958 = vunpack.c.l.b16 %v2830
      %v2959 = vunpack.c.l.b16 %v2831
      %v2960 = vunpack.c.l.b16 %v2832
      %v2961 = vunpack.c.l.b16 %v2833
      %v2962 = vunpack.c.l.b16 %v2834
      %v2963 = vunpack.c.l.b16 %v2835
      %v2964 = vunpack.c.l.b16 %v2836
      %v2965 = vunpack.c.l.b16 %v2837
      %v2966 = vunpack.c.l.b16 %v2838
      %v2967 = vunpack.c.l.b16 %v2839
      %v2968 = vunpack.c.l.b16 %v2840
      %v2969 = vunpack.c.l.b16 %v2841
      %v2970 = vunpack.c.l.b16 %v2842
      %v2971 = vunpack.c.l.b16 %v2843
      %v2972 = vunpack.c.l.b16 %v2844
      %v2973 = vunpack.c.l.b16 %v2845
      %v2974 = vunpack.c.l.b16 %v2846
      %v2975 = vunpack.c.l.b16 %v2847
      %v2976 = vunpack.c.l.b16 %v2848
      %v2977 = vunpack.c.l.b16 %v2849
      %v2978 = vunpack.c.l.b16 %v2850
      %v2979 = vunpack.c.l.b16 %v2851
      %v2980 = vunpack.c.l.b16 %v2852
      %v2981 = vunpack.c.l.b16 %v2853
      %v2982 = vunpack.c.l.b16 %v2854
      %v2983 = vunpack.c.l.b16 %v2855
      %v2984 = vunpack.c.l.b16 %v2856
      %v2985 = vunpack.c.l.b16 %v2857
      %v2986 = vunpack.c.l.b16 %v2858
      %v2987 = vunpack.c.l.b16 %v2859
      %v2988 = vunpack.c.l.b16 %v2860
      %v2989 = vunpack.c.l.b16 %v2861
      %v2990 = vunpack.c.l.b16 %v2862
      %v2991 = vunpack.c.l.b16 %v2863
      %v2992 = vunpack.c.l.b16 %v2864
      %v2993 = vunpack.c.l.b16 %v2865
      %v2994 = vunpack.c.l.b16 %v2866
      %v2995 = vunpack.c.l.b16 %v2867
      %v2996 = vunpack.c.l.b16 %v2868
      %v2997 = vunpack.c.l.b16 %v2869
      %v2998 = vunpack.c.l.b16 %v2870
      %v2999 = vunpack.c.l.b16 %v2871
      %v3000 = vunpack.c.l.b16 %v2872
      %v3001 = vunpack.c.l.b16 %v2873
      %v3002 = vunpack.c.l.b16 %v2874
      %v3003 = vunpack.c.l.b16 %v2875
      %v3004 = vunpack.c.l.b16 %v2876
      %v3005 = vunpack.c.l.b16 %v2877
      %v3006 = vunpack.c.l.b16 %v2878
      %v3007 = vunpack.c.l.b16 %v2879
      %v3008 = vunpack.c.l.b16 %v2880
      %v3009 = vunpack.c.l.b16 %v2881
      %v3010 = vpack.c.b16 %v2947, %v2946
      %v3011 = vpack.c.b16 %v2949, %v2948
      %v3012 = vpack.c.b16 %v2951, %v2950
      %v3013 = vpack.c.b16 %v2953, %v2952
      %v3014 = vpack.c.b16 %v2955, %v2954
      %v3015 = vpack.c.b16 %v2957, %v2956
      %v3016 = vpack.c.b16 %v2959, %v2958
      %v3017 = vpack.c.b16 %v2961, %v2960
      %v3018 = vpack.c.b16 %v2963, %v2962
      %v3019 = vpack.c.b16 %v2965, %v2964
      %v3020 = vpack.c.b16 %v2967, %v2966
      %v3021 = vpack.c.b16 %v2969, %v2968
      %v3022 = vpack.c.b16 %v2971, %v2970
      %v3023 = vpack.c.b16 %v2973, %v2972
      %v3024 = vpack.c.b16 %v2975, %v2974
      %v3025 = vpack.c.b16 %v2977, %v2976
      %v3026 = vpack.c.b16 %v2979, %v2978
      %v3027 = vpack.c.b16 %v2981, %v2980
      %v3028 = vpack.c.b16 %v2983, %v2982
      %v3029 = vpack.c.b16 %v2985, %v2984
      %v3030 = vpack.c.b16 %v2987, %v2986
      %v3031 = vpack.c.b16 %v2989, %v2988
      %v3032 = vpack.c.b16 %v2991, %v2990
      %v3033 = vpack.c.b16 %v2993, %v2992
      %v3034 = vpack.c.b16 %v2995, %v2994
      %v3035 = vpack.c.b16 %v2997, %v2996
      %v3036 = vpack.c.b16 %v2999, %v2998
      %v3037 = vpack.c.b16 %v3001, %v3000
      %v3038 = vpack.c.b16 %v3003, %v3002
      %v3039 = vpack.c.b16 %v3005, %v3004
      %v3040 = vpack.c.b16 %v3007, %v3006
      %v3041 = vpack.c.b16 %v3009, %v3008
      %3042 = vrot.lane.b32.xlu0 %v2122, 127
      %v3043 = vpop.permute.xlu0 %3042
      %3044 = vrot.lane.b32.xlu0 %v2123, 127
      %v3045 = vpop.permute.xlu0 %3044
      %v3049 = vsel %vm2126, %v3010, 0
      %v3052 = vsel %vm2126, %v3011, 0
      %v3055 = vsel %vm2126, %v3012, 0
      %v3058 = vsel %vm2126, %v3013, 0
      %v3061 = vsel %vm2126, %v3014, 0
      %v3064 = vsel %vm2126, %v3015, 0
      %v3067 = vsel %vm2126, %v3016, 0
      %v3070 = vsel %vm2126, %v3017, 0
      %v3073 = vsel %vm2126, %v3018, 0
      %v3076 = vsel %vm2126, %v3019, 0
      %v3079 = vsel %vm2126, %v3020, 0
      %v3082 = vsel %vm2126, %v3021, 0
      %v3085 = vsel %vm2126, %v3022, 0
      %v3088 = vsel %vm2126, %v3023, 0
      %v3091 = vsel %vm2126, %v3024, 0
      %v3094 = vsel %vm2126, %v3025, 0
      %v3097 = vsel %vm2126, %v3026, 0
      %v3100 = vsel %vm2126, %v3027, 0
      %v3103 = vsel %vm2126, %v3028, 0
      %v3106 = vsel %vm2126, %v3029, 0
      %v3109 = vsel %vm2126, %v3030, 0
      %v3112 = vsel %vm2126, %v3031, 0
      %v3115 = vsel %vm2126, %v3032, 0
      %v3118 = vsel %vm2126, %v3033, 0
      %v3121 = vsel %vm2126, %v3034, 0
      %v3124 = vsel %vm2126, %v3035, 0
      %v3127 = vsel %vm2126, %v3036, 0
      %v3130 = vsel %vm2126, %v3037, 0
      %v3133 = vsel %vm2126, %v3038, 0
      %v3136 = vsel %vm2126, %v3039, 0
      %v3139 = vsel %vm2126, %v3040, 0
      %v3142 = vsel %vm2126, %v3041, 0
      %3144 = vmatpush.bf16.msra.mxu0 0
      %3145 = vmatpush.bf16.msra.mxu0 0
      %3146 = vmatpush.bf16.msra.mxu0 0
      %3147 = vmatpush.bf16.msra.mxu0 0
      %3148 = vmatpush.bf16.msra.mxu0 0
      %3149 = vmatpush.bf16.msra.mxu0 0
      %3150 = vmatpush.bf16.msra.mxu0 %v3045
      %3151 = vmatpush.bf16.msra.mxu0 %v3043
      %3152 = vmatmul.bf16.gmra.mxu0 %v3049
      %v3153 = vpop.f32.mrf.mxu0
      %v3154 = vadd.f32 0.0, %v3153
      %v3155 = vpop.f32.mrf.mxu0
      %v3156 = vadd.f32 0.0, %v3155
      %3157 = vmatmul.bf16.gmra.mxu0 %v3052
      %v3158 = vpop.f32.mrf.mxu0
      %v3159 = vadd.f32 0.0, %v3158
      %v3160 = vpop.f32.mrf.mxu0
      %v3161 = vadd.f32 0.0, %v3160
      %3162 = vmatmul.bf16.gmra.mxu0 %v3055
      %v3163 = vpop.f32.mrf.mxu0
      %v3164 = vadd.f32 0.0, %v3163
      %v3165 = vpop.f32.mrf.mxu0
      %v3166 = vadd.f32 0.0, %v3165
      %3167 = vmatmul.bf16.gmra.mxu0 %v3058
      %v3168 = vpop.f32.mrf.mxu0
      %v3169 = vadd.f32 0.0, %v3168
      %v3170 = vpop.f32.mrf.mxu0
      %v3171 = vadd.f32 0.0, %v3170
      %3172 = vmatmul.bf16.gmra.mxu0 %v3061
      %v3173 = vpop.f32.mrf.mxu0
      %v3174 = vadd.f32 0.0, %v3173
      %v3175 = vpop.f32.mrf.mxu0
      %v3176 = vadd.f32 0.0, %v3175
      %3177 = vmatmul.bf16.gmra.mxu0 %v3064
      %v3178 = vpop.f32.mrf.mxu0
      %v3179 = vadd.f32 0.0, %v3178
      %v3180 = vpop.f32.mrf.mxu0
      %v3181 = vadd.f32 0.0, %v3180
      %3182 = vmatmul.bf16.gmra.mxu0 %v3067
      %v3183 = vpop.f32.mrf.mxu0
      %v3184 = vadd.f32 0.0, %v3183
      %v3185 = vpop.f32.mrf.mxu0
      %v3186 = vadd.f32 0.0, %v3185
      %3187 = vmatmul.bf16.gmra.mxu0 %v3070
      %v3188 = vpop.f32.mrf.mxu0
      %v3189 = vadd.f32 0.0, %v3188
      %v3190 = vpop.f32.mrf.mxu0
      %v3191 = vadd.f32 0.0, %v3190
      %3192 = vmatmul.bf16.gmra.mxu0 %v3073
      %v3193 = vpop.f32.mrf.mxu0
      %v3194 = vadd.f32 0.0, %v3193
      %v3195 = vpop.f32.mrf.mxu0
      %v3196 = vadd.f32 0.0, %v3195
      %3197 = vmatmul.bf16.gmra.mxu0 %v3076
      %v3198 = vpop.f32.mrf.mxu0
      %v3199 = vadd.f32 0.0, %v3198
      %v3200 = vpop.f32.mrf.mxu0
      %v3201 = vadd.f32 0.0, %v3200
      %3202 = vmatmul.bf16.gmra.mxu0 %v3079
      %v3203 = vpop.f32.mrf.mxu0
      %v3204 = vadd.f32 0.0, %v3203
      %v3205 = vpop.f32.mrf.mxu0
      %v3206 = vadd.f32 0.0, %v3205
      %3207 = vmatmul.bf16.gmra.mxu0 %v3082
      %v3208 = vpop.f32.mrf.mxu0
      %v3209 = vadd.f32 0.0, %v3208
      %v3210 = vpop.f32.mrf.mxu0
      %v3211 = vadd.f32 0.0, %v3210
      %3212 = vmatmul.bf16.gmra.mxu0 %v3085
      %v3213 = vpop.f32.mrf.mxu0
      %v3214 = vadd.f32 0.0, %v3213
      %v3215 = vpop.f32.mrf.mxu0
      %v3216 = vadd.f32 0.0, %v3215
      %3217 = vmatmul.bf16.gmra.mxu0 %v3088
      %v3218 = vpop.f32.mrf.mxu0
      %v3219 = vadd.f32 0.0, %v3218
      %v3220 = vpop.f32.mrf.mxu0
      %v3221 = vadd.f32 0.0, %v3220
      %3222 = vmatmul.bf16.gmra.mxu0 %v3091
      %v3223 = vpop.f32.mrf.mxu0
      %v3224 = vadd.f32 0.0, %v3223
      %v3225 = vpop.f32.mrf.mxu0
      %v3226 = vadd.f32 0.0, %v3225
      %3227 = vmatmul.bf16.gmra.mxu0 %v3094
      %v3228 = vpop.f32.mrf.mxu0
      %v3229 = vadd.f32 0.0, %v3228
      %v3230 = vpop.f32.mrf.mxu0
      %v3231 = vadd.f32 0.0, %v3230
      %3232 = vmatmul.bf16.gmra.mxu0 %v3097
      %v3233 = vpop.f32.mrf.mxu0
      %v3234 = vadd.f32 0.0, %v3233
      %v3235 = vpop.f32.mrf.mxu0
      %v3236 = vadd.f32 0.0, %v3235
      %3237 = vmatmul.bf16.gmra.mxu0 %v3100
      %v3238 = vpop.f32.mrf.mxu0
      %v3239 = vadd.f32 0.0, %v3238
      %v3240 = vpop.f32.mrf.mxu0
      %v3241 = vadd.f32 0.0, %v3240
      %3242 = vmatmul.bf16.gmra.mxu0 %v3103
      %v3243 = vpop.f32.mrf.mxu0
      %v3244 = vadd.f32 0.0, %v3243
      %v3245 = vpop.f32.mrf.mxu0
      %v3246 = vadd.f32 0.0, %v3245
      %3247 = vmatmul.bf16.gmra.mxu0 %v3106
      %v3248 = vpop.f32.mrf.mxu0
      %v3249 = vadd.f32 0.0, %v3248
      %v3250 = vpop.f32.mrf.mxu0
      %v3251 = vadd.f32 0.0, %v3250
      %3252 = vmatmul.bf16.gmra.mxu0 %v3109
      %v3253 = vpop.f32.mrf.mxu0
      %v3254 = vadd.f32 0.0, %v3253
      %v3255 = vpop.f32.mrf.mxu0
      %v3256 = vadd.f32 0.0, %v3255
      %3257 = vmatmul.bf16.gmra.mxu0 %v3112
      %v3258 = vpop.f32.mrf.mxu0
      %v3259 = vadd.f32 0.0, %v3258
      %v3260 = vpop.f32.mrf.mxu0
      %v3261 = vadd.f32 0.0, %v3260
      %3262 = vmatmul.bf16.gmra.mxu0 %v3115
      %v3263 = vpop.f32.mrf.mxu0
      %v3264 = vadd.f32 0.0, %v3263
      %v3265 = vpop.f32.mrf.mxu0
      %v3266 = vadd.f32 0.0, %v3265
      %3267 = vmatmul.bf16.gmra.mxu0 %v3118
      %v3268 = vpop.f32.mrf.mxu0
      %v3269 = vadd.f32 0.0, %v3268
      %v3270 = vpop.f32.mrf.mxu0
      %v3271 = vadd.f32 0.0, %v3270
      %3272 = vmatmul.bf16.gmra.mxu0 %v3121
      %v3273 = vpop.f32.mrf.mxu0
      %v3274 = vadd.f32 0.0, %v3273
      %v3275 = vpop.f32.mrf.mxu0
      %v3276 = vadd.f32 0.0, %v3275
      %3277 = vmatmul.bf16.gmra.mxu0 %v3124
      %v3278 = vpop.f32.mrf.mxu0
      %v3279 = vadd.f32 0.0, %v3278
      %v3280 = vpop.f32.mrf.mxu0
      %v3281 = vadd.f32 0.0, %v3280
      %3282 = vmatmul.bf16.gmra.mxu0 %v3127
      %v3283 = vpop.f32.mrf.mxu0
      %v3284 = vadd.f32 0.0, %v3283
      %v3285 = vpop.f32.mrf.mxu0
      %v3286 = vadd.f32 0.0, %v3285
      %3287 = vmatmul.bf16.gmra.mxu0 %v3130
      %v3288 = vpop.f32.mrf.mxu0
      %v3289 = vadd.f32 0.0, %v3288
      %v3290 = vpop.f32.mrf.mxu0
      %v3291 = vadd.f32 0.0, %v3290
      %3292 = vmatmul.bf16.gmra.mxu0 %v3133
      %v3293 = vpop.f32.mrf.mxu0
      %v3294 = vadd.f32 0.0, %v3293
      %v3295 = vpop.f32.mrf.mxu0
      %v3296 = vadd.f32 0.0, %v3295
      %3297 = vmatmul.bf16.gmra.mxu0 %v3136
      %v3298 = vpop.f32.mrf.mxu0
      %v3299 = vadd.f32 0.0, %v3298
      %v3300 = vpop.f32.mrf.mxu0
      %v3301 = vadd.f32 0.0, %v3300
      %3302 = vmatmul.bf16.gmra.mxu0 %v3139
      %v3303 = vpop.f32.mrf.mxu0
      %v3304 = vadd.f32 0.0, %v3303
      %v3305 = vpop.f32.mrf.mxu0
      %v3306 = vadd.f32 0.0, %v3305
      %3307 = vmatmul.bf16.gmra.mxu0 %v3142
      %v3308 = vpop.f32.mrf.mxu0
      %v3309 = vadd.f32 0.0, %v3308
      %v3310 = vpop.f32.mrf.mxu0
      %v3311 = vadd.f32 0.0, %v3310
      %3312 = vdwg.mxu0
      %v3313 = vadd.f32 %v2658, %v3154
      %v3314 = vadd.f32 %v2660, %v3156
      %v3315 = vadd.f32 %v2663, %v3159
      %v3316 = vadd.f32 %v2665, %v3161
      %v3317 = vadd.f32 %v2668, %v3164
      %v3318 = vadd.f32 %v2670, %v3166
      %v3319 = vadd.f32 %v2673, %v3169
      %v3320 = vadd.f32 %v2675, %v3171
      %v3321 = vadd.f32 %v2678, %v3174
      %v3322 = vadd.f32 %v2680, %v3176
      %v3323 = vadd.f32 %v2683, %v3179
      %v3324 = vadd.f32 %v2685, %v3181
      %v3325 = vadd.f32 %v2688, %v3184
      %v3326 = vadd.f32 %v2690, %v3186
      %v3327 = vadd.f32 %v2693, %v3189
      %v3328 = vadd.f32 %v2695, %v3191
      %v3329 = vadd.f32 %v2698, %v3194
      %v3330 = vadd.f32 %v2700, %v3196
      %v3331 = vadd.f32 %v2703, %v3199
      %v3332 = vadd.f32 %v2705, %v3201
      %v3333 = vadd.f32 %v2708, %v3204
      %v3334 = vadd.f32 %v2710, %v3206
      %v3335 = vadd.f32 %v2713, %v3209
      %v3336 = vadd.f32 %v2715, %v3211
      %v3337 = vadd.f32 %v2718, %v3214
      %v3338 = vadd.f32 %v2720, %v3216
      %v3339 = vadd.f32 %v2723, %v3219
      %v3340 = vadd.f32 %v2725, %v3221
      %v3341 = vadd.f32 %v2728, %v3224
      %v3342 = vadd.f32 %v2730, %v3226
      %v3343 = vadd.f32 %v2733, %v3229
      %v3344 = vadd.f32 %v2735, %v3231
      %v3345 = vadd.f32 %v2738, %v3234
      %v3346 = vadd.f32 %v2740, %v3236
      %v3347 = vadd.f32 %v2743, %v3239
      %v3348 = vadd.f32 %v2745, %v3241
      %v3349 = vadd.f32 %v2748, %v3244
      %v3350 = vadd.f32 %v2750, %v3246
      %v3351 = vadd.f32 %v2753, %v3249
      %v3352 = vadd.f32 %v2755, %v3251
      %v3353 = vadd.f32 %v2758, %v3254
      %v3354 = vadd.f32 %v2760, %v3256
      %v3355 = vadd.f32 %v2763, %v3259
      %v3356 = vadd.f32 %v2765, %v3261
      %v3357 = vadd.f32 %v2768, %v3264
      %v3358 = vadd.f32 %v2770, %v3266
      %v3359 = vadd.f32 %v2773, %v3269
      %v3360 = vadd.f32 %v2775, %v3271
      %v3361 = vadd.f32 %v2778, %v3274
      %v3362 = vadd.f32 %v2780, %v3276
      %v3363 = vadd.f32 %v2783, %v3279
      %v3364 = vadd.f32 %v2785, %v3281
      %v3365 = vadd.f32 %v2788, %v3284
      %v3366 = vadd.f32 %v2790, %v3286
      %v3367 = vadd.f32 %v2793, %v3289
      %v3368 = vadd.f32 %v2795, %v3291
      %v3369 = vadd.f32 %v2798, %v3294
      %v3370 = vadd.f32 %v2800, %v3296
      %v3371 = vadd.f32 %v2803, %v3299
      %v3372 = vadd.f32 %v2805, %v3301
      %v3373 = vadd.f32 %v2808, %v3304
      %v3374 = vadd.f32 %v2810, %v3306
      %v3375 = vadd.f32 %v2813, %v3309
      %v3376 = vadd.f32 %v2815, %v3311
      %s3377 = scalar_lea.vmem %s7, 512
      %v3378 = vld [vmem:[%s3377] sm:$0xf]
      %v3379 = vld [vmem:[%s3377 + $0x4] sm:$0xf]
      %v3380 = vld [vmem:[%s3377 + $0x8] sm:$0xf]
      %v3381 = vld [vmem:[%s3377 + $0xc] sm:$0xf]
      %v3382 = vld [vmem:[%s3377 + $0x10] sm:$0xf]
      %v3383 = vld [vmem:[%s3377 + $0x14] sm:$0xf]
      %v3384 = vld [vmem:[%s3377 + $0x18] sm:$0xf]
      %v3385 = vld [vmem:[%s3377 + $0x1c] sm:$0xf]
      %v3386 = vld [vmem:[%s3377 + $0x20] sm:$0xf]
      %v3387 = vld [vmem:[%s3377 + $0x24] sm:$0xf]
      %v3388 = vld [vmem:[%s3377 + $0x28] sm:$0xf]
      %v3389 = vld [vmem:[%s3377 + $0x2c] sm:$0xf]
      %v3390 = vld [vmem:[%s3377 + $0x30] sm:$0xf]
      %v3391 = vld [vmem:[%s3377 + $0x34] sm:$0xf]
      %v3392 = vld [vmem:[%s3377 + $0x38] sm:$0xf]
      %v3393 = vld [vmem:[%s3377 + $0x3c] sm:$0xf]
      %v3394 = vld [vmem:[%s3377 + $0x40] sm:$0xf]
      %v3395 = vld [vmem:[%s3377 + $0x44] sm:$0xf]
      %v3396 = vld [vmem:[%s3377 + $0x48] sm:$0xf]
      %v3397 = vld [vmem:[%s3377 + $0x4c] sm:$0xf]
      %v3398 = vld [vmem:[%s3377 + $0x50] sm:$0xf]
      %v3399 = vld [vmem:[%s3377 + $0x54] sm:$0xf]
      %v3400 = vld [vmem:[%s3377 + $0x58] sm:$0xf]
      %v3401 = vld [vmem:[%s3377 + $0x5c] sm:$0xf]
      %v3402 = vld [vmem:[%s3377 + $0x60] sm:$0xf]
      %v3403 = vld [vmem:[%s3377 + $0x64] sm:$0xf]
      %v3404 = vld [vmem:[%s3377 + $0x68] sm:$0xf]
      %v3405 = vld [vmem:[%s3377 + $0x6c] sm:$0xf]
      %v3406 = vld [vmem:[%s3377 + $0x70] sm:$0xf]
      %v3407 = vld [vmem:[%s3377 + $0x74] sm:$0xf]
      %v3408 = vld [vmem:[%s3377 + $0x78] sm:$0xf]
      %v3409 = vld [vmem:[%s3377 + $0x7c] sm:$0xf]
      %v3410 = vld [vmem:[%s3377 + $0x80] sm:$0xf]
      %v3411 = vld [vmem:[%s3377 + $0x84] sm:$0xf]
      %v3412 = vld [vmem:[%s3377 + $0x88] sm:$0xf]
      %v3413 = vld [vmem:[%s3377 + $0x8c] sm:$0xf]
      %v3414 = vld [vmem:[%s3377 + $0x90] sm:$0xf]
      %v3415 = vld [vmem:[%s3377 + $0x94] sm:$0xf]
      %v3416 = vld [vmem:[%s3377 + $0x98] sm:$0xf]
      %v3417 = vld [vmem:[%s3377 + $0x9c] sm:$0xf]
      %v3418 = vld [vmem:[%s3377 + $0xa0] sm:$0xf]
      %v3419 = vld [vmem:[%s3377 + $0xa4] sm:$0xf]
      %v3420 = vld [vmem:[%s3377 + $0xa8] sm:$0xf]
      %v3421 = vld [vmem:[%s3377 + $0xac] sm:$0xf]
      %v3422 = vld [vmem:[%s3377 + $0xb0] sm:$0xf]
      %v3423 = vld [vmem:[%s3377 + $0xb4] sm:$0xf]
      %v3424 = vld [vmem:[%s3377 + $0xb8] sm:$0xf]
      %v3425 = vld [vmem:[%s3377 + $0xbc] sm:$0xf]
      %v3426 = vld [vmem:[%s3377 + $0xc0] sm:$0xf]
      %v3427 = vld [vmem:[%s3377 + $0xc4] sm:$0xf]
      %v3428 = vld [vmem:[%s3377 + $0xc8] sm:$0xf]
      %v3429 = vld [vmem:[%s3377 + $0xcc] sm:$0xf]
      %v3430 = vld [vmem:[%s3377 + $0xd0] sm:$0xf]
      %v3431 = vld [vmem:[%s3377 + $0xd4] sm:$0xf]
      %v3432 = vld [vmem:[%s3377 + $0xd8] sm:$0xf]
      %v3433 = vld [vmem:[%s3377 + $0xdc] sm:$0xf]
      %v3434 = vld [vmem:[%s3377 + $0xe0] sm:$0xf]
      %v3435 = vld [vmem:[%s3377 + $0xe4] sm:$0xf]
      %v3436 = vld [vmem:[%s3377 + $0xe8] sm:$0xf]
      %v3437 = vld [vmem:[%s3377 + $0xec] sm:$0xf]
      %v3438 = vld [vmem:[%s3377 + $0xf0] sm:$0xf]
      %v3439 = vld [vmem:[%s3377 + $0xf4] sm:$0xf]
      %v3440 = vld [vmem:[%s3377 + $0xf8] sm:$0xf]
      %v3441 = vld [vmem:[%s3377 + $0xfc] sm:$0xf]
      %v3506 = vunpack.c.l.b16 %v3378
      %v3507 = vunpack.c.l.b16 %v3379
      %v3508 = vunpack.c.l.b16 %v3380
      %v3509 = vunpack.c.l.b16 %v3381
      %v3510 = vunpack.c.l.b16 %v3382
      %v3511 = vunpack.c.l.b16 %v3383
      %v3512 = vunpack.c.l.b16 %v3384
      %v3513 = vunpack.c.l.b16 %v3385
      %v3514 = vunpack.c.l.b16 %v3386
      %v3515 = vunpack.c.l.b16 %v3387
      %v3516 = vunpack.c.l.b16 %v3388
      %v3517 = vunpack.c.l.b16 %v3389
      %v3518 = vunpack.c.l.b16 %v3390
      %v3519 = vunpack.c.l.b16 %v3391
      %v3520 = vunpack.c.l.b16 %v3392
      %v3521 = vunpack.c.l.b16 %v3393
      %v3522 = vunpack.c.l.b16 %v3394
      %v3523 = vunpack.c.l.b16 %v3395
      %v3524 = vunpack.c.l.b16 %v3396
      %v3525 = vunpack.c.l.b16 %v3397
      %v3526 = vunpack.c.l.b16 %v3398
      %v3527 = vunpack.c.l.b16 %v3399
      %v3528 = vunpack.c.l.b16 %v3400
      %v3529 = vunpack.c.l.b16 %v3401
      %v3530 = vunpack.c.l.b16 %v3402
      %v3531 = vunpack.c.l.b16 %v3403
      %v3532 = vunpack.c.l.b16 %v3404
      %v3533 = vunpack.c.l.b16 %v3405
      %v3534 = vunpack.c.l.b16 %v3406
      %v3535 = vunpack.c.l.b16 %v3407
      %v3536 = vunpack.c.l.b16 %v3408
      %v3537 = vunpack.c.l.b16 %v3409
      %v3538 = vunpack.c.l.b16 %v3410
      %v3539 = vunpack.c.l.b16 %v3411
      %v3540 = vunpack.c.l.b16 %v3412
      %v3541 = vunpack.c.l.b16 %v3413
      %v3542 = vunpack.c.l.b16 %v3414
      %v3543 = vunpack.c.l.b16 %v3415
      %v3544 = vunpack.c.l.b16 %v3416
      %v3545 = vunpack.c.l.b16 %v3417
      %v3546 = vunpack.c.l.b16 %v3418
      %v3547 = vunpack.c.l.b16 %v3419
      %v3548 = vunpack.c.l.b16 %v3420
      %v3549 = vunpack.c.l.b16 %v3421
      %v3550 = vunpack.c.l.b16 %v3422
      %v3551 = vunpack.c.l.b16 %v3423
      %v3552 = vunpack.c.l.b16 %v3424
      %v3553 = vunpack.c.l.b16 %v3425
      %v3554 = vunpack.c.l.b16 %v3426
      %v3555 = vunpack.c.l.b16 %v3427
      %v3556 = vunpack.c.l.b16 %v3428
      %v3557 = vunpack.c.l.b16 %v3429
      %v3558 = vunpack.c.l.b16 %v3430
      %v3559 = vunpack.c.l.b16 %v3431
      %v3560 = vunpack.c.l.b16 %v3432
      %v3561 = vunpack.c.l.b16 %v3433
      %v3562 = vunpack.c.l.b16 %v3434
      %v3563 = vunpack.c.l.b16 %v3435
      %v3564 = vunpack.c.l.b16 %v3436
      %v3565 = vunpack.c.l.b16 %v3437
      %v3566 = vunpack.c.l.b16 %v3438
      %v3567 = vunpack.c.l.b16 %v3439
      %v3568 = vunpack.c.l.b16 %v3440
      %v3569 = vunpack.c.l.b16 %v3441
      %v3570 = vpack.c.b16 %v3507, %v3506
      %v3571 = vpack.c.b16 %v3509, %v3508
      %v3572 = vpack.c.b16 %v3511, %v3510
      %v3573 = vpack.c.b16 %v3513, %v3512
      %v3574 = vpack.c.b16 %v3515, %v3514
      %v3575 = vpack.c.b16 %v3517, %v3516
      %v3576 = vpack.c.b16 %v3519, %v3518
      %v3577 = vpack.c.b16 %v3521, %v3520
      %v3578 = vpack.c.b16 %v3523, %v3522
      %v3579 = vpack.c.b16 %v3525, %v3524
      %v3580 = vpack.c.b16 %v3527, %v3526
      %v3581 = vpack.c.b16 %v3529, %v3528
      %v3582 = vpack.c.b16 %v3531, %v3530
      %v3583 = vpack.c.b16 %v3533, %v3532
      %v3584 = vpack.c.b16 %v3535, %v3534
      %v3585 = vpack.c.b16 %v3537, %v3536
      %v3586 = vpack.c.b16 %v3539, %v3538
      %v3587 = vpack.c.b16 %v3541, %v3540
      %v3588 = vpack.c.b16 %v3543, %v3542
      %v3589 = vpack.c.b16 %v3545, %v3544
      %v3590 = vpack.c.b16 %v3547, %v3546
      %v3591 = vpack.c.b16 %v3549, %v3548
      %v3592 = vpack.c.b16 %v3551, %v3550
      %v3593 = vpack.c.b16 %v3553, %v3552
      %v3594 = vpack.c.b16 %v3555, %v3554
      %v3595 = vpack.c.b16 %v3557, %v3556
      %v3596 = vpack.c.b16 %v3559, %v3558
      %v3597 = vpack.c.b16 %v3561, %v3560
      %v3598 = vpack.c.b16 %v3563, %v3562
      %v3599 = vpack.c.b16 %v3565, %v3564
      %v3600 = vpack.c.b16 %v3567, %v3566
      %v3601 = vpack.c.b16 %v3569, %v3568
      %3602 = vrot.lane.b32.xlu0 %v2122, 126
      %v3603 = vpop.permute.xlu0 %3602
      %3604 = vrot.lane.b32.xlu0 %v2123, 126
      %v3605 = vpop.permute.xlu0 %3604
      %v3609 = vsel %vm2126, %v3570, 0
      %v3612 = vsel %vm2126, %v3571, 0
      %v3615 = vsel %vm2126, %v3572, 0
      %v3618 = vsel %vm2126, %v3573, 0
      %v3621 = vsel %vm2126, %v3574, 0
      %v3624 = vsel %vm2126, %v3575, 0
      %v3627 = vsel %vm2126, %v3576, 0
      %v3630 = vsel %vm2126, %v3577, 0
      %v3633 = vsel %vm2126, %v3578, 0
      %v3636 = vsel %vm2126, %v3579, 0
      %v3639 = vsel %vm2126, %v3580, 0
      %v3642 = vsel %vm2126, %v3581, 0
      %v3645 = vsel %vm2126, %v3582, 0
      %v3648 = vsel %vm2126, %v3583, 0
      %v3651 = vsel %vm2126, %v3584, 0
      %v3654 = vsel %vm2126, %v3585, 0
      %v3657 = vsel %vm2126, %v3586, 0
      %v3660 = vsel %vm2126, %v3587, 0
      %v3663 = vsel %vm2126, %v3588, 0
      %v3666 = vsel %vm2126, %v3589, 0
      %v3669 = vsel %vm2126, %v3590, 0
      %v3672 = vsel %vm2126, %v3591, 0
      %v3675 = vsel %vm2126, %v3592, 0
      %v3678 = vsel %vm2126, %v3593, 0
      %v3681 = vsel %vm2126, %v3594, 0
      %v3684 = vsel %vm2126, %v3595, 0
      %v3687 = vsel %vm2126, %v3596, 0
      %v3690 = vsel %vm2126, %v3597, 0
      %v3693 = vsel %vm2126, %v3598, 0
      %v3696 = vsel %vm2126, %v3599, 0
      %v3699 = vsel %vm2126, %v3600, 0
      %v3702 = vsel %vm2126, %v3601, 0
      %3704 = vmatpush.bf16.msra.mxu0 0
      %3705 = vmatpush.bf16.msra.mxu0 0
      %3706 = vmatpush.bf16.msra.mxu0 0
      %3707 = vmatpush.bf16.msra.mxu0 0
      %3708 = vmatpush.bf16.msra.mxu0 0
      %3709 = vmatpush.bf16.msra.mxu0 0
      %3710 = vmatpush.bf16.msra.mxu0 %v3605
      %3711 = vmatpush.bf16.msra.mxu0 %v3603
      %3712 = vmatmul.bf16.gmra.mxu0 %v3609
      %v3713 = vpop.f32.mrf.mxu0
      %v3714 = vadd.f32 0.0, %v3713
      %v3715 = vpop.f32.mrf.mxu0
      %v3716 = vadd.f32 0.0, %v3715
      %3717 = vmatmul.bf16.gmra.mxu0 %v3612
      %v3718 = vpop.f32.mrf.mxu0
      %v3719 = vadd.f32 0.0, %v3718
      %v3720 = vpop.f32.mrf.mxu0
      %v3721 = vadd.f32 0.0, %v3720
      %3722 = vmatmul.bf16.gmra.mxu0 %v3615
      %v3723 = vpop.f32.mrf.mxu0
      %v3724 = vadd.f32 0.0, %v3723
      %v3725 = vpop.f32.mrf.mxu0
      %v3726 = vadd.f32 0.0, %v3725
      %3727 = vmatmul.bf16.gmra.mxu0 %v3618
      %v3728 = vpop.f32.mrf.mxu0
      %v3729 = vadd.f32 0.0, %v3728
      %v3730 = vpop.f32.mrf.mxu0
      %v3731 = vadd.f32 0.0, %v3730
      %3732 = vmatmul.bf16.gmra.mxu0 %v3621
      %v3733 = vpop.f32.mrf.mxu0
      %v3734 = vadd.f32 0.0, %v3733
      %v3735 = vpop.f32.mrf.mxu0
      %v3736 = vadd.f32 0.0, %v3735
      %3737 = vmatmul.bf16.gmra.mxu0 %v3624
      %v3738 = vpop.f32.mrf.mxu0
      %v3739 = vadd.f32 0.0, %v3738
      %v3740 = vpop.f32.mrf.mxu0
      %v3741 = vadd.f32 0.0, %v3740
      %3742 = vmatmul.bf16.gmra.mxu0 %v3627
      %v3743 = vpop.f32.mrf.mxu0
      %v3744 = vadd.f32 0.0, %v3743
      %v3745 = vpop.f32.mrf.mxu0
      %v3746 = vadd.f32 0.0, %v3745
      %3747 = vmatmul.bf16.gmra.mxu0 %v3630
      %v3748 = vpop.f32.mrf.mxu0
      %v3749 = vadd.f32 0.0, %v3748
      %v3750 = vpop.f32.mrf.mxu0
      %v3751 = vadd.f32 0.0, %v3750
      %3752 = vmatmul.bf16.gmra.mxu0 %v3633
      %v3753 = vpop.f32.mrf.mxu0
      %v3754 = vadd.f32 0.0, %v3753
      %v3755 = vpop.f32.mrf.mxu0
      %v3756 = vadd.f32 0.0, %v3755
      %3757 = vmatmul.bf16.gmra.mxu0 %v3636
      %v3758 = vpop.f32.mrf.mxu0
      %v3759 = vadd.f32 0.0, %v3758
      %v3760 = vpop.f32.mrf.mxu0
      %v3761 = vadd.f32 0.0, %v3760
      %3762 = vmatmul.bf16.gmra.mxu0 %v3639
      %v3763 = vpop.f32.mrf.mxu0
      %v3764 = vadd.f32 0.0, %v3763
      %v3765 = vpop.f32.mrf.mxu0
      %v3766 = vadd.f32 0.0, %v3765
      %3767 = vmatmul.bf16.gmra.mxu0 %v3642
      %v3768 = vpop.f32.mrf.mxu0
      %v3769 = vadd.f32 0.0, %v3768
      %v3770 = vpop.f32.mrf.mxu0
      %v3771 = vadd.f32 0.0, %v3770
      %3772 = vmatmul.bf16.gmra.mxu0 %v3645
      %v3773 = vpop.f32.mrf.mxu0
      %v3774 = vadd.f32 0.0, %v3773
      %v3775 = vpop.f32.mrf.mxu0
      %v3776 = vadd.f32 0.0, %v3775
      %3777 = vmatmul.bf16.gmra.mxu0 %v3648
      %v3778 = vpop.f32.mrf.mxu0
      %v3779 = vadd.f32 0.0, %v3778
      %v3780 = vpop.f32.mrf.mxu0
      %v3781 = vadd.f32 0.0, %v3780
      %3782 = vmatmul.bf16.gmra.mxu0 %v3651
      %v3783 = vpop.f32.mrf.mxu0
      %v3784 = vadd.f32 0.0, %v3783
      %v3785 = vpop.f32.mrf.mxu0
      %v3786 = vadd.f32 0.0, %v3785
      %3787 = vmatmul.bf16.gmra.mxu0 %v3654
      %v3788 = vpop.f32.mrf.mxu0
      %v3789 = vadd.f32 0.0, %v3788
      %v3790 = vpop.f32.mrf.mxu0
      %v3791 = vadd.f32 0.0, %v3790
      %3792 = vmatmul.bf16.gmra.mxu0 %v3657
      %v3793 = vpop.f32.mrf.mxu0
      %v3794 = vadd.f32 0.0, %v3793
      %v3795 = vpop.f32.mrf.mxu0
      %v3796 = vadd.f32 0.0, %v3795
      %3797 = vmatmul.bf16.gmra.mxu0 %v3660
      %v3798 = vpop.f32.mrf.mxu0
      %v3799 = vadd.f32 0.0, %v3798
      %v3800 = vpop.f32.mrf.mxu0
      %v3801 = vadd.f32 0.0, %v3800
      %3802 = vmatmul.bf16.gmra.mxu0 %v3663
      %v3803 = vpop.f32.mrf.mxu0
      %v3804 = vadd.f32 0.0, %v3803
      %v3805 = vpop.f32.mrf.mxu0
      %v3806 = vadd.f32 0.0, %v3805
      %3807 = vmatmul.bf16.gmra.mxu0 %v3666
      %v3808 = vpop.f32.mrf.mxu0
      %v3809 = vadd.f32 0.0, %v3808
      %v3810 = vpop.f32.mrf.mxu0
      %v3811 = vadd.f32 0.0, %v3810
      %3812 = vmatmul.bf16.gmra.mxu0 %v3669
      %v3813 = vpop.f32.mrf.mxu0
      %v3814 = vadd.f32 0.0, %v3813
      %v3815 = vpop.f32.mrf.mxu0
      %v3816 = vadd.f32 0.0, %v3815
      %3817 = vmatmul.bf16.gmra.mxu0 %v3672
      %v3818 = vpop.f32.mrf.mxu0
      %v3819 = vadd.f32 0.0, %v3818
      %v3820 = vpop.f32.mrf.mxu0
      %v3821 = vadd.f32 0.0, %v3820
      %3822 = vmatmul.bf16.gmra.mxu0 %v3675
      %v3823 = vpop.f32.mrf.mxu0
      %v3824 = vadd.f32 0.0, %v3823
      %v3825 = vpop.f32.mrf.mxu0
      %v3826 = vadd.f32 0.0, %v3825
      %3827 = vmatmul.bf16.gmra.mxu0 %v3678
      %v3828 = vpop.f32.mrf.mxu0
      %v3829 = vadd.f32 0.0, %v3828
      %v3830 = vpop.f32.mrf.mxu0
      %v3831 = vadd.f32 0.0, %v3830
      %3832 = vmatmul.bf16.gmra.mxu0 %v3681
      %v3833 = vpop.f32.mrf.mxu0
      %v3834 = vadd.f32 0.0, %v3833
      %v3835 = vpop.f32.mrf.mxu0
      %v3836 = vadd.f32 0.0, %v3835
      %3837 = vmatmul.bf16.gmra.mxu0 %v3684
      %v3838 = vpop.f32.mrf.mxu0
      %v3839 = vadd.f32 0.0, %v3838
      %v3840 = vpop.f32.mrf.mxu0
      %v3841 = vadd.f32 0.0, %v3840
      %3842 = vmatmul.bf16.gmra.mxu0 %v3687
      %v3843 = vpop.f32.mrf.mxu0
      %v3844 = vadd.f32 0.0, %v3843
      %v3845 = vpop.f32.mrf.mxu0
      %v3846 = vadd.f32 0.0, %v3845
      %3847 = vmatmul.bf16.gmra.mxu0 %v3690
      %v3848 = vpop.f32.mrf.mxu0
      %v3849 = vadd.f32 0.0, %v3848
      %v3850 = vpop.f32.mrf.mxu0
      %v3851 = vadd.f32 0.0, %v3850
      %3852 = vmatmul.bf16.gmra.mxu0 %v3693
      %v3853 = vpop.f32.mrf.mxu0
      %v3854 = vadd.f32 0.0, %v3853
      %v3855 = vpop.f32.mrf.mxu0
      %v3856 = vadd.f32 0.0, %v3855
      %3857 = vmatmul.bf16.gmra.mxu0 %v3696
      %v3858 = vpop.f32.mrf.mxu0
      %v3859 = vadd.f32 0.0, %v3858
      %v3860 = vpop.f32.mrf.mxu0
      %v3861 = vadd.f32 0.0, %v3860
      %3862 = vmatmul.bf16.gmra.mxu0 %v3699
      %v3863 = vpop.f32.mrf.mxu0
      %v3864 = vadd.f32 0.0, %v3863
      %v3865 = vpop.f32.mrf.mxu0
      %v3866 = vadd.f32 0.0, %v3865
      %3867 = vmatmul.bf16.gmra.mxu0 %v3702
      %v3868 = vpop.f32.mrf.mxu0
      %v3869 = vadd.f32 0.0, %v3868
      %v3870 = vpop.f32.mrf.mxu0
      %v3871 = vadd.f32 0.0, %v3870
      %3872 = vdwg.mxu0
      %v3873 = vadd.f32 %v3313, %v3714
      %v3874 = vadd.f32 %v3314, %v3716
      %v3875 = vadd.f32 %v3315, %v3719
      %v3876 = vadd.f32 %v3316, %v3721
      %v3877 = vadd.f32 %v3317, %v3724
      %v3878 = vadd.f32 %v3318, %v3726
      %v3879 = vadd.f32 %v3319, %v3729
      %v3880 = vadd.f32 %v3320, %v3731
      %v3881 = vadd.f32 %v3321, %v3734
      %v3882 = vadd.f32 %v3322, %v3736
      %v3883 = vadd.f32 %v3323, %v3739
      %v3884 = vadd.f32 %v3324, %v3741
      %v3885 = vadd.f32 %v3325, %v3744
      %v3886 = vadd.f32 %v3326, %v3746
      %v3887 = vadd.f32 %v3327, %v3749
      %v3888 = vadd.f32 %v3328, %v3751
      %v3889 = vadd.f32 %v3329, %v3754
      %v3890 = vadd.f32 %v3330, %v3756
      %v3891 = vadd.f32 %v3331, %v3759
      %v3892 = vadd.f32 %v3332, %v3761
      %v3893 = vadd.f32 %v3333, %v3764
      %v3894 = vadd.f32 %v3334, %v3766
      %v3895 = vadd.f32 %v3335, %v3769
      %v3896 = vadd.f32 %v3336, %v3771
      %v3897 = vadd.f32 %v3337, %v3774
      %v3898 = vadd.f32 %v3338, %v3776
      %v3899 = vadd.f32 %v3339, %v3779
      %v3900 = vadd.f32 %v3340, %v3781
      %v3901 = vadd.f32 %v3341, %v3784
      %v3902 = vadd.f32 %v3342, %v3786
      %v3903 = vadd.f32 %v3343, %v3789
      %v3904 = vadd.f32 %v3344, %v3791
      %v3905 = vadd.f32 %v3345, %v3794
      %v3906 = vadd.f32 %v3346, %v3796
      %v3907 = vadd.f32 %v3347, %v3799
      %v3908 = vadd.f32 %v3348, %v3801
      %v3909 = vadd.f32 %v3349, %v3804
      %v3910 = vadd.f32 %v3350, %v3806
      %v3911 = vadd.f32 %v3351, %v3809
      %v3912 = vadd.f32 %v3352, %v3811
      %v3913 = vadd.f32 %v3353, %v3814
      %v3914 = vadd.f32 %v3354, %v3816
      %v3915 = vadd.f32 %v3355, %v3819
      %v3916 = vadd.f32 %v3356, %v3821
      %v3917 = vadd.f32 %v3357, %v3824
      %v3918 = vadd.f32 %v3358, %v3826
      %v3919 = vadd.f32 %v3359, %v3829
      %v3920 = vadd.f32 %v3360, %v3831
      %v3921 = vadd.f32 %v3361, %v3834
      %v3922 = vadd.f32 %v3362, %v3836
      %v3923 = vadd.f32 %v3363, %v3839
      %v3924 = vadd.f32 %v3364, %v3841
      %v3925 = vadd.f32 %v3365, %v3844
      %v3926 = vadd.f32 %v3366, %v3846
      %v3927 = vadd.f32 %v3367, %v3849
      %v3928 = vadd.f32 %v3368, %v3851
      %v3929 = vadd.f32 %v3369, %v3854
      %v3930 = vadd.f32 %v3370, %v3856
      %v3931 = vadd.f32 %v3371, %v3859
      %v3932 = vadd.f32 %v3372, %v3861
      %v3933 = vadd.f32 %v3373, %v3864
      %v3934 = vadd.f32 %v3374, %v3866
      %v3935 = vadd.f32 %v3375, %v3869
      %v3936 = vadd.f32 %v3376, %v3871
      %s3937 = scalar_lea.vmem %s7, 768
      %v3938 = vld [vmem:[%s3937] sm:$0xf]
      %v3939 = vld [vmem:[%s3937 + $0x4] sm:$0xf]
      %v3940 = vld [vmem:[%s3937 + $0x8] sm:$0xf]
      %v3941 = vld [vmem:[%s3937 + $0xc] sm:$0xf]
      %v3942 = vld [vmem:[%s3937 + $0x10] sm:$0xf]
      %v3943 = vld [vmem:[%s3937 + $0x14] sm:$0xf]
      %v3944 = vld [vmem:[%s3937 + $0x18] sm:$0xf]
      %v3945 = vld [vmem:[%s3937 + $0x1c] sm:$0xf]
      %v3946 = vld [vmem:[%s3937 + $0x20] sm:$0xf]
      %v3947 = vld [vmem:[%s3937 + $0x24] sm:$0xf]
      %v3948 = vld [vmem:[%s3937 + $0x28] sm:$0xf]
      %v3949 = vld [vmem:[%s3937 + $0x2c] sm:$0xf]
      %v3950 = vld [vmem:[%s3937 + $0x30] sm:$0xf]
      %v3951 = vld [vmem:[%s3937 + $0x34] sm:$0xf]
      %v3952 = vld [vmem:[%s3937 + $0x38] sm:$0xf]
      %v3953 = vld [vmem:[%s3937 + $0x3c] sm:$0xf]
      %v3954 = vld [vmem:[%s3937 + $0x40] sm:$0xf]
      %v3955 = vld [vmem:[%s3937 + $0x44] sm:$0xf]
      %v3956 = vld [vmem:[%s3937 + $0x48] sm:$0xf]
      %v3957 = vld [vmem:[%s3937 + $0x4c] sm:$0xf]
      %v3958 = vld [vmem:[%s3937 + $0x50] sm:$0xf]
      %v3959 = vld [vmem:[%s3937 + $0x54] sm:$0xf]
      %v3960 = vld [vmem:[%s3937 + $0x58] sm:$0xf]
      %v3961 = vld [vmem:[%s3937 + $0x5c] sm:$0xf]
      %v3962 = vld [vmem:[%s3937 + $0x60] sm:$0xf]
      %v3963 = vld [vmem:[%s3937 + $0x64] sm:$0xf]
      %v3964 = vld [vmem:[%s3937 + $0x68] sm:$0xf]
      %v3965 = vld [vmem:[%s3937 + $0x6c] sm:$0xf]
      %v3966 = vld [vmem:[%s3937 + $0x70] sm:$0xf]
      %v3967 = vld [vmem:[%s3937 + $0x74] sm:$0xf]
      %v3968 = vld [vmem:[%s3937 + $0x78] sm:$0xf]
      %v3969 = vld [vmem:[%s3937 + $0x7c] sm:$0xf]
      %v3970 = vld [vmem:[%s3937 + $0x80] sm:$0xf]
      %v3971 = vld [vmem:[%s3937 + $0x84] sm:$0xf]
      %v3972 = vld [vmem:[%s3937 + $0x88] sm:$0xf]
      %v3973 = vld [vmem:[%s3937 + $0x8c] sm:$0xf]
      %v3974 = vld [vmem:[%s3937 + $0x90] sm:$0xf]
      %v3975 = vld [vmem:[%s3937 + $0x94] sm:$0xf]
      %v3976 = vld [vmem:[%s3937 + $0x98] sm:$0xf]
      %v3977 = vld [vmem:[%s3937 + $0x9c] sm:$0xf]
      %v3978 = vld [vmem:[%s3937 + $0xa0] sm:$0xf]
      %v3979 = vld [vmem:[%s3937 + $0xa4] sm:$0xf]
      %v3980 = vld [vmem:[%s3937 + $0xa8] sm:$0xf]
      %v3981 = vld [vmem:[%s3937 + $0xac] sm:$0xf]
      %v3982 = vld [vmem:[%s3937 + $0xb0] sm:$0xf]
      %v3983 = vld [vmem:[%s3937 + $0xb4] sm:$0xf]
      %v3984 = vld [vmem:[%s3937 + $0xb8] sm:$0xf]
      %v3985 = vld [vmem:[%s3937 + $0xbc] sm:$0xf]
      %v3986 = vld [vmem:[%s3937 + $0xc0] sm:$0xf]
      %v3987 = vld [vmem:[%s3937 + $0xc4] sm:$0xf]
      %v3988 = vld [vmem:[%s3937 + $0xc8] sm:$0xf]
      %v3989 = vld [vmem:[%s3937 + $0xcc] sm:$0xf]
      %v3990 = vld [vmem:[%s3937 + $0xd0] sm:$0xf]
      %v3991 = vld [vmem:[%s3937 + $0xd4] sm:$0xf]
      %v3992 = vld [vmem:[%s3937 + $0xd8] sm:$0xf]
      %v3993 = vld [vmem:[%s3937 + $0xdc] sm:$0xf]
      %v3994 = vld [vmem:[%s3937 + $0xe0] sm:$0xf]
      %v3995 = vld [vmem:[%s3937 + $0xe4] sm:$0xf]
      %v3996 = vld [vmem:[%s3937 + $0xe8] sm:$0xf]
      %v3997 = vld [vmem:[%s3937 + $0xec] sm:$0xf]
      %v3998 = vld [vmem:[%s3937 + $0xf0] sm:$0xf]
      %v3999 = vld [vmem:[%s3937 + $0xf4] sm:$0xf]
      %v4000 = vld [vmem:[%s3937 + $0xf8] sm:$0xf]
      %v4001 = vld [vmem:[%s3937 + $0xfc] sm:$0xf]
      %v4066 = vunpack.c.l.b16 %v3938
      %v4067 = vunpack.c.l.b16 %v3939
      %v4068 = vunpack.c.l.b16 %v3940
      %v4069 = vunpack.c.l.b16 %v3941
      %v4070 = vunpack.c.l.b16 %v3942
      %v4071 = vunpack.c.l.b16 %v3943
      %v4072 = vunpack.c.l.b16 %v3944
      %v4073 = vunpack.c.l.b16 %v3945
      %v4074 = vunpack.c.l.b16 %v3946
      %v4075 = vunpack.c.l.b16 %v3947
      %v4076 = vunpack.c.l.b16 %v3948
      %v4077 = vunpack.c.l.b16 %v3949
      %v4078 = vunpack.c.l.b16 %v3950
      %v4079 = vunpack.c.l.b16 %v3951
      %v4080 = vunpack.c.l.b16 %v3952
      %v4081 = vunpack.c.l.b16 %v3953
      %v4082 = vunpack.c.l.b16 %v3954
      %v4083 = vunpack.c.l.b16 %v3955
      %v4084 = vunpack.c.l.b16 %v3956
      %v4085 = vunpack.c.l.b16 %v3957
      %v4086 = vunpack.c.l.b16 %v3958
      %v4087 = vunpack.c.l.b16 %v3959
      %v4088 = vunpack.c.l.b16 %v3960
      %v4089 = vunpack.c.l.b16 %v3961
      %v4090 = vunpack.c.l.b16 %v3962
      %v4091 = vunpack.c.l.b16 %v3963
      %v4092 = vunpack.c.l.b16 %v3964
      %v4093 = vunpack.c.l.b16 %v3965
      %v4094 = vunpack.c.l.b16 %v3966
      %v4095 = vunpack.c.l.b16 %v3967
      %v4096 = vunpack.c.l.b16 %v3968
      %v4097 = vunpack.c.l.b16 %v3969
      %v4098 = vunpack.c.l.b16 %v3970
      %v4099 = vunpack.c.l.b16 %v3971
      %v4100 = vunpack.c.l.b16 %v3972
      %v4101 = vunpack.c.l.b16 %v3973
      %v4102 = vunpack.c.l.b16 %v3974
      %v4103 = vunpack.c.l.b16 %v3975
      %v4104 = vunpack.c.l.b16 %v3976
      %v4105 = vunpack.c.l.b16 %v3977
      %v4106 = vunpack.c.l.b16 %v3978
      %v4107 = vunpack.c.l.b16 %v3979
      %v4108 = vunpack.c.l.b16 %v3980
      %v4109 = vunpack.c.l.b16 %v3981
      %v4110 = vunpack.c.l.b16 %v3982
      %v4111 = vunpack.c.l.b16 %v3983
      %v4112 = vunpack.c.l.b16 %v3984
      %v4113 = vunpack.c.l.b16 %v3985
      %v4114 = vunpack.c.l.b16 %v3986
      %v4115 = vunpack.c.l.b16 %v3987
      %v4116 = vunpack.c.l.b16 %v3988
      %v4117 = vunpack.c.l.b16 %v3989
      %v4118 = vunpack.c.l.b16 %v3990
      %v4119 = vunpack.c.l.b16 %v3991
      %v4120 = vunpack.c.l.b16 %v3992
      %v4121 = vunpack.c.l.b16 %v3993
      %v4122 = vunpack.c.l.b16 %v3994
      %v4123 = vunpack.c.l.b16 %v3995
      %v4124 = vunpack.c.l.b16 %v3996
      %v4125 = vunpack.c.l.b16 %v3997
      %v4126 = vunpack.c.l.b16 %v3998
      %v4127 = vunpack.c.l.b16 %v3999
      %v4128 = vunpack.c.l.b16 %v4000
      %v4129 = vunpack.c.l.b16 %v4001
      %v4130 = vpack.c.b16 %v4067, %v4066
      %v4131 = vpack.c.b16 %v4069, %v4068
      %v4132 = vpack.c.b16 %v4071, %v4070
      %v4133 = vpack.c.b16 %v4073, %v4072
      %v4134 = vpack.c.b16 %v4075, %v4074
      %v4135 = vpack.c.b16 %v4077, %v4076
      %v4136 = vpack.c.b16 %v4079, %v4078
      %v4137 = vpack.c.b16 %v4081, %v4080
      %v4138 = vpack.c.b16 %v4083, %v4082
      %v4139 = vpack.c.b16 %v4085, %v4084
      %v4140 = vpack.c.b16 %v4087, %v4086
      %v4141 = vpack.c.b16 %v4089, %v4088
      %v4142 = vpack.c.b16 %v4091, %v4090
      %v4143 = vpack.c.b16 %v4093, %v4092
      %v4144 = vpack.c.b16 %v4095, %v4094
      %v4145 = vpack.c.b16 %v4097, %v4096
      %v4146 = vpack.c.b16 %v4099, %v4098
      %v4147 = vpack.c.b16 %v4101, %v4100
      %v4148 = vpack.c.b16 %v4103, %v4102
      %v4149 = vpack.c.b16 %v4105, %v4104
      %v4150 = vpack.c.b16 %v4107, %v4106
      %v4151 = vpack.c.b16 %v4109, %v4108
      %v4152 = vpack.c.b16 %v4111, %v4110
      %v4153 = vpack.c.b16 %v4113, %v4112
      %v4154 = vpack.c.b16 %v4115, %v4114
      %v4155 = vpack.c.b16 %v4117, %v4116
      %v4156 = vpack.c.b16 %v4119, %v4118
      %v4157 = vpack.c.b16 %v4121, %v4120
      %v4158 = vpack.c.b16 %v4123, %v4122
      %v4159 = vpack.c.b16 %v4125, %v4124
      %v4160 = vpack.c.b16 %v4127, %v4126
      %v4161 = vpack.c.b16 %v4129, %v4128
      %4162 = vrot.lane.b32.xlu0 %v2122, 125
      %v4163 = vpop.permute.xlu0 %4162
      %4164 = vrot.lane.b32.xlu0 %v2123, 125
      %v4165 = vpop.permute.xlu0 %4164
      %v4169 = vsel %vm2126, %v4130, 0
      %v4172 = vsel %vm2126, %v4131, 0
      %v4175 = vsel %vm2126, %v4132, 0
      %v4178 = vsel %vm2126, %v4133, 0
      %v4181 = vsel %vm2126, %v4134, 0
      %v4184 = vsel %vm2126, %v4135, 0
      %v4187 = vsel %vm2126, %v4136, 0
      %v4190 = vsel %vm2126, %v4137, 0
      %v4193 = vsel %vm2126, %v4138, 0
      %v4196 = vsel %vm2126, %v4139, 0
      %v4199 = vsel %vm2126, %v4140, 0
      %v4202 = vsel %vm2126, %v4141, 0
      %v4205 = vsel %vm2126, %v4142, 0
      %v4208 = vsel %vm2126, %v4143, 0
      %v4211 = vsel %vm2126, %v4144, 0
      %v4214 = vsel %vm2126, %v4145, 0
      %v4217 = vsel %vm2126, %v4146, 0
      %v4220 = vsel %vm2126, %v4147, 0
      %v4223 = vsel %vm2126, %v4148, 0
      %v4226 = vsel %vm2126, %v4149, 0
      %v4229 = vsel %vm2126, %v4150, 0
      %v4232 = vsel %vm2126, %v4151, 0
      %v4235 = vsel %vm2126, %v4152, 0
      %v4238 = vsel %vm2126, %v4153, 0
      %v4241 = vsel %vm2126, %v4154, 0
      %v4244 = vsel %vm2126, %v4155, 0
      %v4247 = vsel %vm2126, %v4156, 0
      %v4250 = vsel %vm2126, %v4157, 0
      %v4253 = vsel %vm2126, %v4158, 0
      %v4256 = vsel %vm2126, %v4159, 0
      %v4259 = vsel %vm2126, %v4160, 0
      %v4262 = vsel %vm2126, %v4161, 0
      %4264 = vmatpush.bf16.msra.mxu0 0
      %4265 = vmatpush.bf16.msra.mxu0 0
      %4266 = vmatpush.bf16.msra.mxu0 0
      %4267 = vmatpush.bf16.msra.mxu0 0
      %4268 = vmatpush.bf16.msra.mxu0 0
      %4269 = vmatpush.bf16.msra.mxu0 0
      %4270 = vmatpush.bf16.msra.mxu0 %v4165
      %4271 = vmatpush.bf16.msra.mxu0 %v4163
      %4272 = vmatmul.bf16.gmra.mxu0 %v4169
      %v4273 = vpop.f32.mrf.mxu0
      %v4274 = vadd.f32 0.0, %v4273
      %v4275 = vpop.f32.mrf.mxu0
      %v4276 = vadd.f32 0.0, %v4275
      %4277 = vmatmul.bf16.gmra.mxu0 %v4172
      %v4278 = vpop.f32.mrf.mxu0
      %v4279 = vadd.f32 0.0, %v4278
      %v4280 = vpop.f32.mrf.mxu0
      %v4281 = vadd.f32 0.0, %v4280
      %4282 = vmatmul.bf16.gmra.mxu0 %v4175
      %v4283 = vpop.f32.mrf.mxu0
      %v4284 = vadd.f32 0.0, %v4283
      %v4285 = vpop.f32.mrf.mxu0
      %v4286 = vadd.f32 0.0, %v4285
      %4287 = vmatmul.bf16.gmra.mxu0 %v4178
      %v4288 = vpop.f32.mrf.mxu0
      %v4289 = vadd.f32 0.0, %v4288
      %v4290 = vpop.f32.mrf.mxu0
      %v4291 = vadd.f32 0.0, %v4290
      %4292 = vmatmul.bf16.gmra.mxu0 %v4181
      %v4293 = vpop.f32.mrf.mxu0
      %v4294 = vadd.f32 0.0, %v4293
      %v4295 = vpop.f32.mrf.mxu0
      %v4296 = vadd.f32 0.0, %v4295
      %4297 = vmatmul.bf16.gmra.mxu0 %v4184
      %v4298 = vpop.f32.mrf.mxu0
      %v4299 = vadd.f32 0.0, %v4298
      %v4300 = vpop.f32.mrf.mxu0
      %v4301 = vadd.f32 0.0, %v4300
      %4302 = vmatmul.bf16.gmra.mxu0 %v4187
      %v4303 = vpop.f32.mrf.mxu0
      %v4304 = vadd.f32 0.0, %v4303
      %v4305 = vpop.f32.mrf.mxu0
      %v4306 = vadd.f32 0.0, %v4305
      %4307 = vmatmul.bf16.gmra.mxu0 %v4190
      %v4308 = vpop.f32.mrf.mxu0
      %v4309 = vadd.f32 0.0, %v4308
      %v4310 = vpop.f32.mrf.mxu0
      %v4311 = vadd.f32 0.0, %v4310
      %4312 = vmatmul.bf16.gmra.mxu0 %v4193
      %v4313 = vpop.f32.mrf.mxu0
      %v4314 = vadd.f32 0.0, %v4313
      %v4315 = vpop.f32.mrf.mxu0
      %v4316 = vadd.f32 0.0, %v4315
      %4317 = vmatmul.bf16.gmra.mxu0 %v4196
      %v4318 = vpop.f32.mrf.mxu0
      %v4319 = vadd.f32 0.0, %v4318
      %v4320 = vpop.f32.mrf.mxu0
      %v4321 = vadd.f32 0.0, %v4320
      %4322 = vmatmul.bf16.gmra.mxu0 %v4199
      %v4323 = vpop.f32.mrf.mxu0
      %v4324 = vadd.f32 0.0, %v4323
      %v4325 = vpop.f32.mrf.mxu0
      %v4326 = vadd.f32 0.0, %v4325
      %4327 = vmatmul.bf16.gmra.mxu0 %v4202
      %v4328 = vpop.f32.mrf.mxu0
      %v4329 = vadd.f32 0.0, %v4328
      %v4330 = vpop.f32.mrf.mxu0
      %v4331 = vadd.f32 0.0, %v4330
      %4332 = vmatmul.bf16.gmra.mxu0 %v4205
      %v4333 = vpop.f32.mrf.mxu0
      %v4334 = vadd.f32 0.0, %v4333
      %v4335 = vpop.f32.mrf.mxu0
      %v4336 = vadd.f32 0.0, %v4335
      %4337 = vmatmul.bf16.gmra.mxu0 %v4208
      %v4338 = vpop.f32.mrf.mxu0
      %v4339 = vadd.f32 0.0, %v4338
      %v4340 = vpop.f32.mrf.mxu0
      %v4341 = vadd.f32 0.0, %v4340
      %4342 = vmatmul.bf16.gmra.mxu0 %v4211
      %v4343 = vpop.f32.mrf.mxu0
      %v4344 = vadd.f32 0.0, %v4343
      %v4345 = vpop.f32.mrf.mxu0
      %v4346 = vadd.f32 0.0, %v4345
      %4347 = vmatmul.bf16.gmra.mxu0 %v4214
      %v4348 = vpop.f32.mrf.mxu0
      %v4349 = vadd.f32 0.0, %v4348
      %v4350 = vpop.f32.mrf.mxu0
      %v4351 = vadd.f32 0.0, %v4350
      %4352 = vmatmul.bf16.gmra.mxu0 %v4217
      %v4353 = vpop.f32.mrf.mxu0
      %v4354 = vadd.f32 0.0, %v4353
      %v4355 = vpop.f32.mrf.mxu0
      %v4356 = vadd.f32 0.0, %v4355
      %4357 = vmatmul.bf16.gmra.mxu0 %v4220
      %v4358 = vpop.f32.mrf.mxu0
      %v4359 = vadd.f32 0.0, %v4358
      %v4360 = vpop.f32.mrf.mxu0
      %v4361 = vadd.f32 0.0, %v4360
      %4362 = vmatmul.bf16.gmra.mxu0 %v4223
      %v4363 = vpop.f32.mrf.mxu0
      %v4364 = vadd.f32 0.0, %v4363
      %v4365 = vpop.f32.mrf.mxu0
      %v4366 = vadd.f32 0.0, %v4365
      %4367 = vmatmul.bf16.gmra.mxu0 %v4226
      %v4368 = vpop.f32.mrf.mxu0
      %v4369 = vadd.f32 0.0, %v4368
      %v4370 = vpop.f32.mrf.mxu0
      %v4371 = vadd.f32 0.0, %v4370
      %4372 = vmatmul.bf16.gmra.mxu0 %v4229
      %v4373 = vpop.f32.mrf.mxu0
      %v4374 = vadd.f32 0.0, %v4373
      %v4375 = vpop.f32.mrf.mxu0
      %v4376 = vadd.f32 0.0, %v4375
      %4377 = vmatmul.bf16.gmra.mxu0 %v4232
      %v4378 = vpop.f32.mrf.mxu0
      %v4379 = vadd.f32 0.0, %v4378
      %v4380 = vpop.f32.mrf.mxu0
      %v4381 = vadd.f32 0.0, %v4380
      %4382 = vmatmul.bf16.gmra.mxu0 %v4235
      %v4383 = vpop.f32.mrf.mxu0
      %v4384 = vadd.f32 0.0, %v4383
      %v4385 = vpop.f32.mrf.mxu0
      %v4386 = vadd.f32 0.0, %v4385
      %4387 = vmatmul.bf16.gmra.mxu0 %v4238
      %v4388 = vpop.f32.mrf.mxu0
      %v4389 = vadd.f32 0.0, %v4388
      %v4390 = vpop.f32.mrf.mxu0
      %v4391 = vadd.f32 0.0, %v4390
      %4392 = vmatmul.bf16.gmra.mxu0 %v4241
      %v4393 = vpop.f32.mrf.mxu0
      %v4394 = vadd.f32 0.0, %v4393
      %v4395 = vpop.f32.mrf.mxu0
      %v4396 = vadd.f32 0.0, %v4395
      %4397 = vmatmul.bf16.gmra.mxu0 %v4244
      %v4398 = vpop.f32.mrf.mxu0
      %v4399 = vadd.f32 0.0, %v4398
      %v4400 = vpop.f32.mrf.mxu0
      %v4401 = vadd.f32 0.0, %v4400
      %4402 = vmatmul.bf16.gmra.mxu0 %v4247
      %v4403 = vpop.f32.mrf.mxu0
      %v4404 = vadd.f32 0.0, %v4403
      %v4405 = vpop.f32.mrf.mxu0
      %v4406 = vadd.f32 0.0, %v4405
      %4407 = vmatmul.bf16.gmra.mxu0 %v4250
      %v4408 = vpop.f32.mrf.mxu0
      %v4409 = vadd.f32 0.0, %v4408
      %v4410 = vpop.f32.mrf.mxu0
      %v4411 = vadd.f32 0.0, %v4410
      %4412 = vmatmul.bf16.gmra.mxu0 %v4253
      %v4413 = vpop.f32.mrf.mxu0
      %v4414 = vadd.f32 0.0, %v4413
      %v4415 = vpop.f32.mrf.mxu0
      %v4416 = vadd.f32 0.0, %v4415
      %4417 = vmatmul.bf16.gmra.mxu0 %v4256
      %v4418 = vpop.f32.mrf.mxu0
      %v4419 = vadd.f32 0.0, %v4418
      %v4420 = vpop.f32.mrf.mxu0
      %v4421 = vadd.f32 0.0, %v4420
      %4422 = vmatmul.bf16.gmra.mxu0 %v4259
      %v4423 = vpop.f32.mrf.mxu0
      %v4424 = vadd.f32 0.0, %v4423
      %v4425 = vpop.f32.mrf.mxu0
      %v4426 = vadd.f32 0.0, %v4425
      %4427 = vmatmul.bf16.gmra.mxu0 %v4262
      %v4428 = vpop.f32.mrf.mxu0
      %v4429 = vadd.f32 0.0, %v4428
      %v4430 = vpop.f32.mrf.mxu0
      %v4431 = vadd.f32 0.0, %v4430
      %4432 = vdwg.mxu0
      %v4433 = vadd.f32 %v3873, %v4274
      %v4434 = vadd.f32 %v3874, %v4276
      %v4435 = vadd.f32 %v3875, %v4279
      %v4436 = vadd.f32 %v3876, %v4281
      %v4437 = vadd.f32 %v3877, %v4284
      %v4438 = vadd.f32 %v3878, %v4286
      %v4439 = vadd.f32 %v3879, %v4289
      %v4440 = vadd.f32 %v3880, %v4291
      %v4441 = vadd.f32 %v3881, %v4294
      %v4442 = vadd.f32 %v3882, %v4296
      %v4443 = vadd.f32 %v3883, %v4299
      %v4444 = vadd.f32 %v3884, %v4301
      %v4445 = vadd.f32 %v3885, %v4304
      %v4446 = vadd.f32 %v3886, %v4306
      %v4447 = vadd.f32 %v3887, %v4309
      %v4448 = vadd.f32 %v3888, %v4311
      %v4449 = vadd.f32 %v3889, %v4314
      %v4450 = vadd.f32 %v3890, %v4316
      %v4451 = vadd.f32 %v3891, %v4319
      %v4452 = vadd.f32 %v3892, %v4321
      %v4453 = vadd.f32 %v3893, %v4324
      %v4454 = vadd.f32 %v3894, %v4326
      %v4455 = vadd.f32 %v3895, %v4329
      %v4456 = vadd.f32 %v3896, %v4331
      %v4457 = vadd.f32 %v3897, %v4334
      %v4458 = vadd.f32 %v3898, %v4336
      %v4459 = vadd.f32 %v3899, %v4339
      %v4460 = vadd.f32 %v3900, %v4341
      %v4461 = vadd.f32 %v3901, %v4344
      %v4462 = vadd.f32 %v3902, %v4346
      %v4463 = vadd.f32 %v3903, %v4349
      %v4464 = vadd.f32 %v3904, %v4351
      %v4465 = vadd.f32 %v3905, %v4354
      %v4466 = vadd.f32 %v3906, %v4356
      %v4467 = vadd.f32 %v3907, %v4359
      %v4468 = vadd.f32 %v3908, %v4361
      %v4469 = vadd.f32 %v3909, %v4364
      %v4470 = vadd.f32 %v3910, %v4366
      %v4471 = vadd.f32 %v3911, %v4369
      %v4472 = vadd.f32 %v3912, %v4371
      %v4473 = vadd.f32 %v3913, %v4374
      %v4474 = vadd.f32 %v3914, %v4376
      %v4475 = vadd.f32 %v3915, %v4379
      %v4476 = vadd.f32 %v3916, %v4381
      %v4477 = vadd.f32 %v3917, %v4384
      %v4478 = vadd.f32 %v3918, %v4386
      %v4479 = vadd.f32 %v3919, %v4389
      %v4480 = vadd.f32 %v3920, %v4391
      %v4481 = vadd.f32 %v3921, %v4394
      %v4482 = vadd.f32 %v3922, %v4396
      %v4483 = vadd.f32 %v3923, %v4399
      %v4484 = vadd.f32 %v3924, %v4401
      %v4485 = vadd.f32 %v3925, %v4404
      %v4486 = vadd.f32 %v3926, %v4406
      %v4487 = vadd.f32 %v3927, %v4409
      %v4488 = vadd.f32 %v3928, %v4411
      %v4489 = vadd.f32 %v3929, %v4414
      %v4490 = vadd.f32 %v3930, %v4416
      %v4491 = vadd.f32 %v3931, %v4419
      %v4492 = vadd.f32 %v3932, %v4421
      %v4493 = vadd.f32 %v3933, %v4424
      %v4494 = vadd.f32 %v3934, %v4426
      %v4495 = vadd.f32 %v3935, %v4429
      %v4496 = vadd.f32 %v3936, %v4431
      %v4497 = vld [vmem:[%s8] sm:$0xff]
      %v4498 = vld [vmem:[%s8 + $0x8] sm:$0xff]
      %v4499 = vld [vmem:[%s8 + $0x10] sm:$0xff]
      %v4500 = vld [vmem:[%s8 + $0x18] sm:$0xff]
      %v4501 = vld [vmem:[%s8 + $0x20] sm:$0xff]
      %v4502 = vld [vmem:[%s8 + $0x28] sm:$0xff]
      %v4503 = vld [vmem:[%s8 + $0x30] sm:$0xff]
      %v4504 = vld [vmem:[%s8 + $0x38] sm:$0xff]
      %v4505 = vld [vmem:[%s8 + $0x40] sm:$0xff]
      %v4506 = vld [vmem:[%s8 + $0x48] sm:$0xff]
      %v4507 = vld [vmem:[%s8 + $0x50] sm:$0xff]
      %v4508 = vld [vmem:[%s8 + $0x58] sm:$0xff]
      %v4509 = vld [vmem:[%s8 + $0x60] sm:$0xff]
      %v4510 = vld [vmem:[%s8 + $0x68] sm:$0xff]
      %v4511 = vld [vmem:[%s8 + $0x70] sm:$0xff]
      %v4512 = vld [vmem:[%s8 + $0x78] sm:$0xff]
      %v4513 = vld [vmem:[%s8 + $0x80] sm:$0xff]
      %v4514 = vld [vmem:[%s8 + $0x88] sm:$0xff]
      %v4515 = vld [vmem:[%s8 + $0x90] sm:$0xff]
      %v4516 = vld [vmem:[%s8 + $0x98] sm:$0xff]
      %v4517 = vld [vmem:[%s8 + $0xa0] sm:$0xff]
      %v4518 = vld [vmem:[%s8 + $0xa8] sm:$0xff]
      %v4519 = vld [vmem:[%s8 + $0xb0] sm:$0xff]
      %v4520 = vld [vmem:[%s8 + $0xb8] sm:$0xff]
      %v4521 = vld [vmem:[%s8 + $0xc0] sm:$0xff]
      %v4522 = vld [vmem:[%s8 + $0xc8] sm:$0xff]
      %v4523 = vld [vmem:[%s8 + $0xd0] sm:$0xff]
      %v4524 = vld [vmem:[%s8 + $0xd8] sm:$0xff]
      %v4525 = vld [vmem:[%s8 + $0xe0] sm:$0xff]
      %v4526 = vld [vmem:[%s8 + $0xe8] sm:$0xff]
      %v4527 = vld [vmem:[%s8 + $0xf0] sm:$0xff]
      %v4528 = vld [vmem:[%s8 + $0xf8] sm:$0xff]
      %v4529 = vld [vmem:[%s8 + $0x100] sm:$0xff]
      %v4530 = vld [vmem:[%s8 + $0x108] sm:$0xff]
      %v4531 = vld [vmem:[%s8 + $0x110] sm:$0xff]
      %v4532 = vld [vmem:[%s8 + $0x118] sm:$0xff]
      %v4533 = vld [vmem:[%s8 + $0x120] sm:$0xff]
      %v4534 = vld [vmem:[%s8 + $0x128] sm:$0xff]
      %v4535 = vld [vmem:[%s8 + $0x130] sm:$0xff]
      %v4536 = vld [vmem:[%s8 + $0x138] sm:$0xff]
      %v4537 = vld [vmem:[%s8 + $0x140] sm:$0xff]
      %v4538 = vld [vmem:[%s8 + $0x148] sm:$0xff]
      %v4539 = vld [vmem:[%s8 + $0x150] sm:$0xff]
      %v4540 = vld [vmem:[%s8 + $0x158] sm:$0xff]
      %v4541 = vld [vmem:[%s8 + $0x160] sm:$0xff]
      %v4542 = vld [vmem:[%s8 + $0x168] sm:$0xff]
      %v4543 = vld [vmem:[%s8 + $0x170] sm:$0xff]
      %v4544 = vld [vmem:[%s8 + $0x178] sm:$0xff]
      %v4545 = vld [vmem:[%s8 + $0x180] sm:$0xff]
      %v4546 = vld [vmem:[%s8 + $0x188] sm:$0xff]
      %v4547 = vld [vmem:[%s8 + $0x190] sm:$0xff]
      %v4548 = vld [vmem:[%s8 + $0x198] sm:$0xff]
      %v4549 = vld [vmem:[%s8 + $0x1a0] sm:$0xff]
      %v4550 = vld [vmem:[%s8 + $0x1a8] sm:$0xff]
      %v4551 = vld [vmem:[%s8 + $0x1b0] sm:$0xff]
      %v4552 = vld [vmem:[%s8 + $0x1b8] sm:$0xff]
      %v4553 = vld [vmem:[%s8 + $0x1c0] sm:$0xff]
      %v4554 = vld [vmem:[%s8 + $0x1c8] sm:$0xff]
      %v4555 = vld [vmem:[%s8 + $0x1d0] sm:$0xff]
      %v4556 = vld [vmem:[%s8 + $0x1d8] sm:$0xff]
      %v4557 = vld [vmem:[%s8 + $0x1e0] sm:$0xff]
      %v4558 = vld [vmem:[%s8 + $0x1e8] sm:$0xff]
      %v4559 = vld [vmem:[%s8 + $0x1f0] sm:$0xff]
      %v4560 = vld [vmem:[%s8 + $0x1f8] sm:$0xff]
      %v4561 = vadd.f32 %v4433, %v4497
      %v4562 = vadd.f32 %v4434, %v4498
      %v4563 = vadd.f32 %v4435, %v4499
      %v4564 = vadd.f32 %v4436, %v4500
      %v4565 = vadd.f32 %v4437, %v4501
      %v4566 = vadd.f32 %v4438, %v4502
      %v4567 = vadd.f32 %v4439, %v4503
      %v4568 = vadd.f32 %v4440, %v4504
      %v4569 = vadd.f32 %v4441, %v4505
      %v4570 = vadd.f32 %v4442, %v4506
      %v4571 = vadd.f32 %v4443, %v4507
      %v4572 = vadd.f32 %v4444, %v4508
      %v4573 = vadd.f32 %v4445, %v4509
      %v4574 = vadd.f32 %v4446, %v4510
      %v4575 = vadd.f32 %v4447, %v4511
      %v4576 = vadd.f32 %v4448, %v4512
      %v4577 = vadd.f32 %v4449, %v4513
      %v4578 = vadd.f32 %v4450, %v4514
      %v4579 = vadd.f32 %v4451, %v4515
      %v4580 = vadd.f32 %v4452, %v4516
      %v4581 = vadd.f32 %v4453, %v4517
      %v4582 = vadd.f32 %v4454, %v4518
      %v4583 = vadd.f32 %v4455, %v4519
      %v4584 = vadd.f32 %v4456, %v4520
      %v4585 = vadd.f32 %v4457, %v4521
      %v4586 = vadd.f32 %v4458, %v4522
      %v4587 = vadd.f32 %v4459, %v4523
      %v4588 = vadd.f32 %v4460, %v4524
      %v4589 = vadd.f32 %v4461, %v4525
      %v4590 = vadd.f32 %v4462, %v4526
      %v4591 = vadd.f32 %v4463, %v4527
      %v4592 = vadd.f32 %v4464, %v4528
      %v4593 = vadd.f32 %v4465, %v4529
      %v4594 = vadd.f32 %v4466, %v4530
      %v4595 = vadd.f32 %v4467, %v4531
      %v4596 = vadd.f32 %v4468, %v4532
      %v4597 = vadd.f32 %v4469, %v4533
      %v4598 = vadd.f32 %v4470, %v4534
      %v4599 = vadd.f32 %v4471, %v4535
      %v4600 = vadd.f32 %v4472, %v4536
      %v4601 = vadd.f32 %v4473, %v4537
      %v4602 = vadd.f32 %v4474, %v4538
      %v4603 = vadd.f32 %v4475, %v4539
      %v4604 = vadd.f32 %v4476, %v4540
      %v4605 = vadd.f32 %v4477, %v4541
      %v4606 = vadd.f32 %v4478, %v4542
      %v4607 = vadd.f32 %v4479, %v4543
      %v4608 = vadd.f32 %v4480, %v4544
      %v4609 = vadd.f32 %v4481, %v4545
      %v4610 = vadd.f32 %v4482, %v4546
      %v4611 = vadd.f32 %v4483, %v4547
      %v4612 = vadd.f32 %v4484, %v4548
      %v4613 = vadd.f32 %v4485, %v4549
      %v4614 = vadd.f32 %v4486, %v4550
      %v4615 = vadd.f32 %v4487, %v4551
      %v4616 = vadd.f32 %v4488, %v4552
      %v4617 = vadd.f32 %v4489, %v4553
      %v4618 = vadd.f32 %v4490, %v4554
      %v4619 = vadd.f32 %v4491, %v4555
      %v4620 = vadd.f32 %v4492, %v4556
      %v4621 = vadd.f32 %v4493, %v4557
      %v4622 = vadd.f32 %v4494, %v4558
      %v4623 = vadd.f32 %v4495, %v4559
      %v4624 = vadd.f32 %v4496, %v4560
      %v4625 = vmax.f32 %v4561, 0.0
      %v4626 = vmax.f32 %v4562, 0.0
      %v4627 = vmax.f32 %v4563, 0.0
      %v4628 = vmax.f32 %v4564, 0.0
      %v4629 = vmax.f32 %v4565, 0.0
      %v4630 = vmax.f32 %v4566, 0.0
      %v4631 = vmax.f32 %v4567, 0.0
      %v4632 = vmax.f32 %v4568, 0.0
      %v4633 = vmax.f32 %v4569, 0.0
      %v4634 = vmax.f32 %v4570, 0.0
      %v4635 = vmax.f32 %v4571, 0.0
      %v4636 = vmax.f32 %v4572, 0.0
      %v4637 = vmax.f32 %v4573, 0.0
      %v4638 = vmax.f32 %v4574, 0.0
      %v4639 = vmax.f32 %v4575, 0.0
      %v4640 = vmax.f32 %v4576, 0.0
      %v4641 = vmax.f32 %v4577, 0.0
      %v4642 = vmax.f32 %v4578, 0.0
      %v4643 = vmax.f32 %v4579, 0.0
      %v4644 = vmax.f32 %v4580, 0.0
      %v4645 = vmax.f32 %v4581, 0.0
      %v4646 = vmax.f32 %v4582, 0.0
      %v4647 = vmax.f32 %v4583, 0.0
      %v4648 = vmax.f32 %v4584, 0.0
      %v4649 = vmax.f32 %v4585, 0.0
      %v4650 = vmax.f32 %v4586, 0.0
      %v4651 = vmax.f32 %v4587, 0.0
      %v4652 = vmax.f32 %v4588, 0.0
      %v4653 = vmax.f32 %v4589, 0.0
      %v4654 = vmax.f32 %v4590, 0.0
      %v4655 = vmax.f32 %v4591, 0.0
      %v4656 = vmax.f32 %v4592, 0.0
      %v4657 = vmax.f32 %v4593, 0.0
      %v4658 = vmax.f32 %v4594, 0.0
      %v4659 = vmax.f32 %v4595, 0.0
      %v4660 = vmax.f32 %v4596, 0.0
      %v4661 = vmax.f32 %v4597, 0.0
      %v4662 = vmax.f32 %v4598, 0.0
      %v4663 = vmax.f32 %v4599, 0.0
      %v4664 = vmax.f32 %v4600, 0.0
      %v4665 = vmax.f32 %v4601, 0.0
      %v4666 = vmax.f32 %v4602, 0.0
      %v4667 = vmax.f32 %v4603, 0.0
      %v4668 = vmax.f32 %v4604, 0.0
      %v4669 = vmax.f32 %v4605, 0.0
      %v4670 = vmax.f32 %v4606, 0.0
      %v4671 = vmax.f32 %v4607, 0.0
      %v4672 = vmax.f32 %v4608, 0.0
      %v4673 = vmax.f32 %v4609, 0.0
      %v4674 = vmax.f32 %v4610, 0.0
      %v4675 = vmax.f32 %v4611, 0.0
      %v4676 = vmax.f32 %v4612, 0.0
      %v4677 = vmax.f32 %v4613, 0.0
      %v4678 = vmax.f32 %v4614, 0.0
      %v4679 = vmax.f32 %v4615, 0.0
      %v4680 = vmax.f32 %v4616, 0.0
      %v4681 = vmax.f32 %v4617, 0.0
      %v4682 = vmax.f32 %v4618, 0.0
      %v4683 = vmax.f32 %v4619, 0.0
      %v4684 = vmax.f32 %v4620, 0.0
      %v4685 = vmax.f32 %v4621, 0.0
      %v4686 = vmax.f32 %v4622, 0.0
      %v4687 = vmax.f32 %v4623, 0.0
      %v4688 = vmax.f32 %v4624, 0.0
      %v4689 = vpack.c.bf16 %v4626, %v4625
      %v4690 = vpack.c.bf16 %v4628, %v4627
      %v4691 = vpack.c.bf16 %v4630, %v4629
      %v4692 = vpack.c.bf16 %v4632, %v4631
      %v4693 = vpack.c.bf16 %v4634, %v4633
      %v4694 = vpack.c.bf16 %v4636, %v4635
      %v4695 = vpack.c.bf16 %v4638, %v4637
      %v4696 = vpack.c.bf16 %v4640, %v4639
      %v4697 = vpack.c.bf16 %v4642, %v4641
      %v4698 = vpack.c.bf16 %v4644, %v4643
      %v4699 = vpack.c.bf16 %v4646, %v4645
      %v4700 = vpack.c.bf16 %v4648, %v4647
      %v4701 = vpack.c.bf16 %v4650, %v4649
      %v4702 = vpack.c.bf16 %v4652, %v4651
      %v4703 = vpack.c.bf16 %v4654, %v4653
      %v4704 = vpack.c.bf16 %v4656, %v4655
      %v4705 = vpack.c.bf16 %v4658, %v4657
      %v4706 = vpack.c.bf16 %v4660, %v4659
      %v4707 = vpack.c.bf16 %v4662, %v4661
      %v4708 = vpack.c.bf16 %v4664, %v4663
      %v4709 = vpack.c.bf16 %v4666, %v4665
      %v4710 = vpack.c.bf16 %v4668, %v4667
      %v4711 = vpack.c.bf16 %v4670, %v4669
      %v4712 = vpack.c.bf16 %v4672, %v4671
      %v4713 = vpack.c.bf16 %v4674, %v4673
      %v4714 = vpack.c.bf16 %v4676, %v4675
      %v4715 = vpack.c.bf16 %v4678, %v4677
      %v4716 = vpack.c.bf16 %v4680, %v4679
      %v4717 = vpack.c.bf16 %v4682, %v4681
      %v4718 = vpack.c.bf16 %v4684, %v4683
      %v4719 = vpack.c.bf16 %v4686, %v4685
      %v4720 = vpack.c.bf16 %v4688, %v4687
      %v4721 = vld [vmem:[%s9] sm:$0xff]
      %v4722 = vld [vmem:[%s9 + $0x8] sm:$0xff]
      %v4723 = vld [vmem:[%s9 + $0x10] sm:$0xff]
      %v4724 = vld [vmem:[%s9 + $0x18] sm:$0xff]
      %v4725 = vld [vmem:[%s9 + $0x20] sm:$0xff]
      %v4726 = vld [vmem:[%s9 + $0x28] sm:$0xff]
      %v4727 = vld [vmem:[%s9 + $0x30] sm:$0xff]
      %v4728 = vld [vmem:[%s9 + $0x38] sm:$0xff]
      %v4729 = vld [vmem:[%s9 + $0x40] sm:$0xff]
      %v4730 = vld [vmem:[%s9 + $0x48] sm:$0xff]
      %v4731 = vld [vmem:[%s9 + $0x50] sm:$0xff]
      %v4732 = vld [vmem:[%s9 + $0x58] sm:$0xff]
      %v4733 = vld [vmem:[%s9 + $0x60] sm:$0xff]
      %v4734 = vld [vmem:[%s9 + $0x68] sm:$0xff]
      %v4735 = vld [vmem:[%s9 + $0x70] sm:$0xff]
      %v4736 = vld [vmem:[%s9 + $0x78] sm:$0xff]
      %v4737 = vld [vmem:[%s9 + $0x80] sm:$0xff]
      %v4738 = vld [vmem:[%s9 + $0x88] sm:$0xff]
      %v4739 = vld [vmem:[%s9 + $0x90] sm:$0xff]
      %v4740 = vld [vmem:[%s9 + $0x98] sm:$0xff]
      %v4741 = vld [vmem:[%s9 + $0xa0] sm:$0xff]
      %v4742 = vld [vmem:[%s9 + $0xa8] sm:$0xff]
      %v4743 = vld [vmem:[%s9 + $0xb0] sm:$0xff]
      %v4744 = vld [vmem:[%s9 + $0xb8] sm:$0xff]
      %v4745 = vld [vmem:[%s9 + $0xc0] sm:$0xff]
      %v4746 = vld [vmem:[%s9 + $0xc8] sm:$0xff]
      %v4747 = vld [vmem:[%s9 + $0xd0] sm:$0xff]
      %v4748 = vld [vmem:[%s9 + $0xd8] sm:$0xff]
      %v4749 = vld [vmem:[%s9 + $0xe0] sm:$0xff]
      %v4750 = vld [vmem:[%s9 + $0xe8] sm:$0xff]
      %v4751 = vld [vmem:[%s9 + $0xf0] sm:$0xff]
      %v4752 = vld [vmem:[%s9 + $0xf8] sm:$0xff]
      %v4753 = vld [vmem:[%s9 + $0x100] sm:$0xff]
      %v4754 = vld [vmem:[%s9 + $0x108] sm:$0xff]
      %v4755 = vld [vmem:[%s9 + $0x110] sm:$0xff]
      %v4756 = vld [vmem:[%s9 + $0x118] sm:$0xff]
      %v4757 = vld [vmem:[%s9 + $0x120] sm:$0xff]
      %v4758 = vld [vmem:[%s9 + $0x128] sm:$0xff]
      %v4759 = vld [vmem:[%s9 + $0x130] sm:$0xff]
      %v4760 = vld [vmem:[%s9 + $0x138] sm:$0xff]
      %v4761 = vld [vmem:[%s9 + $0x140] sm:$0xff]
      %v4762 = vld [vmem:[%s9 + $0x148] sm:$0xff]
      %v4763 = vld [vmem:[%s9 + $0x150] sm:$0xff]
      %v4764 = vld [vmem:[%s9 + $0x158] sm:$0xff]
      %v4765 = vld [vmem:[%s9 + $0x160] sm:$0xff]
      %v4766 = vld [vmem:[%s9 + $0x168] sm:$0xff]
      %v4767 = vld [vmem:[%s9 + $0x170] sm:$0xff]
      %v4768 = vld [vmem:[%s9 + $0x178] sm:$0xff]
      %v4769 = vld [vmem:[%s9 + $0x180] sm:$0xff]
      %v4770 = vld [vmem:[%s9 + $0x188] sm:$0xff]
      %v4771 = vld [vmem:[%s9 + $0x190] sm:$0xff]
      %v4772 = vld [vmem:[%s9 + $0x198] sm:$0xff]
      %v4773 = vld [vmem:[%s9 + $0x1a0] sm:$0xff]
      %v4774 = vld [vmem:[%s9 + $0x1a8] sm:$0xff]
      %v4775 = vld [vmem:[%s9 + $0x1b0] sm:$0xff]
      %v4776 = vld [vmem:[%s9 + $0x1b8] sm:$0xff]
      %v4777 = vld [vmem:[%s9 + $0x1c0] sm:$0xff]
      %v4778 = vld [vmem:[%s9 + $0x1c8] sm:$0xff]
      %v4779 = vld [vmem:[%s9 + $0x1d0] sm:$0xff]
      %v4780 = vld [vmem:[%s9 + $0x1d8] sm:$0xff]
      %v4781 = vld [vmem:[%s9 + $0x1e0] sm:$0xff]
      %v4782 = vld [vmem:[%s9 + $0x1e8] sm:$0xff]
      %v4783 = vld [vmem:[%s9 + $0x1f0] sm:$0xff]
      %v4784 = vld [vmem:[%s9 + $0x1f8] sm:$0xff]
      %v4785 = vld [vmem:[%s9 + $0x200] sm:$0xff]
      %v4786 = vld [vmem:[%s9 + $0x208] sm:$0xff]
      %v4787 = vld [vmem:[%s9 + $0x210] sm:$0xff]
      %v4788 = vld [vmem:[%s9 + $0x218] sm:$0xff]
      %v4789 = vld [vmem:[%s9 + $0x220] sm:$0xff]
      %v4790 = vld [vmem:[%s9 + $0x228] sm:$0xff]
      %v4791 = vld [vmem:[%s9 + $0x230] sm:$0xff]
      %v4792 = vld [vmem:[%s9 + $0x238] sm:$0xff]
      %v4793 = vld [vmem:[%s9 + $0x240] sm:$0xff]
      %v4794 = vld [vmem:[%s9 + $0x248] sm:$0xff]
      %v4795 = vld [vmem:[%s9 + $0x250] sm:$0xff]
      %v4796 = vld [vmem:[%s9 + $0x258] sm:$0xff]
      %v4797 = vld [vmem:[%s9 + $0x260] sm:$0xff]
      %v4798 = vld [vmem:[%s9 + $0x268] sm:$0xff]
      %v4799 = vld [vmem:[%s9 + $0x270] sm:$0xff]
      %v4800 = vld [vmem:[%s9 + $0x278] sm:$0xff]
      %v4801 = vld [vmem:[%s9 + $0x280] sm:$0xff]
      %v4802 = vld [vmem:[%s9 + $0x288] sm:$0xff]
      %v4803 = vld [vmem:[%s9 + $0x290] sm:$0xff]
      %v4804 = vld [vmem:[%s9 + $0x298] sm:$0xff]
      %v4805 = vld [vmem:[%s9 + $0x2a0] sm:$0xff]
      %v4806 = vld [vmem:[%s9 + $0x2a8] sm:$0xff]
      %v4807 = vld [vmem:[%s9 + $0x2b0] sm:$0xff]
      %v4808 = vld [vmem:[%s9 + $0x2b8] sm:$0xff]
      %v4809 = vld [vmem:[%s9 + $0x2c0] sm:$0xff]
      %v4810 = vld [vmem:[%s9 + $0x2c8] sm:$0xff]
      %v4811 = vld [vmem:[%s9 + $0x2d0] sm:$0xff]
      %v4812 = vld [vmem:[%s9 + $0x2d8] sm:$0xff]
      %v4813 = vld [vmem:[%s9 + $0x2e0] sm:$0xff]
      %v4814 = vld [vmem:[%s9 + $0x2e8] sm:$0xff]
      %v4815 = vld [vmem:[%s9 + $0x2f0] sm:$0xff]
      %v4816 = vld [vmem:[%s9 + $0x2f8] sm:$0xff]
      %v4817 = vld [vmem:[%s9 + $0x300] sm:$0xff]
      %v4818 = vld [vmem:[%s9 + $0x308] sm:$0xff]
      %v4819 = vld [vmem:[%s9 + $0x310] sm:$0xff]
      %v4820 = vld [vmem:[%s9 + $0x318] sm:$0xff]
      %v4821 = vld [vmem:[%s9 + $0x320] sm:$0xff]
      %v4822 = vld [vmem:[%s9 + $0x328] sm:$0xff]
      %v4823 = vld [vmem:[%s9 + $0x330] sm:$0xff]
      %v4824 = vld [vmem:[%s9 + $0x338] sm:$0xff]
      %v4825 = vld [vmem:[%s9 + $0x340] sm:$0xff]
      %v4826 = vld [vmem:[%s9 + $0x348] sm:$0xff]
      %v4827 = vld [vmem:[%s9 + $0x350] sm:$0xff]
      %v4828 = vld [vmem:[%s9 + $0x358] sm:$0xff]
      %v4829 = vld [vmem:[%s9 + $0x360] sm:$0xff]
      %v4830 = vld [vmem:[%s9 + $0x368] sm:$0xff]
      %v4831 = vld [vmem:[%s9 + $0x370] sm:$0xff]
      %v4832 = vld [vmem:[%s9 + $0x378] sm:$0xff]
      %v4833 = vld [vmem:[%s9 + $0x380] sm:$0xff]
      %v4834 = vld [vmem:[%s9 + $0x388] sm:$0xff]
      %v4835 = vld [vmem:[%s9 + $0x390] sm:$0xff]
      %v4836 = vld [vmem:[%s9 + $0x398] sm:$0xff]
      %v4837 = vld [vmem:[%s9 + $0x3a0] sm:$0xff]
      %v4838 = vld [vmem:[%s9 + $0x3a8] sm:$0xff]
      %v4839 = vld [vmem:[%s9 + $0x3b0] sm:$0xff]
      %v4840 = vld [vmem:[%s9 + $0x3b8] sm:$0xff]
      %v4841 = vld [vmem:[%s9 + $0x3c0] sm:$0xff]
      %v4842 = vld [vmem:[%s9 + $0x3c8] sm:$0xff]
      %v4843 = vld [vmem:[%s9 + $0x3d0] sm:$0xff]
      %v4844 = vld [vmem:[%s9 + $0x3d8] sm:$0xff]
      %v4845 = vld [vmem:[%s9 + $0x3e0] sm:$0xff]
      %v4846 = vld [vmem:[%s9 + $0x3e8] sm:$0xff]
      %v4847 = vld [vmem:[%s9 + $0x3f0] sm:$0xff]
      %v4848 = vld [vmem:[%s9 + $0x3f8] sm:$0xff]
      %v4849 = vld [vmem:[%s10] sm:$0xff]
      %v4850 = vld [vmem:[%s10 + $0x8] sm:$0xff]
      %v4851 = vld [vmem:[%s10 + $0x10] sm:$0xff]
      %v4852 = vld [vmem:[%s10 + $0x18] sm:$0xff]
      %v4853 = vld [vmem:[%s10 + $0x20] sm:$0xff]
      %v4854 = vld [vmem:[%s10 + $0x28] sm:$0xff]
      %v4855 = vld [vmem:[%s10 + $0x30] sm:$0xff]
      %v4856 = vld [vmem:[%s10 + $0x38] sm:$0xff]
      %v4857 = vld [vmem:[%s10 + $0x40] sm:$0xff]
      %v4858 = vld [vmem:[%s10 + $0x48] sm:$0xff]
      %v4859 = vld [vmem:[%s10 + $0x50] sm:$0xff]
      %v4860 = vld [vmem:[%s10 + $0x58] sm:$0xff]
      %v4861 = vld [vmem:[%s10 + $0x60] sm:$0xff]
      %v4862 = vld [vmem:[%s10 + $0x68] sm:$0xff]
      %v4863 = vld [vmem:[%s10 + $0x70] sm:$0xff]
      %v4864 = vld [vmem:[%s10 + $0x78] sm:$0xff]
      %v4865 = vld [vmem:[%s10 + $0x80] sm:$0xff]
      %v4866 = vld [vmem:[%s10 + $0x88] sm:$0xff]
      %v4867 = vld [vmem:[%s10 + $0x90] sm:$0xff]
      %v4868 = vld [vmem:[%s10 + $0x98] sm:$0xff]
      %v4869 = vld [vmem:[%s10 + $0xa0] sm:$0xff]
      %v4870 = vld [vmem:[%s10 + $0xa8] sm:$0xff]
      %v4871 = vld [vmem:[%s10 + $0xb0] sm:$0xff]
      %v4872 = vld [vmem:[%s10 + $0xb8] sm:$0xff]
      %v4873 = vld [vmem:[%s10 + $0xc0] sm:$0xff]
      %v4874 = vld [vmem:[%s10 + $0xc8] sm:$0xff]
      %v4875 = vld [vmem:[%s10 + $0xd0] sm:$0xff]
      %v4876 = vld [vmem:[%s10 + $0xd8] sm:$0xff]
      %v4877 = vld [vmem:[%s10 + $0xe0] sm:$0xff]
      %v4878 = vld [vmem:[%s10 + $0xe8] sm:$0xff]
      %v4879 = vld [vmem:[%s10 + $0xf0] sm:$0xff]
      %v4880 = vld [vmem:[%s10 + $0xf8] sm:$0xff]
      %v4881 = vld [vmem:[%s10 + $0x100] sm:$0xff]
      %v4882 = vld [vmem:[%s10 + $0x108] sm:$0xff]
      %v4883 = vld [vmem:[%s10 + $0x110] sm:$0xff]
      %v4884 = vld [vmem:[%s10 + $0x118] sm:$0xff]
      %v4885 = vld [vmem:[%s10 + $0x120] sm:$0xff]
      %v4886 = vld [vmem:[%s10 + $0x128] sm:$0xff]
      %v4887 = vld [vmem:[%s10 + $0x130] sm:$0xff]
      %v4888 = vld [vmem:[%s10 + $0x138] sm:$0xff]
      %v4889 = vld [vmem:[%s10 + $0x140] sm:$0xff]
      %v4890 = vld [vmem:[%s10 + $0x148] sm:$0xff]
      %v4891 = vld [vmem:[%s10 + $0x150] sm:$0xff]
      %v4892 = vld [vmem:[%s10 + $0x158] sm:$0xff]
      %v4893 = vld [vmem:[%s10 + $0x160] sm:$0xff]
      %v4894 = vld [vmem:[%s10 + $0x168] sm:$0xff]
      %v4895 = vld [vmem:[%s10 + $0x170] sm:$0xff]
      %v4896 = vld [vmem:[%s10 + $0x178] sm:$0xff]
      %v4897 = vld [vmem:[%s10 + $0x180] sm:$0xff]
      %v4898 = vld [vmem:[%s10 + $0x188] sm:$0xff]
      %v4899 = vld [vmem:[%s10 + $0x190] sm:$0xff]
      %v4900 = vld [vmem:[%s10 + $0x198] sm:$0xff]
      %v4901 = vld [vmem:[%s10 + $0x1a0] sm:$0xff]
      %v4902 = vld [vmem:[%s10 + $0x1a8] sm:$0xff]
      %v4903 = vld [vmem:[%s10 + $0x1b0] sm:$0xff]
      %v4904 = vld [vmem:[%s10 + $0x1b8] sm:$0xff]
      %v4905 = vld [vmem:[%s10 + $0x1c0] sm:$0xff]
      %v4906 = vld [vmem:[%s10 + $0x1c8] sm:$0xff]
      %v4907 = vld [vmem:[%s10 + $0x1d0] sm:$0xff]
      %v4908 = vld [vmem:[%s10 + $0x1d8] sm:$0xff]
      %v4909 = vld [vmem:[%s10 + $0x1e0] sm:$0xff]
      %v4910 = vld [vmem:[%s10 + $0x1e8] sm:$0xff]
      %v4911 = vld [vmem:[%s10 + $0x1f0] sm:$0xff]
      %v4912 = vld [vmem:[%s10 + $0x1f8] sm:$0xff]
      %v5041 = vunpack.c.l.b16 %v4721
      %v5042 = vunpack.c.h.b16 %v4721
      %v5043 = vunpack.c.l.b16 %v4722
      %v5044 = vunpack.c.h.b16 %v4722
      %v5045 = vunpack.c.l.b16 %v4723
      %v5046 = vunpack.c.h.b16 %v4723
      %v5047 = vunpack.c.l.b16 %v4724
      %v5048 = vunpack.c.h.b16 %v4724
      %v5049 = vunpack.c.l.b16 %v4725
      %v5050 = vunpack.c.h.b16 %v4725
      %v5051 = vunpack.c.l.b16 %v4726
      %v5052 = vunpack.c.h.b16 %v4726
      %v5053 = vunpack.c.l.b16 %v4727
      %v5054 = vunpack.c.h.b16 %v4727
      %v5055 = vunpack.c.l.b16 %v4728
      %v5056 = vunpack.c.h.b16 %v4728
      %v5057 = vunpack.c.l.b16 %v4729
      %v5058 = vunpack.c.h.b16 %v4729
      %v5059 = vunpack.c.l.b16 %v4730
      %v5060 = vunpack.c.h.b16 %v4730
      %v5061 = vunpack.c.l.b16 %v4731
      %v5062 = vunpack.c.h.b16 %v4731
      %v5063 = vunpack.c.l.b16 %v4732
      %v5064 = vunpack.c.h.b16 %v4732
      %v5065 = vunpack.c.l.b16 %v4733
      %v5066 = vunpack.c.h.b16 %v4733
      %v5067 = vunpack.c.l.b16 %v4734
      %v5068 = vunpack.c.h.b16 %v4734
      %v5069 = vunpack.c.l.b16 %v4735
      %v5070 = vunpack.c.h.b16 %v4735
      %v5071 = vunpack.c.l.b16 %v4736
      %v5072 = vunpack.c.h.b16 %v4736
      %v5073 = vunpack.c.l.b16 %v4737
      %v5074 = vunpack.c.h.b16 %v4737
      %v5075 = vunpack.c.l.b16 %v4738
      %v5076 = vunpack.c.h.b16 %v4738
      %v5077 = vunpack.c.l.b16 %v4739
      %v5078 = vunpack.c.h.b16 %v4739
      %v5079 = vunpack.c.l.b16 %v4740
      %v5080 = vunpack.c.h.b16 %v4740
      %v5081 = vunpack.c.l.b16 %v4741
      %v5082 = vunpack.c.h.b16 %v4741
      %v5083 = vunpack.c.l.b16 %v4742
      %v5084 = vunpack.c.h.b16 %v4742
      %v5085 = vunpack.c.l.b16 %v4743
      %v5086 = vunpack.c.h.b16 %v4743
      %v5087 = vunpack.c.l.b16 %v4744
      %v5088 = vunpack.c.h.b16 %v4744
      %v5089 = vunpack.c.l.b16 %v4745
      %v5090 = vunpack.c.h.b16 %v4745
      %v5091 = vunpack.c.l.b16 %v4746
      %v5092 = vunpack.c.h.b16 %v4746
      %v5093 = vunpack.c.l.b16 %v4747
      %v5094 = vunpack.c.h.b16 %v4747
      %v5095 = vunpack.c.l.b16 %v4748
      %v5096 = vunpack.c.h.b16 %v4748
      %v5097 = vunpack.c.l.b16 %v4749
      %v5098 = vunpack.c.h.b16 %v4749
      %v5099 = vunpack.c.l.b16 %v4750
      %v5100 = vunpack.c.h.b16 %v4750
      %v5101 = vunpack.c.l.b16 %v4751
      %v5102 = vunpack.c.h.b16 %v4751
      %v5103 = vunpack.c.l.b16 %v4752
      %v5104 = vunpack.c.h.b16 %v4752
      %v5105 = vunpack.c.l.b16 %v4753
      %v5106 = vunpack.c.h.b16 %v4753
      %v5107 = vunpack.c.l.b16 %v4754
      %v5108 = vunpack.c.h.b16 %v4754
      %v5109 = vunpack.c.l.b16 %v4755
      %v5110 = vunpack.c.h.b16 %v4755
      %v5111 = vunpack.c.l.b16 %v4756
      %v5112 = vunpack.c.h.b16 %v4756
      %v5113 = vunpack.c.l.b16 %v4757
      %v5114 = vunpack.c.h.b16 %v4757
      %v5115 = vunpack.c.l.b16 %v4758
      %v5116 = vunpack.c.h.b16 %v4758
      %v5117 = vunpack.c.l.b16 %v4759
      %v5118 = vunpack.c.h.b16 %v4759
      %v5119 = vunpack.c.l.b16 %v4760
      %v5120 = vunpack.c.h.b16 %v4760
      %v5121 = vunpack.c.l.b16 %v4761
      %v5122 = vunpack.c.h.b16 %v4761
      %v5123 = vunpack.c.l.b16 %v4762
      %v5124 = vunpack.c.h.b16 %v4762
      %v5125 = vunpack.c.l.b16 %v4763
      %v5126 = vunpack.c.h.b16 %v4763
      %v5127 = vunpack.c.l.b16 %v4764
      %v5128 = vunpack.c.h.b16 %v4764
      %v5129 = vunpack.c.l.b16 %v4765
      %v5130 = vunpack.c.h.b16 %v4765
      %v5131 = vunpack.c.l.b16 %v4766
      %v5132 = vunpack.c.h.b16 %v4766
      %v5133 = vunpack.c.l.b16 %v4767
      %v5134 = vunpack.c.h.b16 %v4767
      %v5135 = vunpack.c.l.b16 %v4768
      %v5136 = vunpack.c.h.b16 %v4768
      %v5137 = vunpack.c.l.b16 %v4769
      %v5138 = vunpack.c.h.b16 %v4769
      %v5139 = vunpack.c.l.b16 %v4770
      %v5140 = vunpack.c.h.b16 %v4770
      %v5141 = vunpack.c.l.b16 %v4771
      %v5142 = vunpack.c.h.b16 %v4771
      %v5143 = vunpack.c.l.b16 %v4772
      %v5144 = vunpack.c.h.b16 %v4772
      %v5145 = vunpack.c.l.b16 %v4773
      %v5146 = vunpack.c.h.b16 %v4773
      %v5147 = vunpack.c.l.b16 %v4774
      %v5148 = vunpack.c.h.b16 %v4774
      %v5149 = vunpack.c.l.b16 %v4775
      %v5150 = vunpack.c.h.b16 %v4775
      %v5151 = vunpack.c.l.b16 %v4776
      %v5152 = vunpack.c.h.b16 %v4776
      %v5153 = vunpack.c.l.b16 %v4777
      %v5154 = vunpack.c.h.b16 %v4777
      %v5155 = vunpack.c.l.b16 %v4778
      %v5156 = vunpack.c.h.b16 %v4778
      %v5157 = vunpack.c.l.b16 %v4779
      %v5158 = vunpack.c.h.b16 %v4779
      %v5159 = vunpack.c.l.b16 %v4780
      %v5160 = vunpack.c.h.b16 %v4780
      %v5161 = vunpack.c.l.b16 %v4781
      %v5162 = vunpack.c.h.b16 %v4781
      %v5163 = vunpack.c.l.b16 %v4782
      %v5164 = vunpack.c.h.b16 %v4782
      %v5165 = vunpack.c.l.b16 %v4783
      %v5166 = vunpack.c.h.b16 %v4783
      %v5167 = vunpack.c.l.b16 %v4784
      %v5168 = vunpack.c.h.b16 %v4784
      %v5169 = vunpack.c.l.b16 %v4785
      %v5170 = vunpack.c.h.b16 %v4785
      %v5171 = vunpack.c.l.b16 %v4786
      %v5172 = vunpack.c.h.b16 %v4786
      %v5173 = vunpack.c.l.b16 %v4787
      %v5174 = vunpack.c.h.b16 %v4787
      %v5175 = vunpack.c.l.b16 %v4788
      %v5176 = vunpack.c.h.b16 %v4788
      %v5177 = vunpack.c.l.b16 %v4789
      %v5178 = vunpack.c.h.b16 %v4789
      %v5179 = vunpack.c.l.b16 %v4790
      %v5180 = vunpack.c.h.b16 %v4790
      %v5181 = vunpack.c.l.b16 %v4791
      %v5182 = vunpack.c.h.b16 %v4791
      %v5183 = vunpack.c.l.b16 %v4792
      %v5184 = vunpack.c.h.b16 %v4792
      %v5185 = vunpack.c.l.b16 %v4793
      %v5186 = vunpack.c.h.b16 %v4793
      %v5187 = vunpack.c.l.b16 %v4794
      %v5188 = vunpack.c.h.b16 %v4794
      %v5189 = vunpack.c.l.b16 %v4795
      %v5190 = vunpack.c.h.b16 %v4795
      %v5191 = vunpack.c.l.b16 %v4796
      %v5192 = vunpack.c.h.b16 %v4796
      %v5193 = vunpack.c.l.b16 %v4797
      %v5194 = vunpack.c.h.b16 %v4797
      %v5195 = vunpack.c.l.b16 %v4798
      %v5196 = vunpack.c.h.b16 %v4798
      %v5197 = vunpack.c.l.b16 %v4799
      %v5198 = vunpack.c.h.b16 %v4799
      %v5199 = vunpack.c.l.b16 %v4800
      %v5200 = vunpack.c.h.b16 %v4800
      %v5201 = vunpack.c.l.b16 %v4801
      %v5202 = vunpack.c.h.b16 %v4801
      %v5203 = vunpack.c.l.b16 %v4802
      %v5204 = vunpack.c.h.b16 %v4802
      %v5205 = vunpack.c.l.b16 %v4803
      %v5206 = vunpack.c.h.b16 %v4803
      %v5207 = vunpack.c.l.b16 %v4804
      %v5208 = vunpack.c.h.b16 %v4804
      %v5209 = vunpack.c.l.b16 %v4805
      %v5210 = vunpack.c.h.b16 %v4805
      %v5211 = vunpack.c.l.b16 %v4806
      %v5212 = vunpack.c.h.b16 %v4806
      %v5213 = vunpack.c.l.b16 %v4807
      %v5214 = vunpack.c.h.b16 %v4807
      %v5215 = vunpack.c.l.b16 %v4808
      %v5216 = vunpack.c.h.b16 %v4808
      %v5217 = vunpack.c.l.b16 %v4809
      %v5218 = vunpack.c.h.b16 %v4809
      %v5219 = vunpack.c.l.b16 %v4810
      %v5220 = vunpack.c.h.b16 %v4810
      %v5221 = vunpack.c.l.b16 %v4811
      %v5222 = vunpack.c.h.b16 %v4811
      %v5223 = vunpack.c.l.b16 %v4812
      %v5224 = vunpack.c.h.b16 %v4812
      %v5225 = vunpack.c.l.b16 %v4813
      %v5226 = vunpack.c.h.b16 %v4813
      %v5227 = vunpack.c.l.b16 %v4814
      %v5228 = vunpack.c.h.b16 %v4814
      %v5229 = vunpack.c.l.b16 %v4815
      %v5230 = vunpack.c.h.b16 %v4815
      %v5231 = vunpack.c.l.b16 %v4816
      %v5232 = vunpack.c.h.b16 %v4816
      %v5233 = vunpack.c.l.b16 %v4817
      %v5234 = vunpack.c.h.b16 %v4817
      %v5235 = vunpack.c.l.b16 %v4818
      %v5236 = vunpack.c.h.b16 %v4818
      %v5237 = vunpack.c.l.b16 %v4819
      %v5238 = vunpack.c.h.b16 %v4819
      %v5239 = vunpack.c.l.b16 %v4820
      %v5240 = vunpack.c.h.b16 %v4820
      %v5241 = vunpack.c.l.b16 %v4821
      %v5242 = vunpack.c.h.b16 %v4821
      %v5243 = vunpack.c.l.b16 %v4822
      %v5244 = vunpack.c.h.b16 %v4822
      %v5245 = vunpack.c.l.b16 %v4823
      %v5246 = vunpack.c.h.b16 %v4823
      %v5247 = vunpack.c.l.b16 %v4824
      %v5248 = vunpack.c.h.b16 %v4824
      %v5249 = vunpack.c.l.b16 %v4825
      %v5250 = vunpack.c.h.b16 %v4825
      %v5251 = vunpack.c.l.b16 %v4826
      %v5252 = vunpack.c.h.b16 %v4826
      %v5253 = vunpack.c.l.b16 %v4827
      %v5254 = vunpack.c.h.b16 %v4827
      %v5255 = vunpack.c.l.b16 %v4828
      %v5256 = vunpack.c.h.b16 %v4828
      %v5257 = vunpack.c.l.b16 %v4829
      %v5258 = vunpack.c.h.b16 %v4829
      %v5259 = vunpack.c.l.b16 %v4830
      %v5260 = vunpack.c.h.b16 %v4830
      %v5261 = vunpack.c.l.b16 %v4831
      %v5262 = vunpack.c.h.b16 %v4831
      %v5263 = vunpack.c.l.b16 %v4832
      %v5264 = vunpack.c.h.b16 %v4832
      %v5265 = vunpack.c.l.b16 %v4833
      %v5266 = vunpack.c.h.b16 %v4833
      %v5267 = vunpack.c.l.b16 %v4834
      %v5268 = vunpack.c.h.b16 %v4834
      %v5269 = vunpack.c.l.b16 %v4835
      %v5270 = vunpack.c.h.b16 %v4835
      %v5271 = vunpack.c.l.b16 %v4836
      %v5272 = vunpack.c.h.b16 %v4836
      %v5273 = vunpack.c.l.b16 %v4837
      %v5274 = vunpack.c.h.b16 %v4837
      %v5275 = vunpack.c.l.b16 %v4838
      %v5276 = vunpack.c.h.b16 %v4838
      %v5277 = vunpack.c.l.b16 %v4839
      %v5278 = vunpack.c.h.b16 %v4839
      %v5279 = vunpack.c.l.b16 %v4840
      %v5280 = vunpack.c.h.b16 %v4840
      %v5281 = vunpack.c.l.b16 %v4841
      %v5282 = vunpack.c.h.b16 %v4841
      %v5283 = vunpack.c.l.b16 %v4842
      %v5284 = vunpack.c.h.b16 %v4842
      %v5285 = vunpack.c.l.b16 %v4843
      %v5286 = vunpack.c.h.b16 %v4843
      %v5287 = vunpack.c.l.b16 %v4844
      %v5288 = vunpack.c.h.b16 %v4844
      %v5289 = vunpack.c.l.b16 %v4845
      %v5290 = vunpack.c.h.b16 %v4845
      %v5291 = vunpack.c.l.b16 %v4846
      %v5292 = vunpack.c.h.b16 %v4846
      %v5293 = vunpack.c.l.b16 %v4847
      %v5294 = vunpack.c.h.b16 %v4847
      %v5295 = vunpack.c.l.b16 %v4848
      %v5296 = vunpack.c.h.b16 %v4848
      %v5297 = vpack.c.b16 %v5045, %v5041
      %v5298 = vpack.c.b16 %v5046, %v5042
      %v5299 = vpack.c.b16 %v5047, %v5043
      %v5300 = vpack.c.b16 %v5048, %v5044
      %v5301 = vpack.c.b16 %v5053, %v5049
      %v5302 = vpack.c.b16 %v5054, %v5050
      %v5303 = vpack.c.b16 %v5055, %v5051
      %v5304 = vpack.c.b16 %v5056, %v5052
      %v5305 = vpack.c.b16 %v5061, %v5057
      %v5306 = vpack.c.b16 %v5062, %v5058
      %v5307 = vpack.c.b16 %v5063, %v5059
      %v5308 = vpack.c.b16 %v5064, %v5060
      %v5309 = vpack.c.b16 %v5069, %v5065
      %v5310 = vpack.c.b16 %v5070, %v5066
      %v5311 = vpack.c.b16 %v5071, %v5067
      %v5312 = vpack.c.b16 %v5072, %v5068
      %v5313 = vpack.c.b16 %v5077, %v5073
      %v5314 = vpack.c.b16 %v5078, %v5074
      %v5315 = vpack.c.b16 %v5079, %v5075
      %v5316 = vpack.c.b16 %v5080, %v5076
      %v5317 = vpack.c.b16 %v5085, %v5081
      %v5318 = vpack.c.b16 %v5086, %v5082
      %v5319 = vpack.c.b16 %v5087, %v5083
      %v5320 = vpack.c.b16 %v5088, %v5084
      %v5321 = vpack.c.b16 %v5093, %v5089
      %v5322 = vpack.c.b16 %v5094, %v5090
      %v5323 = vpack.c.b16 %v5095, %v5091
      %v5324 = vpack.c.b16 %v5096, %v5092
      %v5325 = vpack.c.b16 %v5101, %v5097
      %v5326 = vpack.c.b16 %v5102, %v5098
      %v5327 = vpack.c.b16 %v5103, %v5099
      %v5328 = vpack.c.b16 %v5104, %v5100
      %v5329 = vpack.c.b16 %v5109, %v5105
      %v5330 = vpack.c.b16 %v5110, %v5106
      %v5331 = vpack.c.b16 %v5111, %v5107
      %v5332 = vpack.c.b16 %v5112, %v5108
      %v5333 = vpack.c.b16 %v5117, %v5113
      %v5334 = vpack.c.b16 %v5118, %v5114
      %v5335 = vpack.c.b16 %v5119, %v5115
      %v5336 = vpack.c.b16 %v5120, %v5116
      %v5337 = vpack.c.b16 %v5125, %v5121
      %v5338 = vpack.c.b16 %v5126, %v5122
      %v5339 = vpack.c.b16 %v5127, %v5123
      %v5340 = vpack.c.b16 %v5128, %v5124
      %v5341 = vpack.c.b16 %v5133, %v5129
      %v5342 = vpack.c.b16 %v5134, %v5130
      %v5343 = vpack.c.b16 %v5135, %v5131
      %v5344 = vpack.c.b16 %v5136, %v5132
      %v5345 = vpack.c.b16 %v5141, %v5137
      %v5346 = vpack.c.b16 %v5142, %v5138
      %v5347 = vpack.c.b16 %v5143, %v5139
      %v5348 = vpack.c.b16 %v5144, %v5140
      %v5349 = vpack.c.b16 %v5149, %v5145
      %v5350 = vpack.c.b16 %v5150, %v5146
      %v5351 = vpack.c.b16 %v5151, %v5147
      %v5352 = vpack.c.b16 %v5152, %v5148
      %v5353 = vpack.c.b16 %v5157, %v5153
      %v5354 = vpack.c.b16 %v5158, %v5154
      %v5355 = vpack.c.b16 %v5159, %v5155
      %v5356 = vpack.c.b16 %v5160, %v5156
      %v5357 = vpack.c.b16 %v5165, %v5161
      %v5358 = vpack.c.b16 %v5166, %v5162
      %v5359 = vpack.c.b16 %v5167, %v5163
      %v5360 = vpack.c.b16 %v5168, %v5164
      %v5361 = vpack.c.b16 %v5173, %v5169
      %v5362 = vpack.c.b16 %v5174, %v5170
      %v5363 = vpack.c.b16 %v5175, %v5171
      %v5364 = vpack.c.b16 %v5176, %v5172
      %v5365 = vpack.c.b16 %v5181, %v5177
      %v5366 = vpack.c.b16 %v5182, %v5178
      %v5367 = vpack.c.b16 %v5183, %v5179
      %v5368 = vpack.c.b16 %v5184, %v5180
      %v5369 = vpack.c.b16 %v5189, %v5185
      %v5370 = vpack.c.b16 %v5190, %v5186
      %v5371 = vpack.c.b16 %v5191, %v5187
      %v5372 = vpack.c.b16 %v5192, %v5188
      %v5373 = vpack.c.b16 %v5197, %v5193
      %v5374 = vpack.c.b16 %v5198, %v5194
      %v5375 = vpack.c.b16 %v5199, %v5195
      %v5376 = vpack.c.b16 %v5200, %v5196
      %v5377 = vpack.c.b16 %v5205, %v5201
      %v5378 = vpack.c.b16 %v5206, %v5202
      %v5379 = vpack.c.b16 %v5207, %v5203
      %v5380 = vpack.c.b16 %v5208, %v5204
      %v5381 = vpack.c.b16 %v5213, %v5209
      %v5382 = vpack.c.b16 %v5214, %v5210
      %v5383 = vpack.c.b16 %v5215, %v5211
      %v5384 = vpack.c.b16 %v5216, %v5212
      %v5385 = vpack.c.b16 %v5221, %v5217
      %v5386 = vpack.c.b16 %v5222, %v5218
      %v5387 = vpack.c.b16 %v5223, %v5219
      %v5388 = vpack.c.b16 %v5224, %v5220
      %v5389 = vpack.c.b16 %v5229, %v5225
      %v5390 = vpack.c.b16 %v5230, %v5226
      %v5391 = vpack.c.b16 %v5231, %v5227
      %v5392 = vpack.c.b16 %v5232, %v5228
      %v5393 = vpack.c.b16 %v5237, %v5233
      %v5394 = vpack.c.b16 %v5238, %v5234
      %v5395 = vpack.c.b16 %v5239, %v5235
      %v5396 = vpack.c.b16 %v5240, %v5236
      %v5397 = vpack.c.b16 %v5245, %v5241
      %v5398 = vpack.c.b16 %v5246, %v5242
      %v5399 = vpack.c.b16 %v5247, %v5243
      %v5400 = vpack.c.b16 %v5248, %v5244
      %v5401 = vpack.c.b16 %v5253, %v5249
      %v5402 = vpack.c.b16 %v5254, %v5250
      %v5403 = vpack.c.b16 %v5255, %v5251
      %v5404 = vpack.c.b16 %v5256, %v5252
      %v5405 = vpack.c.b16 %v5261, %v5257
      %v5406 = vpack.c.b16 %v5262, %v5258
      %v5407 = vpack.c.b16 %v5263, %v5259
      %v5408 = vpack.c.b16 %v5264, %v5260
      %v5409 = vpack.c.b16 %v5269, %v5265
      %v5410 = vpack.c.b16 %v5270, %v5266
      %v5411 = vpack.c.b16 %v5271, %v5267
      %v5412 = vpack.c.b16 %v5272, %v5268
      %v5413 = vpack.c.b16 %v5277, %v5273
      %v5414 = vpack.c.b16 %v5278, %v5274
      %v5415 = vpack.c.b16 %v5279, %v5275
      %v5416 = vpack.c.b16 %v5280, %v5276
      %v5417 = vpack.c.b16 %v5285, %v5281
      %v5418 = vpack.c.b16 %v5286, %v5282
      %v5419 = vpack.c.b16 %v5287, %v5283
      %v5420 = vpack.c.b16 %v5288, %v5284
      %v5421 = vpack.c.b16 %v5293, %v5289
      %v5422 = vpack.c.b16 %v5294, %v5290
      %v5423 = vpack.c.b16 %v5295, %v5291
      %v5424 = vpack.c.b16 %v5296, %v5292
      %5553 = vmatpush.bf16.msra.mxu0 %v4696
      %5554 = vmatpush.bf16.msra.mxu0 %v4695
      %5555 = vmatpush.bf16.msra.mxu0 %v4694
      %5556 = vmatpush.bf16.msra.mxu0 %v4693
      %5557 = vmatpush.bf16.msra.mxu0 %v4692
      %5558 = vmatpush.bf16.msra.mxu0 %v4691
      %5559 = vmatpush.bf16.msra.mxu0 %v4690
      %5560 = vmatpush.bf16.msra.mxu0 %v4689
      %5561 = vmatmul.bf16.gmra.mxu0 %v5297
      %v5562 = vpop.f32.mrf.mxu0
      %v5563 = vadd.f32 %v4849, %v5562
      %v5564 = vpop.f32.mrf.mxu0
      %v5565 = vadd.f32 %v4850, %v5564
      %5566 = vmatmul.bf16.gmra.mxu0 %v5301
      %v5567 = vpop.f32.mrf.mxu0
      %v5568 = vadd.f32 %v4851, %v5567
      %v5569 = vpop.f32.mrf.mxu0
      %v5570 = vadd.f32 %v4852, %v5569
      %5571 = vmatmul.bf16.gmra.mxu0 %v5305
      %v5572 = vpop.f32.mrf.mxu0
      %v5573 = vadd.f32 %v4853, %v5572
      %v5574 = vpop.f32.mrf.mxu0
      %v5575 = vadd.f32 %v4854, %v5574
      %5576 = vmatmul.bf16.gmra.mxu0 %v5309
      %v5577 = vpop.f32.mrf.mxu0
      %v5578 = vadd.f32 %v4855, %v5577
      %v5579 = vpop.f32.mrf.mxu0
      %v5580 = vadd.f32 %v4856, %v5579
      %5581 = vmatmul.bf16.gmra.mxu0 %v5313
      %v5582 = vpop.f32.mrf.mxu0
      %v5583 = vadd.f32 %v4857, %v5582
      %v5584 = vpop.f32.mrf.mxu0
      %v5585 = vadd.f32 %v4858, %v5584
      %5586 = vmatmul.bf16.gmra.mxu0 %v5317
      %v5587 = vpop.f32.mrf.mxu0
      %v5588 = vadd.f32 %v4859, %v5587
      %v5589 = vpop.f32.mrf.mxu0
      %v5590 = vadd.f32 %v4860, %v5589
      %5591 = vmatmul.bf16.gmra.mxu0 %v5321
      %v5592 = vpop.f32.mrf.mxu0
      %v5593 = vadd.f32 %v4861, %v5592
      %v5594 = vpop.f32.mrf.mxu0
      %v5595 = vadd.f32 %v4862, %v5594
      %5596 = vmatmul.bf16.gmra.mxu0 %v5325
      %v5597 = vpop.f32.mrf.mxu0
      %v5598 = vadd.f32 %v4863, %v5597
      %v5599 = vpop.f32.mrf.mxu0
      %v5600 = vadd.f32 %v4864, %v5599
      %5601 = vmatmul.bf16.gmra.mxu0 %v5329
      %v5602 = vpop.f32.mrf.mxu0
      %v5603 = vadd.f32 %v4865, %v5602
      %v5604 = vpop.f32.mrf.mxu0
      %v5605 = vadd.f32 %v4866, %v5604
      %5606 = vmatmul.bf16.gmra.mxu0 %v5333
      %v5607 = vpop.f32.mrf.mxu0
      %v5608 = vadd.f32 %v4867, %v5607
      %v5609 = vpop.f32.mrf.mxu0
      %v5610 = vadd.f32 %v4868, %v5609
      %5611 = vmatmul.bf16.gmra.mxu0 %v5337
      %v5612 = vpop.f32.mrf.mxu0
      %v5613 = vadd.f32 %v4869, %v5612
      %v5614 = vpop.f32.mrf.mxu0
      %v5615 = vadd.f32 %v4870, %v5614
      %5616 = vmatmul.bf16.gmra.mxu0 %v5341
      %v5617 = vpop.f32.mrf.mxu0
      %v5618 = vadd.f32 %v4871, %v5617
      %v5619 = vpop.f32.mrf.mxu0
      %v5620 = vadd.f32 %v4872, %v5619
      %5621 = vmatmul.bf16.gmra.mxu0 %v5345
      %v5622 = vpop.f32.mrf.mxu0
      %v5623 = vadd.f32 %v4873, %v5622
      %v5624 = vpop.f32.mrf.mxu0
      %v5625 = vadd.f32 %v4874, %v5624
      %5626 = vmatmul.bf16.gmra.mxu0 %v5349
      %v5627 = vpop.f32.mrf.mxu0
      %v5628 = vadd.f32 %v4875, %v5627
      %v5629 = vpop.f32.mrf.mxu0
      %v5630 = vadd.f32 %v4876, %v5629
      %5631 = vmatmul.bf16.gmra.mxu0 %v5353
      %v5632 = vpop.f32.mrf.mxu0
      %v5633 = vadd.f32 %v4877, %v5632
      %v5634 = vpop.f32.mrf.mxu0
      %v5635 = vadd.f32 %v4878, %v5634
      %5636 = vmatmul.bf16.gmra.mxu0 %v5357
      %v5637 = vpop.f32.mrf.mxu0
      %v5638 = vadd.f32 %v4879, %v5637
      %v5639 = vpop.f32.mrf.mxu0
      %v5640 = vadd.f32 %v4880, %v5639
      %5641 = vmatmul.bf16.gmra.mxu0 %v5361
      %v5642 = vpop.f32.mrf.mxu0
      %v5643 = vadd.f32 %v4881, %v5642
      %v5644 = vpop.f32.mrf.mxu0
      %v5645 = vadd.f32 %v4882, %v5644
      %5646 = vmatmul.bf16.gmra.mxu0 %v5365
      %v5647 = vpop.f32.mrf.mxu0
      %v5648 = vadd.f32 %v4883, %v5647
      %v5649 = vpop.f32.mrf.mxu0
      %v5650 = vadd.f32 %v4884, %v5649
      %5651 = vmatmul.bf16.gmra.mxu0 %v5369
      %v5652 = vpop.f32.mrf.mxu0
      %v5653 = vadd.f32 %v4885, %v5652
      %v5654 = vpop.f32.mrf.mxu0
      %v5655 = vadd.f32 %v4886, %v5654
      %5656 = vmatmul.bf16.gmra.mxu0 %v5373
      %v5657 = vpop.f32.mrf.mxu0
      %v5658 = vadd.f32 %v4887, %v5657
      %v5659 = vpop.f32.mrf.mxu0
      %v5660 = vadd.f32 %v4888, %v5659
      %5661 = vmatmul.bf16.gmra.mxu0 %v5377
      %v5662 = vpop.f32.mrf.mxu0
      %v5663 = vadd.f32 %v4889, %v5662
      %v5664 = vpop.f32.mrf.mxu0
      %v5665 = vadd.f32 %v4890, %v5664
      %5666 = vmatmul.bf16.gmra.mxu0 %v5381
      %v5667 = vpop.f32.mrf.mxu0
      %v5668 = vadd.f32 %v4891, %v5667
      %v5669 = vpop.f32.mrf.mxu0
      %v5670 = vadd.f32 %v4892, %v5669
      %5671 = vmatmul.bf16.gmra.mxu0 %v5385
      %v5672 = vpop.f32.mrf.mxu0
      %v5673 = vadd.f32 %v4893, %v5672
      %v5674 = vpop.f32.mrf.mxu0
      %v5675 = vadd.f32 %v4894, %v5674
      %5676 = vmatmul.bf16.gmra.mxu0 %v5389
      %v5677 = vpop.f32.mrf.mxu0
      %v5678 = vadd.f32 %v4895, %v5677
      %v5679 = vpop.f32.mrf.mxu0
      %v5680 = vadd.f32 %v4896, %v5679
      %5681 = vmatmul.bf16.gmra.mxu0 %v5393
      %v5682 = vpop.f32.mrf.mxu0
      %v5683 = vadd.f32 %v4897, %v5682
      %v5684 = vpop.f32.mrf.mxu0
      %v5685 = vadd.f32 %v4898, %v5684
      %5686 = vmatmul.bf16.gmra.mxu0 %v5397
      %v5687 = vpop.f32.mrf.mxu0
      %v5688 = vadd.f32 %v4899, %v5687
      %v5689 = vpop.f32.mrf.mxu0
      %v5690 = vadd.f32 %v4900, %v5689
      %5691 = vmatmul.bf16.gmra.mxu0 %v5401
      %v5692 = vpop.f32.mrf.mxu0
      %v5693 = vadd.f32 %v4901, %v5692
      %v5694 = vpop.f32.mrf.mxu0
      %v5695 = vadd.f32 %v4902, %v5694
      %5696 = vmatmul.bf16.gmra.mxu0 %v5405
      %v5697 = vpop.f32.mrf.mxu0
      %v5698 = vadd.f32 %v4903, %v5697
      %v5699 = vpop.f32.mrf.mxu0
      %v5700 = vadd.f32 %v4904, %v5699
      %5701 = vmatmul.bf16.gmra.mxu0 %v5409
      %v5702 = vpop.f32.mrf.mxu0
      %v5703 = vadd.f32 %v4905, %v5702
      %v5704 = vpop.f32.mrf.mxu0
      %v5705 = vadd.f32 %v4906, %v5704
      %5706 = vmatmul.bf16.gmra.mxu0 %v5413
      %v5707 = vpop.f32.mrf.mxu0
      %v5708 = vadd.f32 %v4907, %v5707
      %v5709 = vpop.f32.mrf.mxu0
      %v5710 = vadd.f32 %v4908, %v5709
      %5711 = vmatmul.bf16.gmra.mxu0 %v5417
      %v5712 = vpop.f32.mrf.mxu0
      %v5713 = vadd.f32 %v4909, %v5712
      %v5714 = vpop.f32.mrf.mxu0
      %v5715 = vadd.f32 %v4910, %v5714
      %5716 = vmatmul.bf16.gmra.mxu0 %v5421
      %v5717 = vpop.f32.mrf.mxu0
      %v5718 = vadd.f32 %v4911, %v5717
      %v5719 = vpop.f32.mrf.mxu0
      %v5720 = vadd.f32 %v4912, %v5719
      %5721 = vdwg.mxu0
      %5722 = vmatpush.bf16.msra.mxu0 %v4704
      %5723 = vmatpush.bf16.msra.mxu0 %v4703
      %5724 = vmatpush.bf16.msra.mxu0 %v4702
      %5725 = vmatpush.bf16.msra.mxu0 %v4701
      %5726 = vmatpush.bf16.msra.mxu0 %v4700
      %5727 = vmatpush.bf16.msra.mxu0 %v4699
      %5728 = vmatpush.bf16.msra.mxu0 %v4698
      %5729 = vmatpush.bf16.msra.mxu0 %v4697
      %5730 = vmatmul.bf16.gmra.mxu0 %v5298
      %v5731 = vpop.f32.mrf.mxu0
      %v5732 = vadd.f32 %v5563, %v5731
      %v5733 = vpop.f32.mrf.mxu0
      %v5734 = vadd.f32 %v5565, %v5733
      %5735 = vmatmul.bf16.gmra.mxu0 %v5302
      %v5736 = vpop.f32.mrf.mxu0
      %v5737 = vadd.f32 %v5568, %v5736
      %v5738 = vpop.f32.mrf.mxu0
      %v5739 = vadd.f32 %v5570, %v5738
      %5740 = vmatmul.bf16.gmra.mxu0 %v5306
      %v5741 = vpop.f32.mrf.mxu0
      %v5742 = vadd.f32 %v5573, %v5741
      %v5743 = vpop.f32.mrf.mxu0
      %v5744 = vadd.f32 %v5575, %v5743
      %5745 = vmatmul.bf16.gmra.mxu0 %v5310
      %v5746 = vpop.f32.mrf.mxu0
      %v5747 = vadd.f32 %v5578, %v5746
      %v5748 = vpop.f32.mrf.mxu0
      %v5749 = vadd.f32 %v5580, %v5748
      %5750 = vmatmul.bf16.gmra.mxu0 %v5314
      %v5751 = vpop.f32.mrf.mxu0
      %v5752 = vadd.f32 %v5583, %v5751
      %v5753 = vpop.f32.mrf.mxu0
      %v5754 = vadd.f32 %v5585, %v5753
      %5755 = vmatmul.bf16.gmra.mxu0 %v5318
      %v5756 = vpop.f32.mrf.mxu0
      %v5757 = vadd.f32 %v5588, %v5756
      %v5758 = vpop.f32.mrf.mxu0
      %v5759 = vadd.f32 %v5590, %v5758
      %5760 = vmatmul.bf16.gmra.mxu0 %v5322
      %v5761 = vpop.f32.mrf.mxu0
      %v5762 = vadd.f32 %v5593, %v5761
      %v5763 = vpop.f32.mrf.mxu0
      %v5764 = vadd.f32 %v5595, %v5763
      %5765 = vmatmul.bf16.gmra.mxu0 %v5326
      %v5766 = vpop.f32.mrf.mxu0
      %v5767 = vadd.f32 %v5598, %v5766
      %v5768 = vpop.f32.mrf.mxu0
      %v5769 = vadd.f32 %v5600, %v5768
      %5770 = vmatmul.bf16.gmra.mxu0 %v5330
      %v5771 = vpop.f32.mrf.mxu0
      %v5772 = vadd.f32 %v5603, %v5771
      %v5773 = vpop.f32.mrf.mxu0
      %v5774 = vadd.f32 %v5605, %v5773
      %5775 = vmatmul.bf16.gmra.mxu0 %v5334
      %v5776 = vpop.f32.mrf.mxu0
      %v5777 = vadd.f32 %v5608, %v5776
      %v5778 = vpop.f32.mrf.mxu0
      %v5779 = vadd.f32 %v5610, %v5778
      %5780 = vmatmul.bf16.gmra.mxu0 %v5338
      %v5781 = vpop.f32.mrf.mxu0
      %v5782 = vadd.f32 %v5613, %v5781
      %v5783 = vpop.f32.mrf.mxu0
      %v5784 = vadd.f32 %v5615, %v5783
      %5785 = vmatmul.bf16.gmra.mxu0 %v5342
      %v5786 = vpop.f32.mrf.mxu0
      %v5787 = vadd.f32 %v5618, %v5786
      %v5788 = vpop.f32.mrf.mxu0
      %v5789 = vadd.f32 %v5620, %v5788
      %5790 = vmatmul.bf16.gmra.mxu0 %v5346
      %v5791 = vpop.f32.mrf.mxu0
      %v5792 = vadd.f32 %v5623, %v5791
      %v5793 = vpop.f32.mrf.mxu0
      %v5794 = vadd.f32 %v5625, %v5793
      %5795 = vmatmul.bf16.gmra.mxu0 %v5350
      %v5796 = vpop.f32.mrf.mxu0
      %v5797 = vadd.f32 %v5628, %v5796
      %v5798 = vpop.f32.mrf.mxu0
      %v5799 = vadd.f32 %v5630, %v5798
      %5800 = vmatmul.bf16.gmra.mxu0 %v5354
      %v5801 = vpop.f32.mrf.mxu0
      %v5802 = vadd.f32 %v5633, %v5801
      %v5803 = vpop.f32.mrf.mxu0
      %v5804 = vadd.f32 %v5635, %v5803
      %5805 = vmatmul.bf16.gmra.mxu0 %v5358
      %v5806 = vpop.f32.mrf.mxu0
      %v5807 = vadd.f32 %v5638, %v5806
      %v5808 = vpop.f32.mrf.mxu0
      %v5809 = vadd.f32 %v5640, %v5808
      %5810 = vmatmul.bf16.gmra.mxu0 %v5362
      %v5811 = vpop.f32.mrf.mxu0
      %v5812 = vadd.f32 %v5643, %v5811
      %v5813 = vpop.f32.mrf.mxu0
      %v5814 = vadd.f32 %v5645, %v5813
      %5815 = vmatmul.bf16.gmra.mxu0 %v5366
      %v5816 = vpop.f32.mrf.mxu0
      %v5817 = vadd.f32 %v5648, %v5816
      %v5818 = vpop.f32.mrf.mxu0
      %v5819 = vadd.f32 %v5650, %v5818
      %5820 = vmatmul.bf16.gmra.mxu0 %v5370
      %v5821 = vpop.f32.mrf.mxu0
      %v5822 = vadd.f32 %v5653, %v5821
      %v5823 = vpop.f32.mrf.mxu0
      %v5824 = vadd.f32 %v5655, %v5823
      %5825 = vmatmul.bf16.gmra.mxu0 %v5374
      %v5826 = vpop.f32.mrf.mxu0
      %v5827 = vadd.f32 %v5658, %v5826
      %v5828 = vpop.f32.mrf.mxu0
      %v5829 = vadd.f32 %v5660, %v5828
      %5830 = vmatmul.bf16.gmra.mxu0 %v5378
      %v5831 = vpop.f32.mrf.mxu0
      %v5832 = vadd.f32 %v5663, %v5831
      %v5833 = vpop.f32.mrf.mxu0
      %v5834 = vadd.f32 %v5665, %v5833
      %5835 = vmatmul.bf16.gmra.mxu0 %v5382
      %v5836 = vpop.f32.mrf.mxu0
      %v5837 = vadd.f32 %v5668, %v5836
      %v5838 = vpop.f32.mrf.mxu0
      %v5839 = vadd.f32 %v5670, %v5838
      %5840 = vmatmul.bf16.gmra.mxu0 %v5386
      %v5841 = vpop.f32.mrf.mxu0
      %v5842 = vadd.f32 %v5673, %v5841
      %v5843 = vpop.f32.mrf.mxu0
      %v5844 = vadd.f32 %v5675, %v5843
      %5845 = vmatmul.bf16.gmra.mxu0 %v5390
      %v5846 = vpop.f32.mrf.mxu0
      %v5847 = vadd.f32 %v5678, %v5846
      %v5848 = vpop.f32.mrf.mxu0
      %v5849 = vadd.f32 %v5680, %v5848
      %5850 = vmatmul.bf16.gmra.mxu0 %v5394
      %v5851 = vpop.f32.mrf.mxu0
      %v5852 = vadd.f32 %v5683, %v5851
      %v5853 = vpop.f32.mrf.mxu0
      %v5854 = vadd.f32 %v5685, %v5853
      %5855 = vmatmul.bf16.gmra.mxu0 %v5398
      %v5856 = vpop.f32.mrf.mxu0
      %v5857 = vadd.f32 %v5688, %v5856
      %v5858 = vpop.f32.mrf.mxu0
      %v5859 = vadd.f32 %v5690, %v5858
      %5860 = vmatmul.bf16.gmra.mxu0 %v5402
      %v5861 = vpop.f32.mrf.mxu0
      %v5862 = vadd.f32 %v5693, %v5861
      %v5863 = vpop.f32.mrf.mxu0
      %v5864 = vadd.f32 %v5695, %v5863
      %5865 = vmatmul.bf16.gmra.mxu0 %v5406
      %v5866 = vpop.f32.mrf.mxu0
      %v5867 = vadd.f32 %v5698, %v5866
      %v5868 = vpop.f32.mrf.mxu0
      %v5869 = vadd.f32 %v5700, %v5868
      %5870 = vmatmul.bf16.gmra.mxu0 %v5410
      %v5871 = vpop.f32.mrf.mxu0
      %v5872 = vadd.f32 %v5703, %v5871
      %v5873 = vpop.f32.mrf.mxu0
      %v5874 = vadd.f32 %v5705, %v5873
      %5875 = vmatmul.bf16.gmra.mxu0 %v5414
      %v5876 = vpop.f32.mrf.mxu0
      %v5877 = vadd.f32 %v5708, %v5876
      %v5878 = vpop.f32.mrf.mxu0
      %v5879 = vadd.f32 %v5710, %v5878
      %5880 = vmatmul.bf16.gmra.mxu0 %v5418
      %v5881 = vpop.f32.mrf.mxu0
      %v5882 = vadd.f32 %v5713, %v5881
      %v5883 = vpop.f32.mrf.mxu0
      %v5884 = vadd.f32 %v5715, %v5883
      %5885 = vmatmul.bf16.gmra.mxu0 %v5422
      %v5886 = vpop.f32.mrf.mxu0
      %v5887 = vadd.f32 %v5718, %v5886
      %v5888 = vpop.f32.mrf.mxu0
      %v5889 = vadd.f32 %v5720, %v5888
      %5890 = vdwg.mxu0
      %5891 = vmatpush.bf16.msra.mxu0 %v4712
      %5892 = vmatpush.bf16.msra.mxu0 %v4711
      %5893 = vmatpush.bf16.msra.mxu0 %v4710
      %5894 = vmatpush.bf16.msra.mxu0 %v4709
      %5895 = vmatpush.bf16.msra.mxu0 %v4708
      %5896 = vmatpush.bf16.msra.mxu0 %v4707
      %5897 = vmatpush.bf16.msra.mxu0 %v4706
      %5898 = vmatpush.bf16.msra.mxu0 %v4705
      %5899 = vmatmul.bf16.gmra.mxu0 %v5299
      %v5900 = vpop.f32.mrf.mxu0
      %v5901 = vadd.f32 %v5732, %v5900
      %v5902 = vpop.f32.mrf.mxu0
      %v5903 = vadd.f32 %v5734, %v5902
      %5904 = vmatmul.bf16.gmra.mxu0 %v5303
      %v5905 = vpop.f32.mrf.mxu0
      %v5906 = vadd.f32 %v5737, %v5905
      %v5907 = vpop.f32.mrf.mxu0
      %v5908 = vadd.f32 %v5739, %v5907
      %5909 = vmatmul.bf16.gmra.mxu0 %v5307
      %v5910 = vpop.f32.mrf.mxu0
      %v5911 = vadd.f32 %v5742, %v5910
      %v5912 = vpop.f32.mrf.mxu0
      %v5913 = vadd.f32 %v5744, %v5912
      %5914 = vmatmul.bf16.gmra.mxu0 %v5311
      %v5915 = vpop.f32.mrf.mxu0
      %v5916 = vadd.f32 %v5747, %v5915
      %v5917 = vpop.f32.mrf.mxu0
      %v5918 = vadd.f32 %v5749, %v5917
      %5919 = vmatmul.bf16.gmra.mxu0 %v5315
      %v5920 = vpop.f32.mrf.mxu0
      %v5921 = vadd.f32 %v5752, %v5920
      %v5922 = vpop.f32.mrf.mxu0
      %v5923 = vadd.f32 %v5754, %v5922
      %5924 = vmatmul.bf16.gmra.mxu0 %v5319
      %v5925 = vpop.f32.mrf.mxu0
      %v5926 = vadd.f32 %v5757, %v5925
      %v5927 = vpop.f32.mrf.mxu0
      %v5928 = vadd.f32 %v5759, %v5927
      %5929 = vmatmul.bf16.gmra.mxu0 %v5323
      %v5930 = vpop.f32.mrf.mxu0
      %v5931 = vadd.f32 %v5762, %v5930
      %v5932 = vpop.f32.mrf.mxu0
      %v5933 = vadd.f32 %v5764, %v5932
      %5934 = vmatmul.bf16.gmra.mxu0 %v5327
      %v5935 = vpop.f32.mrf.mxu0
      %v5936 = vadd.f32 %v5767, %v5935
      %v5937 = vpop.f32.mrf.mxu0
      %v5938 = vadd.f32 %v5769, %v5937
      %5939 = vmatmul.bf16.gmra.mxu0 %v5331
      %v5940 = vpop.f32.mrf.mxu0
      %v5941 = vadd.f32 %v5772, %v5940
      %v5942 = vpop.f32.mrf.mxu0
      %v5943 = vadd.f32 %v5774, %v5942
      %5944 = vmatmul.bf16.gmra.mxu0 %v5335
      %v5945 = vpop.f32.mrf.mxu0
      %v5946 = vadd.f32 %v5777, %v5945
      %v5947 = vpop.f32.mrf.mxu0
      %v5948 = vadd.f32 %v5779, %v5947
      %5949 = vmatmul.bf16.gmra.mxu0 %v5339
      %v5950 = vpop.f32.mrf.mxu0
      %v5951 = vadd.f32 %v5782, %v5950
      %v5952 = vpop.f32.mrf.mxu0
      %v5953 = vadd.f32 %v5784, %v5952
      %5954 = vmatmul.bf16.gmra.mxu0 %v5343
      %v5955 = vpop.f32.mrf.mxu0
      %v5956 = vadd.f32 %v5787, %v5955
      %v5957 = vpop.f32.mrf.mxu0
      %v5958 = vadd.f32 %v5789, %v5957
      %5959 = vmatmul.bf16.gmra.mxu0 %v5347
      %v5960 = vpop.f32.mrf.mxu0
      %v5961 = vadd.f32 %v5792, %v5960
      %v5962 = vpop.f32.mrf.mxu0
      %v5963 = vadd.f32 %v5794, %v5962
      %5964 = vmatmul.bf16.gmra.mxu0 %v5351
      %v5965 = vpop.f32.mrf.mxu0
      %v5966 = vadd.f32 %v5797, %v5965
      %v5967 = vpop.f32.mrf.mxu0
      %v5968 = vadd.f32 %v5799, %v5967
      %5969 = vmatmul.bf16.gmra.mxu0 %v5355
      %v5970 = vpop.f32.mrf.mxu0
      %v5971 = vadd.f32 %v5802, %v5970
      %v5972 = vpop.f32.mrf.mxu0
      %v5973 = vadd.f32 %v5804, %v5972
      %5974 = vmatmul.bf16.gmra.mxu0 %v5359
      %v5975 = vpop.f32.mrf.mxu0
      %v5976 = vadd.f32 %v5807, %v5975
      %v5977 = vpop.f32.mrf.mxu0
      %v5978 = vadd.f32 %v5809, %v5977
      %5979 = vmatmul.bf16.gmra.mxu0 %v5363
      %v5980 = vpop.f32.mrf.mxu0
      %v5981 = vadd.f32 %v5812, %v5980
      %v5982 = vpop.f32.mrf.mxu0
      %v5983 = vadd.f32 %v5814, %v5982
      %5984 = vmatmul.bf16.gmra.mxu0 %v5367
      %v5985 = vpop.f32.mrf.mxu0
      %v5986 = vadd.f32 %v5817, %v5985
      %v5987 = vpop.f32.mrf.mxu0
      %v5988 = vadd.f32 %v5819, %v5987
      %5989 = vmatmul.bf16.gmra.mxu0 %v5371
      %v5990 = vpop.f32.mrf.mxu0
      %v5991 = vadd.f32 %v5822, %v5990
      %v5992 = vpop.f32.mrf.mxu0
      %v5993 = vadd.f32 %v5824, %v5992
      %5994 = vmatmul.bf16.gmra.mxu0 %v5375
      %v5995 = vpop.f32.mrf.mxu0
      %v5996 = vadd.f32 %v5827, %v5995
      %v5997 = vpop.f32.mrf.mxu0
      %v5998 = vadd.f32 %v5829, %v5997
      %5999 = vmatmul.bf16.gmra.mxu0 %v5379
      %v6000 = vpop.f32.mrf.mxu0
      %v6001 = vadd.f32 %v5832, %v6000
      %v6002 = vpop.f32.mrf.mxu0
      %v6003 = vadd.f32 %v5834, %v6002
      %6004 = vmatmul.bf16.gmra.mxu0 %v5383
      %v6005 = vpop.f32.mrf.mxu0
      %v6006 = vadd.f32 %v5837, %v6005
      %v6007 = vpop.f32.mrf.mxu0
      %v6008 = vadd.f32 %v5839, %v6007
      %6009 = vmatmul.bf16.gmra.mxu0 %v5387
      %v6010 = vpop.f32.mrf.mxu0
      %v6011 = vadd.f32 %v5842, %v6010
      %v6012 = vpop.f32.mrf.mxu0
      %v6013 = vadd.f32 %v5844, %v6012
      %6014 = vmatmul.bf16.gmra.mxu0 %v5391
      %v6015 = vpop.f32.mrf.mxu0
      %v6016 = vadd.f32 %v5847, %v6015
      %v6017 = vpop.f32.mrf.mxu0
      %v6018 = vadd.f32 %v5849, %v6017
      %6019 = vmatmul.bf16.gmra.mxu0 %v5395
      %v6020 = vpop.f32.mrf.mxu0
      %v6021 = vadd.f32 %v5852, %v6020
      %v6022 = vpop.f32.mrf.mxu0
      %v6023 = vadd.f32 %v5854, %v6022
      %6024 = vmatmul.bf16.gmra.mxu0 %v5399
      %v6025 = vpop.f32.mrf.mxu0
      %v6026 = vadd.f32 %v5857, %v6025
      %v6027 = vpop.f32.mrf.mxu0
      %v6028 = vadd.f32 %v5859, %v6027
      %6029 = vmatmul.bf16.gmra.mxu0 %v5403
      %v6030 = vpop.f32.mrf.mxu0
      %v6031 = vadd.f32 %v5862, %v6030
      %v6032 = vpop.f32.mrf.mxu0
      %v6033 = vadd.f32 %v5864, %v6032
      %6034 = vmatmul.bf16.gmra.mxu0 %v5407
      %v6035 = vpop.f32.mrf.mxu0
      %v6036 = vadd.f32 %v5867, %v6035
      %v6037 = vpop.f32.mrf.mxu0
      %v6038 = vadd.f32 %v5869, %v6037
      %6039 = vmatmul.bf16.gmra.mxu0 %v5411
      %v6040 = vpop.f32.mrf.mxu0
      %v6041 = vadd.f32 %v5872, %v6040
      %v6042 = vpop.f32.mrf.mxu0
      %v6043 = vadd.f32 %v5874, %v6042
      %6044 = vmatmul.bf16.gmra.mxu0 %v5415
      %v6045 = vpop.f32.mrf.mxu0
      %v6046 = vadd.f32 %v5877, %v6045
      %v6047 = vpop.f32.mrf.mxu0
      %v6048 = vadd.f32 %v5879, %v6047
      %6049 = vmatmul.bf16.gmra.mxu0 %v5419
      %v6050 = vpop.f32.mrf.mxu0
      %v6051 = vadd.f32 %v5882, %v6050
      %v6052 = vpop.f32.mrf.mxu0
      %v6053 = vadd.f32 %v5884, %v6052
      %6054 = vmatmul.bf16.gmra.mxu0 %v5423
      %v6055 = vpop.f32.mrf.mxu0
      %v6056 = vadd.f32 %v5887, %v6055
      %v6057 = vpop.f32.mrf.mxu0
      %v6058 = vadd.f32 %v5889, %v6057
      %6059 = vdwg.mxu0
      %6060 = vmatpush.bf16.msra.mxu0 %v4720
      %6061 = vmatpush.bf16.msra.mxu0 %v4719
      %6062 = vmatpush.bf16.msra.mxu0 %v4718
      %6063 = vmatpush.bf16.msra.mxu0 %v4717
      %6064 = vmatpush.bf16.msra.mxu0 %v4716
      %6065 = vmatpush.bf16.msra.mxu0 %v4715
      %6066 = vmatpush.bf16.msra.mxu0 %v4714
      %6067 = vmatpush.bf16.msra.mxu0 %v4713
      %6068 = vmatmul.bf16.gmra.mxu0 %v5300
      %v6069 = vpop.f32.mrf.mxu0
      %v6070 = vadd.f32 %v5901, %v6069
      %v6071 = vpop.f32.mrf.mxu0
      %v6072 = vadd.f32 %v5903, %v6071
      %6073 = vmatmul.bf16.gmra.mxu0 %v5304
      %v6074 = vpop.f32.mrf.mxu0
      %v6075 = vadd.f32 %v5906, %v6074
      %v6076 = vpop.f32.mrf.mxu0
      %v6077 = vadd.f32 %v5908, %v6076
      %6078 = vmatmul.bf16.gmra.mxu0 %v5308
      %v6079 = vpop.f32.mrf.mxu0
      %v6080 = vadd.f32 %v5911, %v6079
      %v6081 = vpop.f32.mrf.mxu0
      %v6082 = vadd.f32 %v5913, %v6081
      %6083 = vmatmul.bf16.gmra.mxu0 %v5312
      %v6084 = vpop.f32.mrf.mxu0
      %v6085 = vadd.f32 %v5916, %v6084
      %v6086 = vpop.f32.mrf.mxu0
      %v6087 = vadd.f32 %v5918, %v6086
      %6088 = vmatmul.bf16.gmra.mxu0 %v5316
      %v6089 = vpop.f32.mrf.mxu0
      %v6090 = vadd.f32 %v5921, %v6089
      %v6091 = vpop.f32.mrf.mxu0
      %v6092 = vadd.f32 %v5923, %v6091
      %6093 = vmatmul.bf16.gmra.mxu0 %v5320
      %v6094 = vpop.f32.mrf.mxu0
      %v6095 = vadd.f32 %v5926, %v6094
      %v6096 = vpop.f32.mrf.mxu0
      %v6097 = vadd.f32 %v5928, %v6096
      %6098 = vmatmul.bf16.gmra.mxu0 %v5324
      %v6099 = vpop.f32.mrf.mxu0
      %v6100 = vadd.f32 %v5931, %v6099
      %v6101 = vpop.f32.mrf.mxu0
      %v6102 = vadd.f32 %v5933, %v6101
      %6103 = vmatmul.bf16.gmra.mxu0 %v5328
      %v6104 = vpop.f32.mrf.mxu0
      %v6105 = vadd.f32 %v5936, %v6104
      %v6106 = vpop.f32.mrf.mxu0
      %v6107 = vadd.f32 %v5938, %v6106
      %6108 = vmatmul.bf16.gmra.mxu0 %v5332
      %v6109 = vpop.f32.mrf.mxu0
      %v6110 = vadd.f32 %v5941, %v6109
      %v6111 = vpop.f32.mrf.mxu0
      %v6112 = vadd.f32 %v5943, %v6111
      %6113 = vmatmul.bf16.gmra.mxu0 %v5336
      %v6114 = vpop.f32.mrf.mxu0
      %v6115 = vadd.f32 %v5946, %v6114
      %v6116 = vpop.f32.mrf.mxu0
      %v6117 = vadd.f32 %v5948, %v6116
      %6118 = vmatmul.bf16.gmra.mxu0 %v5340
      %v6119 = vpop.f32.mrf.mxu0
      %v6120 = vadd.f32 %v5951, %v6119
      %v6121 = vpop.f32.mrf.mxu0
      %v6122 = vadd.f32 %v5953, %v6121
      %6123 = vmatmul.bf16.gmra.mxu0 %v5344
      %v6124 = vpop.f32.mrf.mxu0
      %v6125 = vadd.f32 %v5956, %v6124
      %v6126 = vpop.f32.mrf.mxu0
      %v6127 = vadd.f32 %v5958, %v6126
      %6128 = vmatmul.bf16.gmra.mxu0 %v5348
      %v6129 = vpop.f32.mrf.mxu0
      %v6130 = vadd.f32 %v5961, %v6129
      %v6131 = vpop.f32.mrf.mxu0
      %v6132 = vadd.f32 %v5963, %v6131
      %6133 = vmatmul.bf16.gmra.mxu0 %v5352
      %v6134 = vpop.f32.mrf.mxu0
      %v6135 = vadd.f32 %v5966, %v6134
      %v6136 = vpop.f32.mrf.mxu0
      %v6137 = vadd.f32 %v5968, %v6136
      %6138 = vmatmul.bf16.gmra.mxu0 %v5356
      %v6139 = vpop.f32.mrf.mxu0
      %v6140 = vadd.f32 %v5971, %v6139
      %v6141 = vpop.f32.mrf.mxu0
      %v6142 = vadd.f32 %v5973, %v6141
      %6143 = vmatmul.bf16.gmra.mxu0 %v5360
      %v6144 = vpop.f32.mrf.mxu0
      %v6145 = vadd.f32 %v5976, %v6144
      %v6146 = vpop.f32.mrf.mxu0
      %v6147 = vadd.f32 %v5978, %v6146
      %6148 = vmatmul.bf16.gmra.mxu0 %v5364
      %v6149 = vpop.f32.mrf.mxu0
      %v6150 = vadd.f32 %v5981, %v6149
      %v6151 = vpop.f32.mrf.mxu0
      %v6152 = vadd.f32 %v5983, %v6151
      %6153 = vmatmul.bf16.gmra.mxu0 %v5368
      %v6154 = vpop.f32.mrf.mxu0
      %v6155 = vadd.f32 %v5986, %v6154
      %v6156 = vpop.f32.mrf.mxu0
      %v6157 = vadd.f32 %v5988, %v6156
      %6158 = vmatmul.bf16.gmra.mxu0 %v5372
      %v6159 = vpop.f32.mrf.mxu0
      %v6160 = vadd.f32 %v5991, %v6159
      %v6161 = vpop.f32.mrf.mxu0
      %v6162 = vadd.f32 %v5993, %v6161
      %6163 = vmatmul.bf16.gmra.mxu0 %v5376
      %v6164 = vpop.f32.mrf.mxu0
      %v6165 = vadd.f32 %v5996, %v6164
      %v6166 = vpop.f32.mrf.mxu0
      %v6167 = vadd.f32 %v5998, %v6166
      %6168 = vmatmul.bf16.gmra.mxu0 %v5380
      %v6169 = vpop.f32.mrf.mxu0
      %v6170 = vadd.f32 %v6001, %v6169
      %v6171 = vpop.f32.mrf.mxu0
      %v6172 = vadd.f32 %v6003, %v6171
      %6173 = vmatmul.bf16.gmra.mxu0 %v5384
      %v6174 = vpop.f32.mrf.mxu0
      %v6175 = vadd.f32 %v6006, %v6174
      %v6176 = vpop.f32.mrf.mxu0
      %v6177 = vadd.f32 %v6008, %v6176
      %6178 = vmatmul.bf16.gmra.mxu0 %v5388
      %v6179 = vpop.f32.mrf.mxu0
      %v6180 = vadd.f32 %v6011, %v6179
      %v6181 = vpop.f32.mrf.mxu0
      %v6182 = vadd.f32 %v6013, %v6181
      %6183 = vmatmul.bf16.gmra.mxu0 %v5392
      %v6184 = vpop.f32.mrf.mxu0
      %v6185 = vadd.f32 %v6016, %v6184
      %v6186 = vpop.f32.mrf.mxu0
      %v6187 = vadd.f32 %v6018, %v6186
      %6188 = vmatmul.bf16.gmra.mxu0 %v5396
      %v6189 = vpop.f32.mrf.mxu0
      %v6190 = vadd.f32 %v6021, %v6189
      %v6191 = vpop.f32.mrf.mxu0
      %v6192 = vadd.f32 %v6023, %v6191
      %6193 = vmatmul.bf16.gmra.mxu0 %v5400
      %v6194 = vpop.f32.mrf.mxu0
      %v6195 = vadd.f32 %v6026, %v6194
      %v6196 = vpop.f32.mrf.mxu0
      %v6197 = vadd.f32 %v6028, %v6196
      %6198 = vmatmul.bf16.gmra.mxu0 %v5404
      %v6199 = vpop.f32.mrf.mxu0
      %v6200 = vadd.f32 %v6031, %v6199
      %v6201 = vpop.f32.mrf.mxu0
      %v6202 = vadd.f32 %v6033, %v6201
      %6203 = vmatmul.bf16.gmra.mxu0 %v5408
      %v6204 = vpop.f32.mrf.mxu0
      %v6205 = vadd.f32 %v6036, %v6204
      %v6206 = vpop.f32.mrf.mxu0
      %v6207 = vadd.f32 %v6038, %v6206
      %6208 = vmatmul.bf16.gmra.mxu0 %v5412
      %v6209 = vpop.f32.mrf.mxu0
      %v6210 = vadd.f32 %v6041, %v6209
      %v6211 = vpop.f32.mrf.mxu0
      %v6212 = vadd.f32 %v6043, %v6211
      %6213 = vmatmul.bf16.gmra.mxu0 %v5416
      %v6214 = vpop.f32.mrf.mxu0
      %v6215 = vadd.f32 %v6046, %v6214
      %v6216 = vpop.f32.mrf.mxu0
      %v6217 = vadd.f32 %v6048, %v6216
      %6218 = vmatmul.bf16.gmra.mxu0 %v5420
      %v6219 = vpop.f32.mrf.mxu0
      %v6220 = vadd.f32 %v6051, %v6219
      %v6221 = vpop.f32.mrf.mxu0
      %v6222 = vadd.f32 %v6053, %v6221
      %6223 = vmatmul.bf16.gmra.mxu0 %v5424
      %v6224 = vpop.f32.mrf.mxu0
      %v6225 = vadd.f32 %v6056, %v6224
      %v6226 = vpop.f32.mrf.mxu0
      %v6227 = vadd.f32 %v6058, %v6226
      %6228 = vdwg.mxu0
      %v6229 = vmax.f32 %v6070, 0.0
      %v6230 = vmax.f32 %v6072, 0.0
      %v6231 = vmax.f32 %v6075, 0.0
      %v6232 = vmax.f32 %v6077, 0.0
      %v6233 = vmax.f32 %v6080, 0.0
      %v6234 = vmax.f32 %v6082, 0.0
      %v6235 = vmax.f32 %v6085, 0.0
      %v6236 = vmax.f32 %v6087, 0.0
      %v6237 = vmax.f32 %v6090, 0.0
      %v6238 = vmax.f32 %v6092, 0.0
      %v6239 = vmax.f32 %v6095, 0.0
      %v6240 = vmax.f32 %v6097, 0.0
      %v6241 = vmax.f32 %v6100, 0.0
      %v6242 = vmax.f32 %v6102, 0.0
      %v6243 = vmax.f32 %v6105, 0.0
      %v6244 = vmax.f32 %v6107, 0.0
      %v6245 = vmax.f32 %v6110, 0.0
      %v6246 = vmax.f32 %v6112, 0.0
      %v6247 = vmax.f32 %v6115, 0.0
      %v6248 = vmax.f32 %v6117, 0.0
      %v6249 = vmax.f32 %v6120, 0.0
      %v6250 = vmax.f32 %v6122, 0.0
      %v6251 = vmax.f32 %v6125, 0.0
      %v6252 = vmax.f32 %v6127, 0.0
      %v6253 = vmax.f32 %v6130, 0.0
      %v6254 = vmax.f32 %v6132, 0.0
      %v6255 = vmax.f32 %v6135, 0.0
      %v6256 = vmax.f32 %v6137, 0.0
      %v6257 = vmax.f32 %v6140, 0.0
      %v6258 = vmax.f32 %v6142, 0.0
      %v6259 = vmax.f32 %v6145, 0.0
      %v6260 = vmax.f32 %v6147, 0.0
      %v6261 = vmax.f32 %v6150, 0.0
      %v6262 = vmax.f32 %v6152, 0.0
      %v6263 = vmax.f32 %v6155, 0.0
      %v6264 = vmax.f32 %v6157, 0.0
      %v6265 = vmax.f32 %v6160, 0.0
      %v6266 = vmax.f32 %v6162, 0.0
      %v6267 = vmax.f32 %v6165, 0.0
      %v6268 = vmax.f32 %v6167, 0.0
      %v6269 = vmax.f32 %v6170, 0.0
      %v6270 = vmax.f32 %v6172, 0.0
      %v6271 = vmax.f32 %v6175, 0.0
      %v6272 = vmax.f32 %v6177, 0.0
      %v6273 = vmax.f32 %v6180, 0.0
      %v6274 = vmax.f32 %v6182, 0.0
      %v6275 = vmax.f32 %v6185, 0.0
      %v6276 = vmax.f32 %v6187, 0.0
      %v6277 = vmax.f32 %v6190, 0.0
      %v6278 = vmax.f32 %v6192, 0.0
      %v6279 = vmax.f32 %v6195, 0.0
      %v6280 = vmax.f32 %v6197, 0.0
      %v6281 = vmax.f32 %v6200, 0.0
      %v6282 = vmax.f32 %v6202, 0.0
      %v6283 = vmax.f32 %v6205, 0.0
      %v6284 = vmax.f32 %v6207, 0.0
      %v6285 = vmax.f32 %v6210, 0.0
      %v6286 = vmax.f32 %v6212, 0.0
      %v6287 = vmax.f32 %v6215, 0.0
      %v6288 = vmax.f32 %v6217, 0.0
      %v6289 = vmax.f32 %v6220, 0.0
      %v6290 = vmax.f32 %v6222, 0.0
      %v6291 = vmax.f32 %v6225, 0.0
      %v6292 = vmax.f32 %v6227, 0.0
      %v6293 = vld [vmem:[%s11] sm:$0xff]
      %v6294 = vld [vmem:[%s11 + $0x8] sm:$0xff]
      %v6295 = vld [vmem:[%s11 + $0x10] sm:$0xff]
      %v6296 = vld [vmem:[%s11 + $0x18] sm:$0xff]
      %v6297 = vld [vmem:[%s11 + $0x20] sm:$0xff]
      %v6298 = vld [vmem:[%s11 + $0x28] sm:$0xff]
      %v6299 = vld [vmem:[%s11 + $0x30] sm:$0xff]
      %v6300 = vld [vmem:[%s11 + $0x38] sm:$0xff]
      %v6301 = vld [vmem:[%s11 + $0x40] sm:$0xff]
      %v6302 = vld [vmem:[%s11 + $0x48] sm:$0xff]
      %v6303 = vld [vmem:[%s11 + $0x50] sm:$0xff]
      %v6304 = vld [vmem:[%s11 + $0x58] sm:$0xff]
      %v6305 = vld [vmem:[%s11 + $0x60] sm:$0xff]
      %v6306 = vld [vmem:[%s11 + $0x68] sm:$0xff]
      %v6307 = vld [vmem:[%s11 + $0x70] sm:$0xff]
      %v6308 = vld [vmem:[%s11 + $0x78] sm:$0xff]
      %v6309 = vld [vmem:[%s11 + $0x80] sm:$0xff]
      %v6310 = vld [vmem:[%s11 + $0x88] sm:$0xff]
      %v6311 = vld [vmem:[%s11 + $0x90] sm:$0xff]
      %v6312 = vld [vmem:[%s11 + $0x98] sm:$0xff]
      %v6313 = vld [vmem:[%s11 + $0xa0] sm:$0xff]
      %v6314 = vld [vmem:[%s11 + $0xa8] sm:$0xff]
      %v6315 = vld [vmem:[%s11 + $0xb0] sm:$0xff]
      %v6316 = vld [vmem:[%s11 + $0xb8] sm:$0xff]
      %v6317 = vld [vmem:[%s11 + $0xc0] sm:$0xff]
      %v6318 = vld [vmem:[%s11 + $0xc8] sm:$0xff]
      %v6319 = vld [vmem:[%s11 + $0xd0] sm:$0xff]
      %v6320 = vld [vmem:[%s11 + $0xd8] sm:$0xff]
      %v6321 = vld [vmem:[%s11 + $0xe0] sm:$0xff]
      %v6322 = vld [vmem:[%s11 + $0xe8] sm:$0xff]
      %v6323 = vld [vmem:[%s11 + $0xf0] sm:$0xff]
      %v6324 = vld [vmem:[%s11 + $0xf8] sm:$0xff]
      %v6325 = vld [vmem:[%s11 + $0x100] sm:$0xff]
      %v6326 = vld [vmem:[%s11 + $0x108] sm:$0xff]
      %v6327 = vld [vmem:[%s11 + $0x110] sm:$0xff]
      %v6328 = vld [vmem:[%s11 + $0x118] sm:$0xff]
      %v6329 = vld [vmem:[%s11 + $0x120] sm:$0xff]
      %v6330 = vld [vmem:[%s11 + $0x128] sm:$0xff]
      %v6331 = vld [vmem:[%s11 + $0x130] sm:$0xff]
      %v6332 = vld [vmem:[%s11 + $0x138] sm:$0xff]
      %v6333 = vld [vmem:[%s11 + $0x140] sm:$0xff]
      %v6334 = vld [vmem:[%s11 + $0x148] sm:$0xff]
      %v6335 = vld [vmem:[%s11 + $0x150] sm:$0xff]
      %v6336 = vld [vmem:[%s11 + $0x158] sm:$0xff]
      %v6337 = vld [vmem:[%s11 + $0x160] sm:$0xff]
      %v6338 = vld [vmem:[%s11 + $0x168] sm:$0xff]
      %v6339 = vld [vmem:[%s11 + $0x170] sm:$0xff]
      %v6340 = vld [vmem:[%s11 + $0x178] sm:$0xff]
      %v6341 = vld [vmem:[%s11 + $0x180] sm:$0xff]
      %v6342 = vld [vmem:[%s11 + $0x188] sm:$0xff]
      %v6343 = vld [vmem:[%s11 + $0x190] sm:$0xff]
      %v6344 = vld [vmem:[%s11 + $0x198] sm:$0xff]
      %v6345 = vld [vmem:[%s11 + $0x1a0] sm:$0xff]
      %v6346 = vld [vmem:[%s11 + $0x1a8] sm:$0xff]
      %v6347 = vld [vmem:[%s11 + $0x1b0] sm:$0xff]
      %v6348 = vld [vmem:[%s11 + $0x1b8] sm:$0xff]
      %v6349 = vld [vmem:[%s11 + $0x1c0] sm:$0xff]
      %v6350 = vld [vmem:[%s11 + $0x1c8] sm:$0xff]
      %v6351 = vld [vmem:[%s11 + $0x1d0] sm:$0xff]
      %v6352 = vld [vmem:[%s11 + $0x1d8] sm:$0xff]
      %v6353 = vld [vmem:[%s11 + $0x1e0] sm:$0xff]
      %v6354 = vld [vmem:[%s11 + $0x1e8] sm:$0xff]
      %v6355 = vld [vmem:[%s11 + $0x1f0] sm:$0xff]
      %v6356 = vld [vmem:[%s11 + $0x1f8] sm:$0xff]
      %v6357 = vmul.f32 %v6293, %v6229
      %v6358 = vmul.f32 %v6294, %v6230
      %v6359 = vmul.f32 %v6295, %v6231
      %v6360 = vmul.f32 %v6296, %v6232
      %v6361 = vmul.f32 %v6297, %v6233
      %v6362 = vmul.f32 %v6298, %v6234
      %v6363 = vmul.f32 %v6299, %v6235
      %v6364 = vmul.f32 %v6300, %v6236
      %v6365 = vmul.f32 %v6301, %v6237
      %v6366 = vmul.f32 %v6302, %v6238
      %v6367 = vmul.f32 %v6303, %v6239
      %v6368 = vmul.f32 %v6304, %v6240
      %v6369 = vmul.f32 %v6305, %v6241
      %v6370 = vmul.f32 %v6306, %v6242
      %v6371 = vmul.f32 %v6307, %v6243
      %v6372 = vmul.f32 %v6308, %v6244
      %v6373 = vmul.f32 %v6309, %v6245
      %v6374 = vmul.f32 %v6310, %v6246
      %v6375 = vmul.f32 %v6311, %v6247
      %v6376 = vmul.f32 %v6312, %v6248
      %v6377 = vmul.f32 %v6313, %v6249
      %v6378 = vmul.f32 %v6314, %v6250
      %v6379 = vmul.f32 %v6315, %v6251
      %v6380 = vmul.f32 %v6316, %v6252
      %v6381 = vmul.f32 %v6317, %v6253
      %v6382 = vmul.f32 %v6318, %v6254
      %v6383 = vmul.f32 %v6319, %v6255
      %v6384 = vmul.f32 %v6320, %v6256
      %v6385 = vmul.f32 %v6321, %v6257
      %v6386 = vmul.f32 %v6322, %v6258
      %v6387 = vmul.f32 %v6323, %v6259
      %v6388 = vmul.f32 %v6324, %v6260
      %v6389 = vmul.f32 %v6325, %v6261
      %v6390 = vmul.f32 %v6326, %v6262
      %v6391 = vmul.f32 %v6327, %v6263
      %v6392 = vmul.f32 %v6328, %v6264
      %v6393 = vmul.f32 %v6329, %v6265
      %v6394 = vmul.f32 %v6330, %v6266
      %v6395 = vmul.f32 %v6331, %v6267
      %v6396 = vmul.f32 %v6332, %v6268
      %v6397 = vmul.f32 %v6333, %v6269
      %v6398 = vmul.f32 %v6334, %v6270
      %v6399 = vmul.f32 %v6335, %v6271
      %v6400 = vmul.f32 %v6336, %v6272
      %v6401 = vmul.f32 %v6337, %v6273
      %v6402 = vmul.f32 %v6338, %v6274
      %v6403 = vmul.f32 %v6339, %v6275
      %v6404 = vmul.f32 %v6340, %v6276
      %v6405 = vmul.f32 %v6341, %v6277
      %v6406 = vmul.f32 %v6342, %v6278
      %v6407 = vmul.f32 %v6343, %v6279
      %v6408 = vmul.f32 %v6344, %v6280
      %v6409 = vmul.f32 %v6345, %v6281
      %v6410 = vmul.f32 %v6346, %v6282
      %v6411 = vmul.f32 %v6347, %v6283
      %v6412 = vmul.f32 %v6348, %v6284
      %v6413 = vmul.f32 %v6349, %v6285
      %v6414 = vmul.f32 %v6350, %v6286
      %v6415 = vmul.f32 %v6351, %v6287
      %v6416 = vmul.f32 %v6352, %v6288
      %v6417 = vmul.f32 %v6353, %v6289
      %v6418 = vmul.f32 %v6354, %v6290
      %v6419 = vmul.f32 %v6355, %v6291
      %v6420 = vmul.f32 %v6356, %v6292
      %vm6421 = vcmask 7168
      %v6422 = vsel %vm6421, %v6357, 0.0
      %v6423 = vsel %vm6421, %v6358, 0.0
      %v6424 = vadd.f32 %v6422, %v6423
      %v6425 = vsel %vm6421, %v6359, 0.0
      %v6426 = vadd.f32 %v6424, %v6425
      %v6427 = vsel %vm6421, %v6360, 0.0
      %v6428 = vadd.f32 %v6426, %v6427
      %v6429 = vsel %vm6421, %v6361, 0.0
      %v6430 = vadd.f32 %v6428, %v6429
      %v6431 = vsel %vm6421, %v6362, 0.0
      %v6432 = vadd.f32 %v6430, %v6431
      %v6433 = vsel %vm6421, %v6363, 0.0
      %v6434 = vadd.f32 %v6432, %v6433
      %v6435 = vsel %vm6421, %v6364, 0.0
      %v6436 = vadd.f32 %v6434, %v6435
      %v6437 = vsel %vm6421, %v6365, 0.0
      %v6438 = vadd.f32 %v6436, %v6437
      %v6439 = vsel %vm6421, %v6366, 0.0
      %v6440 = vadd.f32 %v6438, %v6439
      %v6441 = vsel %vm6421, %v6367, 0.0
      %v6442 = vadd.f32 %v6440, %v6441
      %v6443 = vsel %vm6421, %v6368, 0.0
      %v6444 = vadd.f32 %v6442, %v6443
      %v6445 = vsel %vm6421, %v6369, 0.0
      %v6446 = vadd.f32 %v6444, %v6445
      %v6447 = vsel %vm6421, %v6370, 0.0
      %v6448 = vadd.f32 %v6446, %v6447
      %v6449 = vsel %vm6421, %v6371, 0.0
      %v6450 = vadd.f32 %v6448, %v6449
      %v6451 = vsel %vm6421, %v6372, 0.0
      %v6452 = vadd.f32 %v6450, %v6451
      %v6453 = vsel %vm6421, %v6373, 0.0
      %v6454 = vadd.f32 %v6452, %v6453
      %v6455 = vsel %vm6421, %v6374, 0.0
      %v6456 = vadd.f32 %v6454, %v6455
      %v6457 = vsel %vm6421, %v6375, 0.0
      %v6458 = vadd.f32 %v6456, %v6457
      %v6459 = vsel %vm6421, %v6376, 0.0
      %v6460 = vadd.f32 %v6458, %v6459
      %v6461 = vsel %vm6421, %v6377, 0.0
      %v6462 = vadd.f32 %v6460, %v6461
      %v6463 = vsel %vm6421, %v6378, 0.0
      %v6464 = vadd.f32 %v6462, %v6463
      %v6465 = vsel %vm6421, %v6379, 0.0
      %v6466 = vadd.f32 %v6464, %v6465
      %v6467 = vsel %vm6421, %v6380, 0.0
      %v6468 = vadd.f32 %v6466, %v6467
      %v6469 = vsel %vm6421, %v6381, 0.0
      %v6470 = vadd.f32 %v6468, %v6469
      %v6471 = vsel %vm6421, %v6382, 0.0
      %v6472 = vadd.f32 %v6470, %v6471
      %v6473 = vsel %vm6421, %v6383, 0.0
      %v6474 = vadd.f32 %v6472, %v6473
      %v6475 = vsel %vm6421, %v6384, 0.0
      %v6476 = vadd.f32 %v6474, %v6475
      %v6477 = vsel %vm6421, %v6385, 0.0
      %v6478 = vadd.f32 %v6476, %v6477
      %v6479 = vsel %vm6421, %v6386, 0.0
      %v6480 = vadd.f32 %v6478, %v6479
      %v6481 = vsel %vm6421, %v6387, 0.0
      %v6482 = vadd.f32 %v6480, %v6481
      %v6483 = vsel %vm6421, %v6388, 0.0
      %v6484 = vadd.f32 %v6482, %v6483
      %v6485 = vsel %vm6421, %v6389, 0.0
      %v6486 = vadd.f32 %v6484, %v6485
      %v6487 = vsel %vm6421, %v6390, 0.0
      %v6488 = vadd.f32 %v6486, %v6487
      %v6489 = vsel %vm6421, %v6391, 0.0
      %v6490 = vadd.f32 %v6488, %v6489
      %v6491 = vsel %vm6421, %v6392, 0.0
      %v6492 = vadd.f32 %v6490, %v6491
      %v6493 = vsel %vm6421, %v6393, 0.0
      %v6494 = vadd.f32 %v6492, %v6493
      %v6495 = vsel %vm6421, %v6394, 0.0
      %v6496 = vadd.f32 %v6494, %v6495
      %v6497 = vsel %vm6421, %v6395, 0.0
      %v6498 = vadd.f32 %v6496, %v6497
      %v6499 = vsel %vm6421, %v6396, 0.0
      %v6500 = vadd.f32 %v6498, %v6499
      %v6501 = vsel %vm6421, %v6397, 0.0
      %v6502 = vadd.f32 %v6500, %v6501
      %v6503 = vsel %vm6421, %v6398, 0.0
      %v6504 = vadd.f32 %v6502, %v6503
      %v6505 = vsel %vm6421, %v6399, 0.0
      %v6506 = vadd.f32 %v6504, %v6505
      %v6507 = vsel %vm6421, %v6400, 0.0
      %v6508 = vadd.f32 %v6506, %v6507
      %v6509 = vsel %vm6421, %v6401, 0.0
      %v6510 = vadd.f32 %v6508, %v6509
      %v6511 = vsel %vm6421, %v6402, 0.0
      %v6512 = vadd.f32 %v6510, %v6511
      %v6513 = vsel %vm6421, %v6403, 0.0
      %v6514 = vadd.f32 %v6512, %v6513
      %v6515 = vsel %vm6421, %v6404, 0.0
      %v6516 = vadd.f32 %v6514, %v6515
      %v6517 = vsel %vm6421, %v6405, 0.0
      %v6518 = vadd.f32 %v6516, %v6517
      %v6519 = vsel %vm6421, %v6406, 0.0
      %v6520 = vadd.f32 %v6518, %v6519
      %v6521 = vsel %vm6421, %v6407, 0.0
      %v6522 = vadd.f32 %v6520, %v6521
      %v6523 = vsel %vm6421, %v6408, 0.0
      %v6524 = vadd.f32 %v6522, %v6523
      %v6525 = vsel %vm6421, %v6409, 0.0
      %v6526 = vadd.f32 %v6524, %v6525
      %v6527 = vsel %vm6421, %v6410, 0.0
      %v6528 = vadd.f32 %v6526, %v6527
      %v6529 = vsel %vm6421, %v6411, 0.0
      %v6530 = vadd.f32 %v6528, %v6529
      %v6531 = vsel %vm6421, %v6412, 0.0
      %v6532 = vadd.f32 %v6530, %v6531
      %v6533 = vsel %vm6421, %v6413, 0.0
      %v6534 = vadd.f32 %v6532, %v6533
      %v6535 = vsel %vm6421, %v6414, 0.0
      %v6536 = vadd.f32 %v6534, %v6535
      %v6537 = vsel %vm6421, %v6415, 0.0
      %v6538 = vadd.f32 %v6536, %v6537
      %v6539 = vsel %vm6421, %v6416, 0.0
      %v6540 = vadd.f32 %v6538, %v6539
      %v6541 = vsel %vm6421, %v6417, 0.0
      %v6542 = vadd.f32 %v6540, %v6541
      %v6543 = vsel %vm6421, %v6418, 0.0
      %v6544 = vadd.f32 %v6542, %v6543
      %v6545 = vsel %vm6421, %v6419, 0.0
      %v6546 = vadd.f32 %v6544, %v6545
      %v6547 = vsel %vm6421, %v6420, 0.0
      %v6548 = vadd.f32 %v6546, %v6547
      %v6549 = vrot.slane %v6548, 4
      %v6550 = vadd.f32 %v6548, %v6549
      %v6551 = vrot.slane %v6550, 2
      %v6552 = vadd.f32 %v6550, %v6551
      %v6553 = vrot.slane %v6552, 1
      %v6554 = vadd.f32 %v6552, %v6553
      %v6555 = vld [vmem:[#allocation2] sm:$0x1]
      %v6556 = vadd.f32 %v6554, %v6555
      %vm6557 = vcmask 0
      %6558 = vst.msk [vmem:[%s458] sm:$0x1] %vm6557, %v6556
      %p6559 = scmp.lt.s32.totalorder %s26, 1
      %s6560 = scalar_select %p6559, %s26, 1
      %s6561 = scalar_lea.vmem %s13, %s6560
      // Predicated region
      $region73: #{global_discriminator_forward.1} parent=71 // pred_check
        %p6562 = pneg %p327
      $region74: #{global_discriminator_forward.1} parent=71 // pred_check_branch
        %6564 = sbr.rel (%p6562) target = $region76
      $region75: #{global_discriminator_forward.1} parent=71 // pred_region
        _
      $region76: #{global_discriminator_forward.1} parent=71 // pred_fallthru
        _
    $region72: #{global_discriminator_forward.1} parent=5 // pred_fallthru
      _
    %p6565 = scmp.le.s32.totalorder 2, %s21
    // Predicated region
    $region77: #{global_discriminator_forward.1} parent=5 // pred_check
      %p6566 = pneg %p6565
    $region78: #{global_discriminator_forward.1} parent=5 // pred_check_branch
      %6568 = sbr.rel (%p6566) target = $region80
    $region79: #{global_discriminator_forward.1} parent=5 // pred_region
      %s6569 = ssub.s32 %s21, 2
      // Predicated region
      $region81: #{global_discriminator_forward.1} parent=79 // pred_check
        %p6570 = pneg %p333
      $region82: #{global_discriminator_forward.1} parent=79 // pred_check_branch
        %6572 = sbr.rel (%p6570) target = $region84
      $region83: #{global_discriminator_forward.1} parent=79 // pred_region
        %p6573 = scmp.lt.s32.totalorder %s27, 1
        %s6574 = scalar_select %p6573, %s27, 1
        %s6575 = scalar_lea.vmem %s13, %s6574
      $region84: #{global_discriminator_forward.1} parent=79 // pred_fallthru
        _
    $region80: #{global_discriminator_forward.1} parent=5 // pred_fallthru
      _
  $region6: #{global_discriminator_forward.1} parent=0 // loop_footer
    %s25 = sadd.s32 1, %s21
  $region7: #{global_discriminator_forward.1} parent=0 // loop_footer_branch
    %20 = sbr.rel target = $region3
  $region8: #{global_discriminator_forward.1} parent=0 // loop_exit
    _

</llo_original>
